<compile_context>
chip_gen: v5e
topology: v5e:2x2
jax: 0.10.0
libtpu: 0.0.40
codegen_flags: <defaults>
</compile_context>

<pallas_src>
import jax
import jax.numpy as jnp
from jax.experimental import pallas as pl
from jax.experimental.pallas import tpu as pltpu

_GN_EPS = 1e-5
_SQRT_2_OVER_PI = 0.7978845608028654


def _gelu_tanh(x):
    # tanh-approximate GELU (transcendental goes to the EUP slot inside the kernel).
    return 0.5 * x * (1.0 + jnp.tanh(_SQRT_2_OVER_PI * (x + 0.044715 * x * x * x)))


def _round_up(n, m):
    return ((n + m - 1) // m) * m


# ------------------------- host-side (one-time) parameter packing -------------------------
def pack_params(raw, in_ch, mid_ch, out_ch):
    """Pack torch-layout weights into channel-padded slabs for the kernel."""
    cmax = _round_up(max(in_ch, mid_ch, out_ch), 8)

    def pack_conv(w):  # torch Conv1d weight (C_out, C_in, 3) -> (cmax, 3*cmax)
        co, ci, _ = w.shape
        taps = [jnp.zeros((cmax, cmax), jnp.float32).at[:co, :ci].set(w[:, :, k])
                for k in range(3)]
        return jnp.concatenate(taps, axis=1)

    def pack_vec(v):  # (C,) -> (cmax, 1)
        return jnp.zeros((cmax, 1), jnp.float32).at[:v.shape[0], 0].set(v)

    w_emb = jnp.zeros((cmax, raw["emb_w"].shape[1]), jnp.float32)
    w_emb = w_emb.at[:out_ch, :].set(raw["emb_w"])  # torch Linear layout (out, in)

    return {
        "w_all": jnp.stack([pack_conv(raw["w1a"]), pack_conv(raw["w1b"]),
                            pack_conv(raw["w2a"]), pack_conv(raw["w2b"])]),   # (4, cmax, 3*cmax)
        "g_all": jnp.stack([pack_vec(raw["g1a"]), pack_vec(raw["g1b"]),
                            pack_vec(raw["g2a"]), pack_vec(raw["g2b"])]),     # (4, cmax, 1)
        "b_all": jnp.stack([pack_vec(raw["b1a"]), pack_vec(raw["b1b"]),
                            pack_vec(raw["b2a"]), pack_vec(raw["b2b"])]),     # (4, cmax, 1)
        "w_emb": w_emb,                                                       # (cmax, emb_dim)
    }


# ------------------------------------ the fused kernel ------------------------------------
def _graph_up_pallas(skip_f, x_lo, x_hi, consts, seg_scatter, seg_bcast,
                     w_all, g_all, b_all, t_pad, w_emb, bias_col,
                     *, l_out, c_gn):
    cmax, lpad = skip_f.shape

    def kernel(skip_ref, xlo_ref, xhi_ref, c_ref, ss_ref, sb_ref,
               w_ref, g_ref, b_ref, t_ref, we_ref, bias_ref, o_ref):
        f32 = jnp.float32
        # Hoisted shape-constant rows (built once on the host — no in-kernel iota/div/mod).
        frac = c_ref[0:1, :]       # per-lane lerp fraction for the linear upsample
        lmask = c_ref[1:2, :]      # kill l-1 conv tap at sample starts (no cross-batch read)
        rmask = c_ref[2:3, :]      # kill l+1 conv tap at sample ends
        valid = c_ref[3:4, :]      # 1 on real lanes, 0 on lane padding
        sscat = ss_ref[...]        # (lpad, Bpad) same-sample scatter one-hot
        sbcast = sb_ref[...]       # (Bpad, lpad) per-sample broadcast one-hot

        def conv(h, j):
            # Conv1d(k=3, pad=1, bias=False): one fused (cmax, 3*cmax) x (3*cmax, lpad) MXU matmul.
            # TODO(synk): on v7x split into 3 accumulating dots (MRB) and drop the h3 concat.
            hm = pltpu.roll(h, shift=1, axis=1) * lmask          # value at l-1 (0 at seams)
            hp = pltpu.roll(h, shift=lpad - 1, axis=1) * rmask   # value at l+1 (0 at seams)
            h3 = jnp.concatenate([hm, h, hp], axis=0)            # (3*cmax, lpad)
            return jnp.dot(w_ref[j], h3, preferred_element_type=f32)

        def gn(h, j):
            # GroupNorm(1, C) per sample via thin one-hot matmuls (one pass, f32 stats).
            inv_n = 1.0 / (c_gn[j] * l_out)
            s1 = jnp.dot(h, sscat, preferred_element_type=f32)        # (cmax, Bpad) per-sample sums
            s2 = jnp.dot(h * h, sscat, preferred_element_type=f32)
            m1 = jnp.sum(s1, axis=0, keepdims=True) * inv_n           # (1, Bpad) per-sample mean
            m2 = jnp.sum(s2, axis=0, keepdims=True) * inv_n
            rstd = jax.lax.rsqrt(jnp.maximum(m2 - m1 * m1, 0.0) + _GN_EPS)
            m_lane = jnp.dot(m1, sbcast, preferred_element_type=f32)  # (1, lpad)
            r_lane = jnp.dot(rstd, sbcast, preferred_element_type=f32)
            return g_ref[j] * ((h - m_lane) * r_lane) + b_ref[j]

        # upsample (2-tap lerp on pre-gathered taps) + cat([skip, up], dim=C)
        xlo = xlo_ref[...]
        xin = skip_ref[...] + xlo + frac * (xhi_ref[...] - xlo)

        # DoubleConv(in, in, residual=True)
        h = _gelu_tanh(gn(conv(xin, 0), 0))
        h = gn(conv(h, 1), 1)
        x1 = _gelu_tanh(xin + h)
        # DoubleConv(in, out, mid=in // 2)
        h = _gelu_tanh(gn(conv(x1, 2), 2))
        x2 = gn(conv(h, 3), 3)

        # Time embedding: SiLU (lane-dense on (Bpad, emb_dim)) -> Linear (NT dot_general),
        # graph embedding + bias folded in, then one matmul broadcast over the lane axis.
        st = t_ref[...]
        st = st * jax.nn.sigmoid(st)                               # SiLU, lane-dense
        emb_cb = jax.lax.dot_general(we_ref[...], st, (((1,), (1,)), ((), ())),
                                     preferred_element_type=f32)   # (cmax, Bpad)
        emb_cb = emb_cb + bias_ref[...]
        emb_l = jnp.dot(emb_cb, sbcast, preferred_element_type=f32)  # (cmax, lpad)

        # Lane-dense store; padding lanes explicitly re-zeroed.
        o_ref[...] = (x2 + emb_l) * valid

    return pl.pallas_call(
        kernel,
        out_shape=jax.ShapeDtypeStruct((cmax, lpad), jnp.float32),
    )(skip_f, x_lo, x_hi, consts, seg_scatter, seg_bcast,
      w_all, g_all, b_all, t_pad, w_emb, bias_col)


# ---------------------------------- JAX-side glue / wrapper ----------------------------------
def _graph_encoder(raw):
    # TODO(synk): GraphEncoder source not provided; inferred as embedding-table node
    # features -> 2 GCN layers (ReLU between) -> global mean pool over nodes. Kept in XLA.
    h = jax.nn.relu(raw["adj_norm"] @ raw["node_emb"] @ raw["gcn_w1"] + raw["gcn_b1"])
    h = raw["adj_norm"] @ h @ raw["gcn_w2"] + raw["gcn_b2"]
    return jnp.mean(h, axis=0)                     # (out_channels,)


def graph_up_forward(x, skip_x, t, packed, raw):
    f32 = jnp.float32
    n_batch, c_x, l_in = x.shape
    l_out = 2 * l_in
    in_ch = 2 * c_x
    mid_ch = in_ch // 2
    out_ch = raw["emb_b"].shape[0]
    cmax = packed["w_all"].shape[1]
    lanes = n_batch * l_out
    lpad = max(128, _round_up(lanes, 128))         # lane-dense output (multiple of 128)
    nbpad = _round_up(n_batch, 8)

    # Fold batch into the lane axis (channel-major); pad channels to cmax, lanes to lpad.
    skip_f = jnp.zeros((cmax, lpad), f32)
    skip_f = skip_f.at[:c_x, :lanes].set(
        jnp.transpose(skip_x, (1, 0, 2)).reshape(c_x, lanes))

    # Upsample (scale=2, linear, align_corners=True) taps pre-gathered at output
    # resolution (pure index gather, part of the lane-fold); the lerp stays in-kernel.
    src = jnp.arange(l_out, dtype=f32) * (l_in - 1) / (l_out - 1)
    lo = jnp.floor(src).astype(jnp.int32)
    hi = jnp.minimum(lo + 1, l_in - 1)
    frac = src - lo.astype(f32)

    def fold_taps(idx):
        g = x[:, :, idx]                                           # (B, c_x, l_out)
        out = jnp.zeros((cmax, lpad), f32)
        return out.at[c_x:2 * c_x, :lanes].set(
            jnp.transpose(g, (1, 0, 2)).reshape(c_x, lanes))
    x_lo = fold_taps(lo)
    x_hi = fold_taps(hi)

    # Hoisted shape-constant index math (was iota/div/mod inside the kernel).
    lane = jnp.arange(lpad, dtype=jnp.int32)
    pos = lane % l_out
    seg = lane // l_out
    is_valid = lane < lanes
    consts = jnp.zeros((8, lpad), f32)
    consts = consts.at[0].set(jnp.where(is_valid, frac[pos], 0.0))    # lerp fraction
    consts = consts.at[1].set((pos != 0).astype(f32))                 # l-1 tap seam mask
    consts = consts.at[2].set((pos != l_out - 1).astype(f32))         # l+1 tap seam mask
    consts = consts.at[3].set(is_valid.astype(f32))                   # valid-lane mask

    # Thin per-sample one-hots (replace the old lpad x lpad projector and the dense
    # block-diagonal upsample matrix): O(lpad * Bpad) operands only.
    b_idx = jnp.arange(nbpad, dtype=jnp.int32)
    seg_scatter = ((seg[:, None] == b_idx[None, :]) & is_valid[:, None]).astype(f32)  # (lpad, nbpad)
    seg_bcast = jnp.transpose(seg_scatter)                                            # (nbpad, lpad)

    # Graph embedding (constant w.r.t. x/t) folded into the Linear bias column.
    gemb = _graph_encoder(raw)
    bias_col = jnp.zeros((cmax, 1), f32).at[:out_ch, 0].set(raw["emb_b"] + gemb)

    # Time embedding input kept lane-dense: (B, emb_dim) padded on sublanes only.
    t_pad = jnp.zeros((nbpad, t.shape[1]), f32).at[:n_batch].set(t)

    out_pad = _graph_up_pallas(
        skip_f, x_lo, x_hi, consts, seg_scatter, seg_bcast,
        packed["w_all"], packed["g_all"], packed["b_all"],
        t_pad, packed["w_emb"], bias_col,
        l_out=l_out, c_gn=(in_ch, in_ch, mid_ch, out_ch))

    out = out_pad[:out_ch, :lanes].reshape(out_ch, n_batch, l_out)
    return jnp.transpose(out, (1, 0, 2))           # (B, out_channels, 2*L)


# -------------------------- pure-JAX reference (same assumed semantics) --------------------------
def _upsample_linear_x2_ref(x):
    _, _, l = x.shape
    lo_len = 2 * l
    pos = jnp.arange(lo_len, dtype=jnp.float32) * (l - 1) / (lo_len - 1)
    lo = jnp.floor(pos).astype(jnp.int32)
    hi = jnp.minimum(lo + 1, l - 1)
    frac = pos - lo.astype(jnp.float32)
    return x[:, :, lo] * (1.0 - frac) + x[:, :, hi] * frac


def _conv1d_k3_ref(h, w):
    l = h.shape[2]
    hp = jnp.pad(h, ((0, 0), (0, 0), (1, 1)))
    return (jnp.einsum("oi,bil->bol", w[:, :, 0], hp[:, :, 0:l])
            + jnp.einsum("oi,bil->bol", w[:, :, 1], hp[:, :, 1:l + 1])
            + jnp.einsum("oi,bil->bol", w[:, :, 2], hp[:, :, 2:l + 2]))


def _gn_ref(h, g, b):
    m = jnp.mean(h, axis=(1, 2), keepdims=True)
    v = jnp.var(h, axis=(1, 2), keepdims=True)
    return g[None, :, None] * (h - m) * jax.lax.rsqrt(v + _GN_EPS) + b[None, :, None]


def graph_up_reference(x, skip_x, t, raw):
    xc = jnp.concatenate([skip_x, _upsample_linear_x2_ref(x)], axis=1)
    h = _gelu_tanh(_gn_ref(_conv1d_k3_ref(xc, raw["w1a"]), raw["g1a"], raw["b1a"]))
    h = _gn_ref(_conv1d_k3_ref(h, raw["w1b"]), raw["g1b"], raw["b1b"])
    x1 = _gelu_tanh(xc + h)
    h = _gelu_tanh(_gn_ref(_conv1d_k3_ref(x1, raw["w2a"]), raw["g2a"], raw["b2a"]))
    x2 = _gn_ref(_conv1d_k3_ref(h, raw["w2b"]), raw["g2b"], raw["b2b"])
    emb = jax.nn.silu(t) @ raw["emb_w"].T + raw["emb_b"]
    gemb = _graph_encoder(raw)
    return x2 + emb[:, :, None] + gemb[None, :, None]


# --------------------------------------------- main ---------------------------------------------
if __name__ == "__main__":
    jax.config.update("jax_default_matmul_precision", "highest")

    key = jax.random.PRNGKey(0)
    n_batch = 2
    in_channels = 8            # channels after cat([skip_x, up(x)], dim=1)
    out_channels = 4
    mid_channels = in_channels // 2
    emb_dim = 256
    l_in = 16                  # x length before upsample; skip_x length = 32
    node_embed_dim = 16
    graph_hidden_dim = 32
    num_nodes = 6

    ks = jax.random.split(key, 20)

    x = jax.random.normal(ks[0], (n_batch, in_channels // 2, l_in), jnp.float32)
    skip_x = jax.random.normal(ks[1], (n_batch, in_channels // 2, 2 * l_in), jnp.float32)
    t = jax.random.normal(ks[2], (n_batch, emb_dim), jnp.float32)

    def conv_w(k, c_out, c_in):
        return 0.1 * jax.random.normal(k, (c_out, c_in, 3), jnp.float32)

    raw = {
        # DoubleConv #1 (residual): in -> in, mid = in
        "w1a": conv_w(ks[3], in_channels, in_channels),
        "g1a": 1.0 + 0.1 * jax.random.normal(ks[7], (in_channels,), jnp.float32),
        "b1a": 0.05 * jax.random.normal(ks[8], (in_channels,), jnp.float32),
        "w1b": conv_w(ks[4], in_channels, in_channels),
        "g1b": 1.0 + 0.1 * jax.random.normal(ks[9], (in_channels,), jnp.float32),
        "b1b": 0.05 * jax.random.normal(ks[10], (in_channels,), jnp.float32),
        # DoubleConv #2: in -> out, mid = in // 2
        "w2a": conv_w(ks[5], mid_channels, in_channels),
        "g2a": 1.0 + 0.1 * jax.random.normal(ks[11], (mid_channels,), jnp.float32),
        "b2a": 0.05 * jax.random.normal(ks[12], (mid_channels,), jnp.float32),
        "w2b": conv_w(ks[6], out_channels, mid_channels),
        "g2b": 1.0 + 0.1 * jax.random.normal(ks[13], (out_channels,), jnp.float32),
        "b2b": 0.05 * jax.random.normal(ks[14], (out_channels,), jnp.float32),
        # emb_layer: SiLU -> Linear(emb_dim, out_channels); torch layout (out, in).
        "emb_w": 0.05 * jax.random.normal(ks[15], (out_channels, emb_dim), jnp.float32),
        "emb_b": 0.01 * jax.random.normal(ks[16], (out_channels,), jnp.float32),
        # GraphEncoder params
        "node_emb": jax.random.normal(ks[17], (num_nodes, node_embed_dim), jnp.float32),
        "gcn_w1": 0.1 * jax.random.normal(ks[18], (node_embed_dim, graph_hidden_dim), jnp.float32),
        "gcn_b1": jnp.zeros((graph_hidden_dim,), jnp.float32),
        "gcn_w2": 0.1 * jax.random.normal(ks[19], (graph_hidden_dim, out_channels), jnp.float32),
        "gcn_b2": jnp.zeros((out_channels,), jnp.float32),
    }

    # Deterministic graph_data: ring graph, symmetric GCN normalization of (A + I).
    src = jnp.arange(num_nodes)
    dst = (src + 1) % num_nodes
    adj = jnp.zeros((num_nodes, num_nodes), jnp.float32)
    adj = adj.at[src, dst].set(1.0).at[dst, src].set(1.0) + jnp.eye(num_nodes, dtype=jnp.float32)
    dinv = 1.0 / jnp.sqrt(jnp.sum(adj, axis=1))
    raw["adj_norm"] = adj * dinv[:, None] * dinv[None, :]

    packed = pack_params(raw, in_channels, mid_channels, out_channels)

    out = jax.jit(graph_up_forward)(x, skip_x, t, packed, raw)
    jax.block_until_ready(out)
    assert out.shape == (n_batch, out_channels, 2 * l_in), out.shape

    # Self-check against the pure-JAX reference of the same (assumed) module semantics.
    # Tolerance is loose only to absorb matmul-precision / GELU-approximation differences;
    # real structural bugs (seam leaks, wrong tap/channel packing, wrong GN segmentation)
    # are O(0.1+).
    ref = jax.jit(graph_up_reference)(x, skip_x, t, raw)
    max_err = float(jnp.max(jnp.abs(out - ref)))
    assert max_err < 3e-2, f"kernel/reference mismatch: max abs err {max_err}"

    print("KERNEL_OK")
</pallas_src>

<mosaic_0001>
module attributes {stable_mosaic.version = 11 : i64} {
  func.func @kernel(%arg0: memref<8x128xf32, #tpu.memory_space<vmem>>, %arg1: memref<8x128xf32, #tpu.memory_space<vmem>>, %arg2: memref<8x128xf32, #tpu.memory_space<vmem>>, %arg3: memref<8x128xf32, #tpu.memory_space<vmem>>, %arg4: memref<128x8xf32, #tpu.memory_space<vmem>>, %arg5: memref<8x128xf32, #tpu.memory_space<vmem>>, %arg6: memref<4x8x24xf32, #tpu.memory_space<vmem>>, %arg7: memref<4x8x1xf32, #tpu.memory_space<vmem>>, %arg8: memref<4x8x1xf32, #tpu.memory_space<vmem>>, %arg9: memref<8x256xf32, #tpu.memory_space<vmem>>, %arg10: memref<8x256xf32, #tpu.memory_space<vmem>>, %arg11: memref<8x1xf32, #tpu.memory_space<vmem>>, %arg12: memref<8x128xf32, #tpu.memory_space<vmem>>) attributes {dimension_semantics = [], scalar_prefetch = 0 : i64, scratch_operands = 0 : i64, tpu.core_type = #tpu.core_type<tc>} {
    %c0 = arith.constant 0 : index
    %c0_0 = arith.constant 0 : index
    %0 = vector.load %arg3[%c0, %c0_0] : memref<8x128xf32, #tpu.memory_space<vmem>>, vector<1x128xf32>
    %c1 = arith.constant 1 : index
    %c0_1 = arith.constant 0 : index
    %1 = vector.load %arg3[%c1, %c0_1] : memref<8x128xf32, #tpu.memory_space<vmem>>, vector<1x128xf32>
    %c2 = arith.constant 2 : index
    %c0_2 = arith.constant 0 : index
    %2 = vector.load %arg3[%c2, %c0_2] : memref<8x128xf32, #tpu.memory_space<vmem>>, vector<1x128xf32>
    %c3 = arith.constant 3 : index
    %c0_3 = arith.constant 0 : index
    %3 = vector.load %arg3[%c3, %c0_3] : memref<8x128xf32, #tpu.memory_space<vmem>>, vector<1x128xf32>
    %c0_4 = arith.constant 0 : index
    %c0_5 = arith.constant 0 : index
    %4 = vector.load %arg4[%c0_4, %c0_5] : memref<128x8xf32, #tpu.memory_space<vmem>>, vector<128x8xf32>
    %c0_6 = arith.constant 0 : index
    %c0_7 = arith.constant 0 : index
    %5 = vector.load %arg5[%c0_6, %c0_7] : memref<8x128xf32, #tpu.memory_space<vmem>>, vector<8x128xf32>
    %c0_8 = arith.constant 0 : index
    %c0_9 = arith.constant 0 : index
    %6 = vector.load %arg1[%c0_8, %c0_9] : memref<8x128xf32, #tpu.memory_space<vmem>>, vector<8x128xf32>
    %c0_10 = arith.constant 0 : index
    %c0_11 = arith.constant 0 : index
    %7 = vector.load %arg0[%c0_10, %c0_11] : memref<8x128xf32, #tpu.memory_space<vmem>>, vector<8x128xf32>
    %8 = arith.addf %7, %6 : vector<8x128xf32>
    %c0_12 = arith.constant 0 : index
    %c0_13 = arith.constant 0 : index
    %9 = vector.load %arg2[%c0_12, %c0_13] : memref<8x128xf32, #tpu.memory_space<vmem>>, vector<8x128xf32>
    %10 = arith.subf %9, %6 : vector<8x128xf32>
    %11 = vector.broadcast %0 : vector<1x128xf32> to vector<8x128xf32>
    %12 = arith.mulf %11, %10 : vector<8x128xf32>
    %13 = arith.addf %8, %12 : vector<8x128xf32>
    %c1_i32 = arith.constant 1 : i32
    %14 = tpu.dynamic_rotate %13 by %c1_i32 dim 1 : vector<8x128xf32>, i32 -> vector<8x128xf32>
    %15 = vector.broadcast %1 : vector<1x128xf32> to vector<8x128xf32>
    %16 = arith.mulf %14, %15 : vector<8x128xf32>
    %c127_i32 = arith.constant 127 : i32
    %17 = tpu.dynamic_rotate %13 by %c127_i32 dim 1 : vector<8x128xf32>, i32 -> vector<8x128xf32>
    %18 = vector.broadcast %2 : vector<1x128xf32> to vector<8x128xf32>
    %19 = arith.mulf %17, %18 : vector<8x128xf32>
    %20 = tpu.concatenate %16, %13, %19 in 0 : vector<8x128xf32>, vector<8x128xf32>, vector<8x128xf32> -> vector<24x128xf32>
    %c0_14 = arith.constant 0 : index
    %c0_15 = arith.constant 0 : index
    %c0_16 = arith.constant 0 : index
    %21 = vector.load %arg6[%c0_14, %c0_15, %c0_16] : memref<4x8x24xf32, #tpu.memory_space<vmem>>, vector<1x8x24xf32>
    %22 = vector.shape_cast %21 : vector<1x8x24xf32> to vector<8x24xf32>
    %cst = arith.constant dense<0.000000e+00> : vector<8x128xf32>
    %23 = tpu.matmul %22, %20, %cst {dimension_numbers = #tpu.dot_dimension_numbers<[1], [0], [0], [1], [0, 0, 1, 1], [], []>, precision = #tpu.contract_precision<fp32>} : vector<8x24xf32>, vector<24x128xf32>, vector<8x128xf32> -> vector<8x128xf32>
    %cst_17 = arith.constant dense<0.000000e+00> : vector<8x8xf32>
    %24 = tpu.matmul %23, %4, %cst_17 {dimension_numbers = #tpu.dot_dimension_numbers<[1], [0], [0], [1], [0, 0, 1, 1], [], []>, precision = #tpu.contract_precision<fp32>} : vector<8x128xf32>, vector<128x8xf32>, vector<8x8xf32> -> vector<8x8xf32>
    %25 = arith.mulf %23, %23 : vector<8x128xf32>
    %cst_18 = arith.constant dense<0.000000e+00> : vector<8x8xf32>
    %26 = tpu.matmul %25, %4, %cst_18 {dimension_numbers = #tpu.dot_dimension_numbers<[1], [0], [0], [1], [0, 0, 1, 1], [], []>, precision = #tpu.contract_precision<fp32>} : vector<8x128xf32>, vector<128x8xf32>, vector<8x8xf32> -> vector<8x8xf32>
    %cst_19 = arith.constant dense<0.000000e+00> : vector<8xf32>
    %27 = vector.multi_reduction <add>, %24, %cst_19 [0] : vector<8x8xf32> to vector<8xf32>
    %28 = vector.shape_cast %27 : vector<8xf32> to vector<1x8xf32>
    %cst_20 = arith.constant 3.906250e-03 : f32
    %29 = vector.broadcast %cst_20 : f32 to vector<1x8xf32>
    %30 = arith.mulf %28, %29 : vector<1x8xf32>
    %cst_21 = arith.constant dense<0.000000e+00> : vector<8xf32>
    %31 = vector.multi_reduction <add>, %26, %cst_21 [0] : vector<8x8xf32> to vector<8xf32>
    %32 = vector.shape_cast %31 : vector<8xf32> to vector<1x8xf32>
    %cst_22 = arith.constant 3.906250e-03 : f32
    %33 = vector.broadcast %cst_22 : f32 to vector<1x8xf32>
    %34 = arith.mulf %32, %33 : vector<1x8xf32>
    %35 = arith.mulf %30, %30 : vector<1x8xf32>
    %36 = arith.subf %34, %35 : vector<1x8xf32>
    %cst_23 = arith.constant 0.000000e+00 : f32
    %37 = vector.broadcast %cst_23 : f32 to vector<1x8xf32>
    %38 = arith.maximumf %36, %37 : vector<1x8xf32>
    %cst_24 = arith.constant 9.99999974E-6 : f32
    %39 = vector.broadcast %cst_24 : f32 to vector<1x8xf32>
    %40 = arith.addf %38, %39 : vector<1x8xf32>
    %41 = math.rsqrt %40 : vector<1x8xf32>
    %cst_25 = arith.constant dense<0.000000e+00> : vector<1x128xf32>
    %42 = tpu.matmul %30, %5, %cst_25 {dimension_numbers = #tpu.dot_dimension_numbers<[1], [0], [0], [1], [0, 0, 1, 1], [], []>, precision = #tpu.contract_precision<fp32>} : vector<1x8xf32>, vector<8x128xf32>, vector<1x128xf32> -> vector<1x128xf32>
    %cst_26 = arith.constant dense<0.000000e+00> : vector<1x128xf32>
    %43 = tpu.matmul %41, %5, %cst_26 {dimension_numbers = #tpu.dot_dimension_numbers<[1], [0], [0], [1], [0, 0, 1, 1], [], []>, precision = #tpu.contract_precision<fp32>} : vector<1x8xf32>, vector<8x128xf32>, vector<1x128xf32> -> vector<1x128xf32>
    %c0_27 = arith.constant 0 : index
    %c0_28 = arith.constant 0 : index
    %c0_29 = arith.constant 0 : index
    %44 = vector.load %arg7[%c0_27, %c0_28, %c0_29] : memref<4x8x1xf32, #tpu.memory_space<vmem>>, vector<1x8x1xf32>
    %45 = vector.shape_cast %44 : vector<1x8x1xf32> to vector<8x1xf32>
    %46 = vector.broadcast %42 : vector<1x128xf32> to vector<8x128xf32>
    %47 = arith.subf %23, %46 : vector<8x128xf32>
    %48 = vector.broadcast %43 : vector<1x128xf32> to vector<8x128xf32>
    %49 = arith.mulf %47, %48 : vector<8x128xf32>
    %50 = vector.broadcast %45 : vector<8x1xf32> to vector<8x128xf32>
    %51 = arith.mulf %50, %49 : vector<8x128xf32>
    %c0_30 = arith.constant 0 : index
    %c0_31 = arith.constant 0 : index
    %c0_32 = arith.constant 0 : index
    %52 = vector.load %arg8[%c0_30, %c0_31, %c0_32] : memref<4x8x1xf32, #tpu.memory_space<vmem>>, vector<1x8x1xf32>
    %53 = vector.shape_cast %52 : vector<1x8x1xf32> to vector<8x1xf32>
    %54 = vector.broadcast %53 : vector<8x1xf32> to vector<8x128xf32>
    %55 = arith.addf %51, %54 : vector<8x128xf32>
    %cst_33 = arith.constant 5.000000e-01 : f32
    %56 = vector.broadcast %cst_33 : f32 to vector<8x128xf32>
    %57 = arith.mulf %56, %55 : vector<8x128xf32>
    %cst_34 = arith.constant 4.471500e-02 : f32
    %58 = vector.broadcast %cst_34 : f32 to vector<8x128xf32>
    %59 = arith.mulf %58, %55 : vector<8x128xf32>
    %60 = arith.mulf %59, %55 : vector<8x128xf32>
    %61 = arith.mulf %60, %55 : vector<8x128xf32>
    %62 = arith.addf %55, %61 : vector<8x128xf32>
    %cst_35 = arith.constant 0.797884583 : f32
    %63 = vector.broadcast %cst_35 : f32 to vector<8x128xf32>
    %64 = arith.mulf %63, %62 : vector<8x128xf32>
    %65 = math.tanh %64 : vector<8x128xf32>
    %cst_36 = arith.constant 1.000000e+00 : f32
    %66 = vector.broadcast %cst_36 : f32 to vector<8x128xf32>
    %67 = arith.addf %66, %65 : vector<8x128xf32>
    %68 = arith.mulf %57, %67 : vector<8x128xf32>
    %c1_i32_37 = arith.constant 1 : i32
    %69 = tpu.dynamic_rotate %68 by %c1_i32_37 dim 1 : vector<8x128xf32>, i32 -> vector<8x128xf32>
    %70 = vector.broadcast %1 : vector<1x128xf32> to vector<8x128xf32>
    %71 = arith.mulf %69, %70 : vector<8x128xf32>
    %c127_i32_38 = arith.constant 127 : i32
    %72 = tpu.dynamic_rotate %68 by %c127_i32_38 dim 1 : vector<8x128xf32>, i32 -> vector<8x128xf32>
    %73 = vector.broadcast %2 : vector<1x128xf32> to vector<8x128xf32>
    %74 = arith.mulf %72, %73 : vector<8x128xf32>
    %75 = tpu.concatenate %71, %68, %74 in 0 : vector<8x128xf32>, vector<8x128xf32>, vector<8x128xf32> -> vector<24x128xf32>
    %c1_39 = arith.constant 1 : index
    %c0_40 = arith.constant 0 : index
    %c0_41 = arith.constant 0 : index
    %76 = vector.load %arg6[%c1_39, %c0_40, %c0_41] : memref<4x8x24xf32, #tpu.memory_space<vmem>>, vector<1x8x24xf32>
    %77 = vector.shape_cast %76 : vector<1x8x24xf32> to vector<8x24xf32>
    %cst_42 = arith.constant dense<0.000000e+00> : vector<8x128xf32>
    %78 = tpu.matmul %77, %75, %cst_42 {dimension_numbers = #tpu.dot_dimension_numbers<[1], [0], [0], [1], [0, 0, 1, 1], [], []>, precision = #tpu.contract_precision<fp32>} : vector<8x24xf32>, vector<24x128xf32>, vector<8x128xf32> -> vector<8x128xf32>
    %cst_43 = arith.constant dense<0.000000e+00> : vector<8x8xf32>
    %79 = tpu.matmul %78, %4, %cst_43 {dimension_numbers = #tpu.dot_dimension_numbers<[1], [0], [0], [1], [0, 0, 1, 1], [], []>, precision = #tpu.contract_precision<fp32>} : vector<8x128xf32>, vector<128x8xf32>, vector<8x8xf32> -> vector<8x8xf32>
    %80 = arith.mulf %78, %78 : vector<8x128xf32>
    %cst_44 = arith.constant dense<0.000000e+00> : vector<8x8xf32>
    %81 = tpu.matmul %80, %4, %cst_44 {dimension_numbers = #tpu.dot_dimension_numbers<[1], [0], [0], [1], [0, 0, 1, 1], [], []>, precision = #tpu.contract_precision<fp32>} : vector<8x128xf32>, vector<128x8xf32>, vector<8x8xf32> -> vector<8x8xf32>
    %cst_45 = arith.constant dense<0.000000e+00> : vector<8xf32>
    %82 = vector.multi_reduction <add>, %79, %cst_45 [0] : vector<8x8xf32> to vector<8xf32>
    %83 = vector.shape_cast %82 : vector<8xf32> to vector<1x8xf32>
    %cst_46 = arith.constant 3.906250e-03 : f32
    %84 = vector.broadcast %cst_46 : f32 to vector<1x8xf32>
    %85 = arith.mulf %83, %84 : vector<1x8xf32>
    %cst_47 = arith.constant dense<0.000000e+00> : vector<8xf32>
    %86 = vector.multi_reduction <add>, %81, %cst_47 [0] : vector<8x8xf32> to vector<8xf32>
    %87 = vector.shape_cast %86 : vector<8xf32> to vector<1x8xf32>
    %cst_48 = arith.constant 3.906250e-03 : f32
    %88 = vector.broadcast %cst_48 : f32 to vector<1x8xf32>
    %89 = arith.mulf %87, %88 : vector<1x8xf32>
    %90 = arith.mulf %85, %85 : vector<1x8xf32>
    %91 = arith.subf %89, %90 : vector<1x8xf32>
    %cst_49 = arith.constant 0.000000e+00 : f32
    %92 = vector.broadcast %cst_49 : f32 to vector<1x8xf32>
    %93 = arith.maximumf %91, %92 : vector<1x8xf32>
    %cst_50 = arith.constant 9.99999974E-6 : f32
    %94 = vector.broadcast %cst_50 : f32 to vector<1x8xf32>
    %95 = arith.addf %93, %94 : vector<1x8xf32>
    %96 = math.rsqrt %95 : vector<1x8xf32>
    %cst_51 = arith.constant dense<0.000000e+00> : vector<1x128xf32>
    %97 = tpu.matmul %85, %5, %cst_51 {dimension_numbers = #tpu.dot_dimension_numbers<[1], [0], [0], [1], [0, 0, 1, 1], [], []>, precision = #tpu.contract_precision<fp32>} : vector<1x8xf32>, vector<8x128xf32>, vector<1x128xf32> -> vector<1x128xf32>
    %cst_52 = arith.constant dense<0.000000e+00> : vector<1x128xf32>
    %98 = tpu.matmul %96, %5, %cst_52 {dimension_numbers = #tpu.dot_dimension_numbers<[1], [0], [0], [1], [0, 0, 1, 1], [], []>, precision = #tpu.contract_precision<fp32>} : vector<1x8xf32>, vector<8x128xf32>, vector<1x128xf32> -> vector<1x128xf32>
    %c1_53 = arith.constant 1 : index
    %c0_54 = arith.constant 0 : index
    %c0_55 = arith.constant 0 : index
    %99 = vector.load %arg7[%c1_53, %c0_54, %c0_55] : memref<4x8x1xf32, #tpu.memory_space<vmem>>, vector<1x8x1xf32>
    %100 = vector.shape_cast %99 : vector<1x8x1xf32> to vector<8x1xf32>
    %101 = vector.broadcast %97 : vector<1x128xf32> to vector<8x128xf32>
    %102 = arith.subf %78, %101 : vector<8x128xf32>
    %103 = vector.broadcast %98 : vector<1x128xf32> to vector<8x128xf32>
    %104 = arith.mulf %102, %103 : vector<8x128xf32>
    %105 = vector.broadcast %100 : vector<8x1xf32> to vector<8x128xf32>
    %106 = arith.mulf %105, %104 : vector<8x128xf32>
    %c1_56 = arith.constant 1 : index
    %c0_57 = arith.constant 0 : index
    %c0_58 = arith.constant 0 : index
    %107 = vector.load %arg8[%c1_56, %c0_57, %c0_58] : memref<4x8x1xf32, #tpu.memory_space<vmem>>, vector<1x8x1xf32>
    %108 = vector.shape_cast %107 : vector<1x8x1xf32> to vector<8x1xf32>
    %109 = vector.broadcast %108 : vector<8x1xf32> to vector<8x128xf32>
    %110 = arith.addf %106, %109 : vector<8x128xf32>
    %111 = arith.addf %13, %110 : vector<8x128xf32>
    %cst_59 = arith.constant 5.000000e-01 : f32
    %112 = vector.broadcast %cst_59 : f32 to vector<8x128xf32>
    %113 = arith.mulf %112, %111 : vector<8x128xf32>
    %cst_60 = arith.constant 4.471500e-02 : f32
    %114 = vector.broadcast %cst_60 : f32 to vector<8x128xf32>
    %115 = arith.mulf %114, %111 : vector<8x128xf32>
    %116 = arith.mulf %115, %111 : vector<8x128xf32>
    %117 = arith.mulf %116, %111 : vector<8x128xf32>
    %118 = arith.addf %111, %117 : vector<8x128xf32>
    %cst_61 = arith.constant 0.797884583 : f32
    %119 = vector.broadcast %cst_61 : f32 to vector<8x128xf32>
    %120 = arith.mulf %119, %118 : vector<8x128xf32>
    %121 = math.tanh %120 : vector<8x128xf32>
    %cst_62 = arith.constant 1.000000e+00 : f32
    %122 = vector.broadcast %cst_62 : f32 to vector<8x128xf32>
    %123 = arith.addf %122, %121 : vector<8x128xf32>
    %124 = arith.mulf %113, %123 : vector<8x128xf32>
    %c1_i32_63 = arith.constant 1 : i32
    %125 = tpu.dynamic_rotate %124 by %c1_i32_63 dim 1 : vector<8x128xf32>, i32 -> vector<8x128xf32>
    %126 = vector.broadcast %1 : vector<1x128xf32> to vector<8x128xf32>
    %127 = arith.mulf %125, %126 : vector<8x128xf32>
    %c127_i32_64 = arith.constant 127 : i32
    %128 = tpu.dynamic_rotate %124 by %c127_i32_64 dim 1 : vector<8x128xf32>, i32 -> vector<8x128xf32>
    %129 = vector.broadcast %2 : vector<1x128xf32> to vector<8x128xf32>
    %130 = arith.mulf %128, %129 : vector<8x128xf32>
    %131 = tpu.concatenate %127, %124, %130 in 0 : vector<8x128xf32>, vector<8x128xf32>, vector<8x128xf32> -> vector<24x128xf32>
    %c2_65 = arith.constant 2 : index
    %c0_66 = arith.constant 0 : index
    %c0_67 = arith.constant 0 : index
    %132 = vector.load %arg6[%c2_65, %c0_66, %c0_67] : memref<4x8x24xf32, #tpu.memory_space<vmem>>, vector<1x8x24xf32>
    %133 = vector.shape_cast %132 : vector<1x8x24xf32> to vector<8x24xf32>
    %cst_68 = arith.constant dense<0.000000e+00> : vector<8x128xf32>
    %134 = tpu.matmul %133, %131, %cst_68 {dimension_numbers = #tpu.dot_dimension_numbers<[1], [0], [0], [1], [0, 0, 1, 1], [], []>, precision = #tpu.contract_precision<fp32>} : vector<8x24xf32>, vector<24x128xf32>, vector<8x128xf32> -> vector<8x128xf32>
    %cst_69 = arith.constant dense<0.000000e+00> : vector<8x8xf32>
    %135 = tpu.matmul %134, %4, %cst_69 {dimension_numbers = #tpu.dot_dimension_numbers<[1], [0], [0], [1], [0, 0, 1, 1], [], []>, precision = #tpu.contract_precision<fp32>} : vector<8x128xf32>, vector<128x8xf32>, vector<8x8xf32> -> vector<8x8xf32>
    %136 = arith.mulf %134, %134 : vector<8x128xf32>
    %cst_70 = arith.constant dense<0.000000e+00> : vector<8x8xf32>
    %137 = tpu.matmul %136, %4, %cst_70 {dimension_numbers = #tpu.dot_dimension_numbers<[1], [0], [0], [1], [0, 0, 1, 1], [], []>, precision = #tpu.contract_precision<fp32>} : vector<8x128xf32>, vector<128x8xf32>, vector<8x8xf32> -> vector<8x8xf32>
    %cst_71 = arith.constant dense<0.000000e+00> : vector<8xf32>
    %138 = vector.multi_reduction <add>, %135, %cst_71 [0] : vector<8x8xf32> to vector<8xf32>
    %139 = vector.shape_cast %138 : vector<8xf32> to vector<1x8xf32>
    %cst_72 = arith.constant 7.812500e-03 : f32
    %140 = vector.broadcast %cst_72 : f32 to vector<1x8xf32>
    %141 = arith.mulf %139, %140 : vector<1x8xf32>
    %cst_73 = arith.constant dense<0.000000e+00> : vector<8xf32>
    %142 = vector.multi_reduction <add>, %137, %cst_73 [0] : vector<8x8xf32> to vector<8xf32>
    %143 = vector.shape_cast %142 : vector<8xf32> to vector<1x8xf32>
    %cst_74 = arith.constant 7.812500e-03 : f32
    %144 = vector.broadcast %cst_74 : f32 to vector<1x8xf32>
    %145 = arith.mulf %143, %144 : vector<1x8xf32>
    %146 = arith.mulf %141, %141 : vector<1x8xf32>
    %147 = arith.subf %145, %146 : vector<1x8xf32>
    %cst_75 = arith.constant 0.000000e+00 : f32
    %148 = vector.broadcast %cst_75 : f32 to vector<1x8xf32>
    %149 = arith.maximumf %147, %148 : vector<1x8xf32>
    %cst_76 = arith.constant 9.99999974E-6 : f32
    %150 = vector.broadcast %cst_76 : f32 to vector<1x8xf32>
    %151 = arith.addf %149, %150 : vector<1x8xf32>
    %152 = math.rsqrt %151 : vector<1x8xf32>
    %cst_77 = arith.constant dense<0.000000e+00> : vector<1x128xf32>
    %153 = tpu.matmul %141, %5, %cst_77 {dimension_numbers = #tpu.dot_dimension_numbers<[1], [0], [0], [1], [0, 0, 1, 1], [], []>, precision = #tpu.contract_precision<fp32>} : vector<1x8xf32>, vector<8x128xf32>, vector<1x128xf32> -> vector<1x128xf32>
    %cst_78 = arith.constant dense<0.000000e+00> : vector<1x128xf32>
    %154 = tpu.matmul %152, %5, %cst_78 {dimension_numbers = #tpu.dot_dimension_numbers<[1], [0], [0], [1], [0, 0, 1, 1], [], []>, precision = #tpu.contract_precision<fp32>} : vector<1x8xf32>, vector<8x128xf32>, vector<1x128xf32> -> vector<1x128xf32>
    %c2_79 = arith.constant 2 : index
    %c0_80 = arith.constant 0 : index
    %c0_81 = arith.constant 0 : index
    %155 = vector.load %arg7[%c2_79, %c0_80, %c0_81] : memref<4x8x1xf32, #tpu.memory_space<vmem>>, vector<1x8x1xf32>
    %156 = vector.shape_cast %155 : vector<1x8x1xf32> to vector<8x1xf32>
    %157 = vector.broadcast %153 : vector<1x128xf32> to vector<8x128xf32>
    %158 = arith.subf %134, %157 : vector<8x128xf32>
    %159 = vector.broadcast %154 : vector<1x128xf32> to vector<8x128xf32>
    %160 = arith.mulf %158, %159 : vector<8x128xf32>
    %161 = vector.broadcast %156 : vector<8x1xf32> to vector<8x128xf32>
    %162 = arith.mulf %161, %160 : vector<8x128xf32>
    %c2_82 = arith.constant 2 : index
    %c0_83 = arith.constant 0 : index
    %c0_84 = arith.constant 0 : index
    %163 = vector.load %arg8[%c2_82, %c0_83, %c0_84] : memref<4x8x1xf32, #tpu.memory_space<vmem>>, vector<1x8x1xf32>
    %164 = vector.shape_cast %163 : vector<1x8x1xf32> to vector<8x1xf32>
    %165 = vector.broadcast %164 : vector<8x1xf32> to vector<8x128xf32>
    %166 = arith.addf %162, %165 : vector<8x128xf32>
    %cst_85 = arith.constant 5.000000e-01 : f32
    %167 = vector.broadcast %cst_85 : f32 to vector<8x128xf32>
    %168 = arith.mulf %167, %166 : vector<8x128xf32>
    %cst_86 = arith.constant 4.471500e-02 : f32
    %169 = vector.broadcast %cst_86 : f32 to vector<8x128xf32>
    %170 = arith.mulf %169, %166 : vector<8x128xf32>
    %171 = arith.mulf %170, %166 : vector<8x128xf32>
    %172 = arith.mulf %171, %166 : vector<8x128xf32>
    %173 = arith.addf %166, %172 : vector<8x128xf32>
    %cst_87 = arith.constant 0.797884583 : f32
    %174 = vector.broadcast %cst_87 : f32 to vector<8x128xf32>
    %175 = arith.mulf %174, %173 : vector<8x128xf32>
    %176 = math.tanh %175 : vector<8x128xf32>
    %cst_88 = arith.constant 1.000000e+00 : f32
    %177 = vector.broadcast %cst_88 : f32 to vector<8x128xf32>
    %178 = arith.addf %177, %176 : vector<8x128xf32>
    %179 = arith.mulf %168, %178 : vector<8x128xf32>
    %c1_i32_89 = arith.constant 1 : i32
    %180 = tpu.dynamic_rotate %179 by %c1_i32_89 dim 1 : vector<8x128xf32>, i32 -> vector<8x128xf32>
    %181 = vector.broadcast %1 : vector<1x128xf32> to vector<8x128xf32>
    %182 = arith.mulf %180, %181 : vector<8x128xf32>
    %c127_i32_90 = arith.constant 127 : i32
    %183 = tpu.dynamic_rotate %179 by %c127_i32_90 dim 1 : vector<8x128xf32>, i32 -> vector<8x128xf32>
    %184 = vector.broadcast %2 : vector<1x128xf32> to vector<8x128xf32>
    %185 = arith.mulf %183, %184 : vector<8x128xf32>
    %186 = tpu.concatenate %182, %179, %185 in 0 : vector<8x128xf32>, vector<8x128xf32>, vector<8x128xf32> -> vector<24x128xf32>
    %c3_91 = arith.constant 3 : index
    %c0_92 = arith.constant 0 : index
    %c0_93 = arith.constant 0 : index
    %187 = vector.load %arg6[%c3_91, %c0_92, %c0_93] : memref<4x8x24xf32, #tpu.memory_space<vmem>>, vector<1x8x24xf32>
    %188 = vector.shape_cast %187 : vector<1x8x24xf32> to vector<8x24xf32>
    %cst_94 = arith.constant dense<0.000000e+00> : vector<8x128xf32>
    %189 = tpu.matmul %188, %186, %cst_94 {dimension_numbers = #tpu.dot_dimension_numbers<[1], [0], [0], [1], [0, 0, 1, 1], [], []>, precision = #tpu.contract_precision<fp32>} : vector<8x24xf32>, vector<24x128xf32>, vector<8x128xf32> -> vector<8x128xf32>
    %cst_95 = arith.constant dense<0.000000e+00> : vector<8x8xf32>
    %190 = tpu.matmul %189, %4, %cst_95 {dimension_numbers = #tpu.dot_dimension_numbers<[1], [0], [0], [1], [0, 0, 1, 1], [], []>, precision = #tpu.contract_precision<fp32>} : vector<8x128xf32>, vector<128x8xf32>, vector<8x8xf32> -> vector<8x8xf32>
    %191 = arith.mulf %189, %189 : vector<8x128xf32>
    %cst_96 = arith.constant dense<0.000000e+00> : vector<8x8xf32>
    %192 = tpu.matmul %191, %4, %cst_96 {dimension_numbers = #tpu.dot_dimension_numbers<[1], [0], [0], [1], [0, 0, 1, 1], [], []>, precision = #tpu.contract_precision<fp32>} : vector<8x128xf32>, vector<128x8xf32>, vector<8x8xf32> -> vector<8x8xf32>
    %cst_97 = arith.constant dense<0.000000e+00> : vector<8xf32>
    %193 = vector.multi_reduction <add>, %190, %cst_97 [0] : vector<8x8xf32> to vector<8xf32>
    %194 = vector.shape_cast %193 : vector<8xf32> to vector<1x8xf32>
    %cst_98 = arith.constant 7.812500e-03 : f32
    %195 = vector.broadcast %cst_98 : f32 to vector<1x8xf32>
    %196 = arith.mulf %194, %195 : vector<1x8xf32>
    %cst_99 = arith.constant dense<0.000000e+00> : vector<8xf32>
    %197 = vector.multi_reduction <add>, %192, %cst_99 [0] : vector<8x8xf32> to vector<8xf32>
    %198 = vector.shape_cast %197 : vector<8xf32> to vector<1x8xf32>
    %cst_100 = arith.constant 7.812500e-03 : f32
    %199 = vector.broadcast %cst_100 : f32 to vector<1x8xf32>
    %200 = arith.mulf %198, %199 : vector<1x8xf32>
    %201 = arith.mulf %196, %196 : vector<1x8xf32>
    %202 = arith.subf %200, %201 : vector<1x8xf32>
    %cst_101 = arith.constant 0.000000e+00 : f32
    %203 = vector.broadcast %cst_101 : f32 to vector<1x8xf32>
    %204 = arith.maximumf %202, %203 : vector<1x8xf32>
    %cst_102 = arith.constant 9.99999974E-6 : f32
    %205 = vector.broadcast %cst_102 : f32 to vector<1x8xf32>
    %206 = arith.addf %204, %205 : vector<1x8xf32>
    %207 = math.rsqrt %206 : vector<1x8xf32>
    %cst_103 = arith.constant dense<0.000000e+00> : vector<1x128xf32>
    %208 = tpu.matmul %196, %5, %cst_103 {dimension_numbers = #tpu.dot_dimension_numbers<[1], [0], [0], [1], [0, 0, 1, 1], [], []>, precision = #tpu.contract_precision<fp32>} : vector<1x8xf32>, vector<8x128xf32>, vector<1x128xf32> -> vector<1x128xf32>
    %cst_104 = arith.constant dense<0.000000e+00> : vector<1x128xf32>
    %209 = tpu.matmul %207, %5, %cst_104 {dimension_numbers = #tpu.dot_dimension_numbers<[1], [0], [0], [1], [0, 0, 1, 1], [], []>, precision = #tpu.contract_precision<fp32>} : vector<1x8xf32>, vector<8x128xf32>, vector<1x128xf32> -> vector<1x128xf32>
    %c3_105 = arith.constant 3 : index
    %c0_106 = arith.constant 0 : index
    %c0_107 = arith.constant 0 : index
    %210 = vector.load %arg7[%c3_105, %c0_106, %c0_107] : memref<4x8x1xf32, #tpu.memory_space<vmem>>, vector<1x8x1xf32>
    %211 = vector.shape_cast %210 : vector<1x8x1xf32> to vector<8x1xf32>
    %212 = vector.broadcast %208 : vector<1x128xf32> to vector<8x128xf32>
    %213 = arith.subf %189, %212 : vector<8x128xf32>
    %214 = vector.broadcast %209 : vector<1x128xf32> to vector<8x128xf32>
    %215 = arith.mulf %213, %214 : vector<8x128xf32>
    %216 = vector.broadcast %211 : vector<8x1xf32> to vector<8x128xf32>
    %217 = arith.mulf %216, %215 : vector<8x128xf32>
    %c3_108 = arith.constant 3 : index
    %c0_109 = arith.constant 0 : index
    %c0_110 = arith.constant 0 : index
    %218 = vector.load %arg8[%c3_108, %c0_109, %c0_110] : memref<4x8x1xf32, #tpu.memory_space<vmem>>, vector<1x8x1xf32>
    %219 = vector.shape_cast %218 : vector<1x8x1xf32> to vector<8x1xf32>
    %220 = vector.broadcast %219 : vector<8x1xf32> to vector<8x128xf32>
    %221 = arith.addf %217, %220 : vector<8x128xf32>
    %c0_111 = arith.constant 0 : index
    %c0_112 = arith.constant 0 : index
    %222 = vector.load %arg9[%c0_111, %c0_112] : memref<8x256xf32, #tpu.memory_space<vmem>>, vector<8x256xf32>
    %223 = arith.negf %222 : vector<8x256xf32>
    %224 = math.exp %223 : vector<8x256xf32>
    %cst_113 = arith.constant 1.000000e+00 : f32
    %225 = vector.broadcast %cst_113 : f32 to vector<8x256xf32>
    %226 = arith.addf %225, %224 : vector<8x256xf32>
    %227 = arith.divf %225, %226 : vector<8x256xf32>
    %228 = arith.mulf %222, %227 : vector<8x256xf32>
    %c0_114 = arith.constant 0 : index
    %c0_115 = arith.constant 0 : index
    %229 = vector.load %arg10[%c0_114, %c0_115] : memref<8x256xf32, #tpu.memory_space<vmem>>, vector<8x256xf32>
    %cst_116 = arith.constant dense<0.000000e+00> : vector<8x8xf32>
    %230 = tpu.matmul %229, %228, %cst_116 {dimension_numbers = #tpu.dot_dimension_numbers<[1], [1], [0], [0], [0, 0, 1, 0], [], []>, precision = #tpu.contract_precision<fp32>} : vector<8x256xf32>, vector<8x256xf32>, vector<8x8xf32> -> vector<8x8xf32>
    %c0_117 = arith.constant 0 : index
    %c0_118 = arith.constant 0 : index
    %231 = vector.load %arg11[%c0_117, %c0_118] : memref<8x1xf32, #tpu.memory_space<vmem>>, vector<8x1xf32>
    %232 = vector.broadcast %231 : vector<8x1xf32> to vector<8x8xf32>
    %233 = arith.addf %230, %232 : vector<8x8xf32>
    %cst_119 = arith.constant dense<0.000000e+00> : vector<8x128xf32>
    %234 = tpu.matmul %233, %5, %cst_119 {dimension_numbers = #tpu.dot_dimension_numbers<[1], [0], [0], [1], [0, 0, 1, 1], [], []>, precision = #tpu.contract_precision<fp32>} : vector<8x8xf32>, vector<8x128xf32>, vector<8x128xf32> -> vector<8x128xf32>
    %235 = arith.addf %221, %234 : vector<8x128xf32>
    %236 = vector.broadcast %3 : vector<1x128xf32> to vector<8x128xf32>
    %237 = arith.mulf %235, %236 : vector<8x128xf32>
    %c0_120 = arith.constant 0 : index
    %c0_121 = arith.constant 0 : index
    %238 = vector.load %arg12[%c0_120, %c0_121] : memref<8x128xf32, #tpu.memory_space<vmem>>, vector<8x128xf32>
    tpu.vector_store %arg12[%c0_120, %c0_121], %237 {strides = array<i32>} : memref<8x128xf32, #tpu.memory_space<vmem>>, vector<8x128xf32>,
    return
  }
}

</mosaic_0001>

<llo_original>
// kernel: graph_up_forward.1
$region0: #{graph_up_forward.1}
  #allocation0 [shape = 'u32[]', space=smem, size = 0x4, offset = 0x4, fixed_abs, tag = 'smem constant byte address 0x4 - core index']
  #allocation1 [shape = 'u32[72,128]{1,0:T(1,128)}', space=vmem, size = 0x9000, scoped, tag = 'internal scratch']
  %s0 = inlined_call_operand.vmem [shape: f32[8,128], index: 0, kind: input, shape index: {}]
  %s1 = inlined_call_operand.vmem [shape: f32[8,128], index: 1, kind: input, shape index: {}]
  %s2 = inlined_call_operand.vmem [shape: f32[8,128], index: 2, kind: input, shape index: {}]
  %s3 = inlined_call_operand.vmem [shape: f32[8,128], index: 3, kind: input, shape index: {}]
  %s4 = inlined_call_operand.vmem [shape: f32[128,8], index: 4, kind: input, shape index: {}]
  %s5 = inlined_call_operand.vmem [shape: f32[8,128], index: 5, kind: input, shape index: {}]
  %s6 = inlined_call_operand.vmem [shape: f32[4,8,24], index: 6, kind: input, shape index: {}]
  %s7 = inlined_call_operand.vmem [shape: f32[4,8,1], index: 7, kind: input, shape index: {}]
  %s8 = inlined_call_operand.vmem [shape: f32[4,8,1], index: 8, kind: input, shape index: {}]
  %s9 = inlined_call_operand.vmem [shape: f32[8,256], index: 9, kind: input, shape index: {}]
  %s10 = inlined_call_operand.vmem [shape: f32[8,256], index: 10, kind: input, shape index: {}]
  %s11 = inlined_call_operand.vmem [shape: f32[8,1], index: 11, kind: input, shape index: {}]
  %s12 = inlined_call_operand.vmem [shape: f32[8,128], index: 12, kind: output, shape index: {}]
  %s13 = sld [smem:[#allocation0]]
  $region58: #{graph_up_forward.1} parent=0
    _
  %s15 = ssub.s32 1, %s13
  %s16 = scalar_select 0, %s15, %s13
  // Predicated region
  $region2: #{graph_up_forward.1} parent=0 // pred_check
    _
  $region3: #{graph_up_forward.1} parent=0 // pred_check_branch
    %18 = sbr.rel (0) target = $region5
  $region4: #{graph_up_forward.1} parent=0 // pred_region
    _
  $region5: #{graph_up_forward.1} parent=0 // pred_fallthru
    _
  // Predicated region
  $region6: #{graph_up_forward.1} parent=0 // pred_check
    _
  $region7: #{graph_up_forward.1} parent=0 // pred_check_branch
    %20 = sbr.rel (0) target = $region9
  $region8: #{graph_up_forward.1} parent=0 // pred_region
    _
  $region9: #{graph_up_forward.1} parent=0 // pred_fallthru
    _
  // Predicated region
  $region10: #{graph_up_forward.1} parent=0 // pred_check
    _
  $region11: #{graph_up_forward.1} parent=0 // pred_check_branch
    %22 = sbr.rel (0) target = $region13
  $region12: #{graph_up_forward.1} parent=0 // pred_region
    _
  $region13: #{graph_up_forward.1} parent=0 // pred_fallthru
    _
  // Predicated region
  $region14: #{graph_up_forward.1} parent=0 // pred_check
    _
  $region15: #{graph_up_forward.1} parent=0 // pred_check_branch
    %24 = sbr.rel (0) target = $region17
  $region16: #{graph_up_forward.1} parent=0 // pred_region
    _
  $region17: #{graph_up_forward.1} parent=0 // pred_fallthru
    _
  // Predicated region
  $region18: #{graph_up_forward.1} parent=0 // pred_check
    _
  $region19: #{graph_up_forward.1} parent=0 // pred_check_branch
    %26 = sbr.rel (0) target = $region21
  $region20: #{graph_up_forward.1} parent=0 // pred_region
    _
  $region21: #{graph_up_forward.1} parent=0 // pred_fallthru
    _
  // Predicated region
  $region22: #{graph_up_forward.1} parent=0 // pred_check
    _
  $region23: #{graph_up_forward.1} parent=0 // pred_check_branch
    %28 = sbr.rel (0) target = $region25
  $region24: #{graph_up_forward.1} parent=0 // pred_region
    _
  $region25: #{graph_up_forward.1} parent=0 // pred_fallthru
    _
  // Predicated region
  $region26: #{graph_up_forward.1} parent=0 // pred_check
    _
  $region27: #{graph_up_forward.1} parent=0 // pred_check_branch
    %30 = sbr.rel (0) target = $region29
  $region28: #{graph_up_forward.1} parent=0 // pred_region
    _
  $region29: #{graph_up_forward.1} parent=0 // pred_fallthru
    _
  // Predicated region
  $region30: #{graph_up_forward.1} parent=0 // pred_check
    _
  $region31: #{graph_up_forward.1} parent=0 // pred_check_branch
    %32 = sbr.rel (0) target = $region33
  $region32: #{graph_up_forward.1} parent=0 // pred_region
    _
  $region33: #{graph_up_forward.1} parent=0 // pred_fallthru
    _
  // Predicated region
  $region34: #{graph_up_forward.1} parent=0 // pred_check
    _
  $region35: #{graph_up_forward.1} parent=0 // pred_check_branch
    %34 = sbr.rel (0) target = $region37
  $region36: #{graph_up_forward.1} parent=0 // pred_region
    _
  $region37: #{graph_up_forward.1} parent=0 // pred_fallthru
    _
  // Predicated region
  $region38: #{graph_up_forward.1} parent=0 // pred_check
    _
  $region39: #{graph_up_forward.1} parent=0 // pred_check_branch
    %36 = sbr.rel (0) target = $region41
  $region40: #{graph_up_forward.1} parent=0 // pred_region
    _
  $region41: #{graph_up_forward.1} parent=0 // pred_fallthru
    _
  // Predicated region
  $region42: #{graph_up_forward.1} parent=0 // pred_check
    _
  $region43: #{graph_up_forward.1} parent=0 // pred_check_branch
    %38 = sbr.rel (0) target = $region45
  $region44: #{graph_up_forward.1} parent=0 // pred_region
    _
  $region45: #{graph_up_forward.1} parent=0 // pred_fallthru
    _
  // Predicated region
  $region46: #{graph_up_forward.1} parent=0 // pred_check
    _
  $region47: #{graph_up_forward.1} parent=0 // pred_check_branch
    %40 = sbr.rel (0) target = $region49
  $region48: #{graph_up_forward.1} parent=0 // pred_region
    _
  $region49: #{graph_up_forward.1} parent=0 // pred_fallthru
    _
  %v41 = vld [vmem:[%s3] sm:$0x1]
  %v42 = vld [vmem:[%s3 + $0x1] sm:$0x1]
  %v43 = vld [vmem:[%s3 + $0x2] sm:$0x1]
  %v44 = vld [vmem:[%s3 + $0x3] sm:$0x1]
  %v45 = vld [vmem:[%s4] sm:$0xff]
  %v46 = vld [vmem:[%s4 + $0x8] sm:$0xff]
  %v47 = vld [vmem:[%s4 + $0x10] sm:$0xff]
  %v48 = vld [vmem:[%s4 + $0x18] sm:$0xff]
  %v49 = vld [vmem:[%s4 + $0x20] sm:$0xff]
  %v50 = vld [vmem:[%s4 + $0x28] sm:$0xff]
  %v51 = vld [vmem:[%s4 + $0x30] sm:$0xff]
  %v52 = vld [vmem:[%s4 + $0x38] sm:$0xff]
  %v53 = vld [vmem:[%s4 + $0x40] sm:$0xff]
  %v54 = vld [vmem:[%s4 + $0x48] sm:$0xff]
  %v55 = vld [vmem:[%s4 + $0x50] sm:$0xff]
  %v56 = vld [vmem:[%s4 + $0x58] sm:$0xff]
  %v57 = vld [vmem:[%s4 + $0x60] sm:$0xff]
  %v58 = vld [vmem:[%s4 + $0x68] sm:$0xff]
  %v59 = vld [vmem:[%s4 + $0x70] sm:$0xff]
  %v60 = vld [vmem:[%s4 + $0x78] sm:$0xff]
  %v61 = vld [vmem:[%s5] sm:$0xff]
  %v62 = vld [vmem:[%s1] sm:$0xff]
  %v63 = vld [vmem:[%s0] sm:$0xff]
  %v64 = vadd.f32 %v63, %v62
  %v65 = vld [vmem:[%s2] sm:$0xff]
  %v66 = vsub.f32 %v65, %v62
  %v67 = vperm.slane %v41, 0
  %v68 = vmul.f32 %v67, %v66
  %v69 = vadd.f32 %v64, %v68
  %70 = vrot.lane.b32.xlu0 %v69, 1
  %v71 = vpop.permute.xlu0 %70
  %v72 = vperm.slane %v42, 0
  %v73 = vmul.f32 %v71, %v72
  %74 = vrot.lane.b32.xlu0 %v69, 127
  %v75 = vpop.permute.xlu0 %74
  %v76 = vperm.slane %v43, 0
  %v77 = vmul.f32 %v75, %v76
  %v78 = vld [vmem:[%s6] sm:$0xff]
  %vm79 = vcmask 195584
  %v81 = vsel %vm79, %v78, 0
  %83 = vmatpush.msra.mxu0 0.0
  %84 = vmatpush.msra.mxu0 0.0
  %85 = vmatpush.msra.mxu0 0.0
  %86 = vmatpush.msra.mxu0 0.0
  %87 = vmatpush.msra.mxu0 0.0
  %88 = vmatpush.msra.mxu0 0.0
  %89 = vmatpush.msra.mxu0 0.0
  %90 = vmatpush.msra.mxu0 0.0
  %91 = vmatpush.msra.mxu0 0.0
  %92 = vmatpush.msra.mxu0 0.0
  %93 = vmatpush.msra.mxu0 0.0
  %94 = vmatpush.msra.mxu0 0.0
  %95 = vmatpush.msra.mxu0 0.0
  %v96 = vand.u32 %v77, 4294901760
  %97 = vmatpush.msra.mxu0 %v96
  %v98 = vand.u32 %v69, 4294901760
  %99 = vmatpush.msra.mxu0 %v98
  %v100 = vand.u32 %v73, 4294901760
  %101 = vmatpush.msra.mxu0 %v100
  %v102 = vand.u32 %v81, 4294901760
  %v103 = vsub.f32 %v81, %v102
  %v104 = vand.u32 %v103, 4294901760
  %v105 = vsub.f32 %v103, %v104
  %v106 = vand.u32 %v105, 4294901760
  %107 = vmatmul.f32.gmra.mxu0 %v106
  %v108 = vpop.f32.mrf.mxu0
  %v109 = vadd.f32 0.0, %v108
  %110 = vdwg.mxu0
  %111 = vmatpush.msra.mxu0 0.0
  %112 = vmatpush.msra.mxu0 0.0
  %113 = vmatpush.msra.mxu0 0.0
  %114 = vmatpush.msra.mxu0 0.0
  %115 = vmatpush.msra.mxu0 0.0
  %116 = vmatpush.msra.mxu0 0.0
  %117 = vmatpush.msra.mxu0 0.0
  %118 = vmatpush.msra.mxu0 0.0
  %119 = vmatpush.msra.mxu0 0.0
  %120 = vmatpush.msra.mxu0 0.0
  %121 = vmatpush.msra.mxu0 0.0
  %122 = vmatpush.msra.mxu0 0.0
  %123 = vmatpush.msra.mxu0 0.0
  %v124 = vand.u32 %v77, 4294901760
  %v125 = vsub.f32 %v77, %v124
  %v126 = vand.u32 %v125, 4294901760
  %v127 = vsub.f32 %v125, %v126
  %v128 = vand.u32 %v127, 4294901760
  %129 = vmatpush.msra.mxu0 %v128
  %v130 = vand.u32 %v69, 4294901760
  %v131 = vsub.f32 %v69, %v130
  %v132 = vand.u32 %v131, 4294901760
  %v133 = vsub.f32 %v131, %v132
  %v134 = vand.u32 %v133, 4294901760
  %135 = vmatpush.msra.mxu0 %v134
  %v136 = vand.u32 %v73, 4294901760
  %v137 = vsub.f32 %v73, %v136
  %v138 = vand.u32 %v137, 4294901760
  %v139 = vsub.f32 %v137, %v138
  %v140 = vand.u32 %v139, 4294901760
  %141 = vmatpush.msra.mxu0 %v140
  %v142 = vand.u32 %v81, 4294901760
  %143 = vmatmul.f32.gmra.mxu0 %v142
  %v144 = vpop.f32.mrf.mxu0
  %v145 = vadd.f32 %v109, %v144
  %146 = vdwg.mxu0
  %147 = vmatpush.msra.mxu0 0.0
  %148 = vmatpush.msra.mxu0 0.0
  %149 = vmatpush.msra.mxu0 0.0
  %150 = vmatpush.msra.mxu0 0.0
  %151 = vmatpush.msra.mxu0 0.0
  %152 = vmatpush.msra.mxu0 0.0
  %153 = vmatpush.msra.mxu0 0.0
  %154 = vmatpush.msra.mxu0 0.0
  %155 = vmatpush.msra.mxu0 0.0
  %156 = vmatpush.msra.mxu0 0.0
  %157 = vmatpush.msra.mxu0 0.0
  %158 = vmatpush.msra.mxu0 0.0
  %159 = vmatpush.msra.mxu0 0.0
  %v160 = vand.u32 %v77, 4294901760
  %v161 = vsub.f32 %v77, %v160
  %162 = vmatpush.msra.mxu0 %v161
  %v163 = vand.u32 %v69, 4294901760
  %v164 = vsub.f32 %v69, %v163
  %165 = vmatpush.msra.mxu0 %v164
  %v166 = vand.u32 %v73, 4294901760
  %v167 = vsub.f32 %v73, %v166
  %168 = vmatpush.msra.mxu0 %v167
  %v169 = vand.u32 %v81, 4294901760
  %v170 = vsub.f32 %v81, %v169
  %171 = vmatmul.f32.gmra.mxu0 %v170
  %v172 = vpop.f32.mrf.mxu0
  %v173 = vadd.f32 %v145, %v172
  %174 = vdwg.mxu0
  %175 = vmatpush.msra.mxu0 0.0
  %176 = vmatpush.msra.mxu0 0.0
  %177 = vmatpush.msra.mxu0 0.0
  %178 = vmatpush.msra.mxu0 0.0
  %179 = vmatpush.msra.mxu0 0.0
  %180 = vmatpush.msra.mxu0 0.0
  %181 = vmatpush.msra.mxu0 0.0
  %182 = vmatpush.msra.mxu0 0.0
  %183 = vmatpush.msra.mxu0 0.0
  %184 = vmatpush.msra.mxu0 0.0
  %185 = vmatpush.msra.mxu0 0.0
  %186 = vmatpush.msra.mxu0 0.0
  %187 = vmatpush.msra.mxu0 0.0
  %v188 = vand.u32 %v77, 4294901760
  %189 = vmatpush.msra.mxu0 %v188
  %v190 = vand.u32 %v69, 4294901760
  %191 = vmatpush.msra.mxu0 %v190
  %v192 = vand.u32 %v73, 4294901760
  %193 = vmatpush.msra.mxu0 %v192
  %v194 = vand.u32 %v81, 4294901760
  %v195 = vsub.f32 %v81, %v194
  %v196 = vand.u32 %v195, 4294901760
  %197 = vmatmul.f32.gmra.mxu0 %v196
  %v198 = vpop.f32.mrf.mxu0
  %v199 = vadd.f32 %v173, %v198
  %200 = vdwg.mxu0
  %201 = vmatpush.msra.mxu0 0.0
  %202 = vmatpush.msra.mxu0 0.0
  %203 = vmatpush.msra.mxu0 0.0
  %204 = vmatpush.msra.mxu0 0.0
  %205 = vmatpush.msra.mxu0 0.0
  %206 = vmatpush.msra.mxu0 0.0
  %207 = vmatpush.msra.mxu0 0.0
  %208 = vmatpush.msra.mxu0 0.0
  %209 = vmatpush.msra.mxu0 0.0
  %210 = vmatpush.msra.mxu0 0.0
  %211 = vmatpush.msra.mxu0 0.0
  %212 = vmatpush.msra.mxu0 0.0
  %213 = vmatpush.msra.mxu0 0.0
  %v214 = vand.u32 %v77, 4294901760
  %v215 = vsub.f32 %v77, %v214
  %v216 = vand.u32 %v215, 4294901760
  %217 = vmatpush.msra.mxu0 %v216
  %v218 = vand.u32 %v69, 4294901760
  %v219 = vsub.f32 %v69, %v218
  %v220 = vand.u32 %v219, 4294901760
  %221 = vmatpush.msra.mxu0 %v220
  %v222 = vand.u32 %v73, 4294901760
  %v223 = vsub.f32 %v73, %v222
  %v224 = vand.u32 %v223, 4294901760
  %225 = vmatpush.msra.mxu0 %v224
  %v226 = vand.u32 %v81, 4294901760
  %227 = vmatmul.f32.gmra.mxu0 %v226
  %v228 = vpop.f32.mrf.mxu0
  %v229 = vadd.f32 %v199, %v228
  %230 = vdwg.mxu0
  %231 = vmatpush.msra.mxu0 0.0
  %232 = vmatpush.msra.mxu0 0.0
  %233 = vmatpush.msra.mxu0 0.0
  %234 = vmatpush.msra.mxu0 0.0
  %235 = vmatpush.msra.mxu0 0.0
  %236 = vmatpush.msra.mxu0 0.0
  %237 = vmatpush.msra.mxu0 0.0
  %238 = vmatpush.msra.mxu0 0.0
  %239 = vmatpush.msra.mxu0 0.0
  %240 = vmatpush.msra.mxu0 0.0
  %241 = vmatpush.msra.mxu0 0.0
  %242 = vmatpush.msra.mxu0 0.0
  %243 = vmatpush.msra.mxu0 0.0
  %v244 = vand.u32 %v77, 4294901760
  %245 = vmatpush.msra.mxu0 %v244
  %v246 = vand.u32 %v69, 4294901760
  %247 = vmatpush.msra.mxu0 %v246
  %v248 = vand.u32 %v73, 4294901760
  %249 = vmatpush.msra.mxu0 %v248
  %v250 = vand.u32 %v81, 4294901760
  %251 = vmatmul.f32.gmra.mxu0 %v250
  %v252 = vpop.f32.mrf.mxu0
  %v253 = vadd.f32 %v229, %v252
  %254 = vdwg.mxu0
  %v255 = vand.u32 %v60, 4294901760
  %256 = vmatpush.msra.mxu0 %v255
  %v257 = vand.u32 %v59, 4294901760
  %258 = vmatpush.msra.mxu0 %v257
  %v259 = vand.u32 %v58, 4294901760
  %260 = vmatpush.msra.mxu0 %v259
  %v261 = vand.u32 %v57, 4294901760
  %262 = vmatpush.msra.mxu0 %v261
  %v263 = vand.u32 %v56, 4294901760
  %264 = vmatpush.msra.mxu0 %v263
  %v265 = vand.u32 %v55, 4294901760
  %266 = vmatpush.msra.mxu0 %v265
  %v267 = vand.u32 %v54, 4294901760
  %268 = vmatpush.msra.mxu0 %v267
  %v269 = vand.u32 %v53, 4294901760
  %270 = vmatpush.msra.mxu0 %v269
  %v271 = vand.u32 %v52, 4294901760
  %272 = vmatpush.msra.mxu0 %v271
  %v273 = vand.u32 %v51, 4294901760
  %274 = vmatpush.msra.mxu0 %v273
  %v275 = vand.u32 %v50, 4294901760
  %276 = vmatpush.msra.mxu0 %v275
  %v277 = vand.u32 %v49, 4294901760
  %278 = vmatpush.msra.mxu0 %v277
  %v279 = vand.u32 %v48, 4294901760
  %280 = vmatpush.msra.mxu0 %v279
  %v281 = vand.u32 %v47, 4294901760
  %282 = vmatpush.msra.mxu0 %v281
  %v283 = vand.u32 %v46, 4294901760
  %284 = vmatpush.msra.mxu0 %v283
  %v285 = vand.u32 %v45, 4294901760
  %286 = vmatpush.msra.mxu0 %v285
  %v287 = vand.u32 %v253, 4294901760
  %v288 = vsub.f32 %v253, %v287
  %v289 = vand.u32 %v288, 4294901760
  %v290 = vsub.f32 %v288, %v289
  %v291 = vand.u32 %v290, 4294901760
  %292 = vmatmul.f32.gmra.mxu0 %v291
  %v293 = vpop.f32.mrf.mxu0
  %v294 = vadd.f32 0.0, %v293
  %295 = vdwg.mxu0
  %v296 = vand.u32 %v60, 4294901760
  %v297 = vsub.f32 %v60, %v296
  %v298 = vand.u32 %v297, 4294901760
  %v299 = vsub.f32 %v297, %v298
  %v300 = vand.u32 %v299, 4294901760
  %301 = vmatpush.msra.mxu0 %v300
  %v302 = vand.u32 %v59, 4294901760
  %v303 = vsub.f32 %v59, %v302
  %v304 = vand.u32 %v303, 4294901760
  %v305 = vsub.f32 %v303, %v304
  %v306 = vand.u32 %v305, 4294901760
  %307 = vmatpush.msra.mxu0 %v306
  %v308 = vand.u32 %v58, 4294901760
  %v309 = vsub.f32 %v58, %v308
  %v310 = vand.u32 %v309, 4294901760
  %v311 = vsub.f32 %v309, %v310
  %v312 = vand.u32 %v311, 4294901760
  %313 = vmatpush.msra.mxu0 %v312
  %v314 = vand.u32 %v57, 4294901760
  %v315 = vsub.f32 %v57, %v314
  %v316 = vand.u32 %v315, 4294901760
  %v317 = vsub.f32 %v315, %v316
  %v318 = vand.u32 %v317, 4294901760
  %319 = vmatpush.msra.mxu0 %v318
  %v320 = vand.u32 %v56, 4294901760
  %v321 = vsub.f32 %v56, %v320
  %v322 = vand.u32 %v321, 4294901760
  %v323 = vsub.f32 %v321, %v322
  %v324 = vand.u32 %v323, 4294901760
  %325 = vmatpush.msra.mxu0 %v324
  %v326 = vand.u32 %v55, 4294901760
  %v327 = vsub.f32 %v55, %v326
  %v328 = vand.u32 %v327, 4294901760
  %v329 = vsub.f32 %v327, %v328
  %v330 = vand.u32 %v329, 4294901760
  %331 = vmatpush.msra.mxu0 %v330
  %v332 = vand.u32 %v54, 4294901760
  %v333 = vsub.f32 %v54, %v332
  %v334 = vand.u32 %v333, 4294901760
  %v335 = vsub.f32 %v333, %v334
  %v336 = vand.u32 %v335, 4294901760
  %337 = vmatpush.msra.mxu0 %v336
  %v338 = vand.u32 %v53, 4294901760
  %v339 = vsub.f32 %v53, %v338
  %v340 = vand.u32 %v339, 4294901760
  %v341 = vsub.f32 %v339, %v340
  %v342 = vand.u32 %v341, 4294901760
  %343 = vmatpush.msra.mxu0 %v342
  %v344 = vand.u32 %v52, 4294901760
  %v345 = vsub.f32 %v52, %v344
  %v346 = vand.u32 %v345, 4294901760
  %v347 = vsub.f32 %v345, %v346
  %v348 = vand.u32 %v347, 4294901760
  %349 = vmatpush.msra.mxu0 %v348
  %v350 = vand.u32 %v51, 4294901760
  %v351 = vsub.f32 %v51, %v350
  %v352 = vand.u32 %v351, 4294901760
  %v353 = vsub.f32 %v351, %v352
  %v354 = vand.u32 %v353, 4294901760
  %355 = vmatpush.msra.mxu0 %v354
  %v356 = vand.u32 %v50, 4294901760
  %v357 = vsub.f32 %v50, %v356
  %v358 = vand.u32 %v357, 4294901760
  %v359 = vsub.f32 %v357, %v358
  %v360 = vand.u32 %v359, 4294901760
  %361 = vmatpush.msra.mxu0 %v360
  %v362 = vand.u32 %v49, 4294901760
  %v363 = vsub.f32 %v49, %v362
  %v364 = vand.u32 %v363, 4294901760
  %v365 = vsub.f32 %v363, %v364
  %v366 = vand.u32 %v365, 4294901760
  %367 = vmatpush.msra.mxu0 %v366
  %v368 = vand.u32 %v48, 4294901760
  %v369 = vsub.f32 %v48, %v368
  %v370 = vand.u32 %v369, 4294901760
  %v371 = vsub.f32 %v369, %v370
  %v372 = vand.u32 %v371, 4294901760
  %373 = vmatpush.msra.mxu0 %v372
  %v374 = vand.u32 %v47, 4294901760
  %v375 = vsub.f32 %v47, %v374
  %v376 = vand.u32 %v375, 4294901760
  %v377 = vsub.f32 %v375, %v376
  %v378 = vand.u32 %v377, 4294901760
  %379 = vmatpush.msra.mxu0 %v378
  %v380 = vand.u32 %v46, 4294901760
  %v381 = vsub.f32 %v46, %v380
  %v382 = vand.u32 %v381, 4294901760
  %v383 = vsub.f32 %v381, %v382
  %v384 = vand.u32 %v383, 4294901760
  %385 = vmatpush.msra.mxu0 %v384
  %v386 = vand.u32 %v45, 4294901760
  %v387 = vsub.f32 %v45, %v386
  %v388 = vand.u32 %v387, 4294901760
  %v389 = vsub.f32 %v387, %v388
  %v390 = vand.u32 %v389, 4294901760
  %391 = vmatpush.msra.mxu0 %v390
  %v392 = vand.u32 %v253, 4294901760
  %393 = vmatmul.f32.gmra.mxu0 %v392
  %v394 = vpop.f32.mrf.mxu0
  %v395 = vadd.f32 %v294, %v394
  %396 = vdwg.mxu0
  %v397 = vand.u32 %v60, 4294901760
  %v398 = vsub.f32 %v60, %v397
  %399 = vmatpush.msra.mxu0 %v398
  %v400 = vand.u32 %v59, 4294901760
  %v401 = vsub.f32 %v59, %v400
  %402 = vmatpush.msra.mxu0 %v401
  %v403 = vand.u32 %v58, 4294901760
  %v404 = vsub.f32 %v58, %v403
  %405 = vmatpush.msra.mxu0 %v404
  %v406 = vand.u32 %v57, 4294901760
  %v407 = vsub.f32 %v57, %v406
  %408 = vmatpush.msra.mxu0 %v407
  %v409 = vand.u32 %v56, 4294901760
  %v410 = vsub.f32 %v56, %v409
  %411 = vmatpush.msra.mxu0 %v410
  %v412 = vand.u32 %v55, 4294901760
  %v413 = vsub.f32 %v55, %v412
  %414 = vmatpush.msra.mxu0 %v413
  %v415 = vand.u32 %v54, 4294901760
  %v416 = vsub.f32 %v54, %v415
  %417 = vmatpush.msra.mxu0 %v416
  %v418 = vand.u32 %v53, 4294901760
  %v419 = vsub.f32 %v53, %v418
  %420 = vmatpush.msra.mxu0 %v419
  %v421 = vand.u32 %v52, 4294901760
  %v422 = vsub.f32 %v52, %v421
  %423 = vmatpush.msra.mxu0 %v422
  %v424 = vand.u32 %v51, 4294901760
  %v425 = vsub.f32 %v51, %v424
  %426 = vmatpush.msra.mxu0 %v425
  %v427 = vand.u32 %v50, 4294901760
  %v428 = vsub.f32 %v50, %v427
  %429 = vmatpush.msra.mxu0 %v428
  %v430 = vand.u32 %v49, 4294901760
  %v431 = vsub.f32 %v49, %v430
  %432 = vmatpush.msra.mxu0 %v431
  %v433 = vand.u32 %v48, 4294901760
  %v434 = vsub.f32 %v48, %v433
  %435 = vmatpush.msra.mxu0 %v434
  %v436 = vand.u32 %v47, 4294901760
  %v437 = vsub.f32 %v47, %v436
  %438 = vmatpush.msra.mxu0 %v437
  %v439 = vand.u32 %v46, 4294901760
  %v440 = vsub.f32 %v46, %v439
  %441 = vmatpush.msra.mxu0 %v440
  %v442 = vand.u32 %v45, 4294901760
  %v443 = vsub.f32 %v45, %v442
  %444 = vmatpush.msra.mxu0 %v443
  %v445 = vand.u32 %v253, 4294901760
  %v446 = vsub.f32 %v253, %v445
  %447 = vmatmul.f32.gmra.mxu0 %v446
  %v448 = vpop.f32.mrf.mxu0
  %v449 = vadd.f32 %v395, %v448
  %450 = vdwg.mxu0
  %v451 = vand.u32 %v60, 4294901760
  %452 = vmatpush.msra.mxu0 %v451
  %v453 = vand.u32 %v59, 4294901760
  %454 = vmatpush.msra.mxu0 %v453
  %v455 = vand.u32 %v58, 4294901760
  %456 = vmatpush.msra.mxu0 %v455
  %v457 = vand.u32 %v57, 4294901760
  %458 = vmatpush.msra.mxu0 %v457
  %v459 = vand.u32 %v56, 4294901760
  %460 = vmatpush.msra.mxu0 %v459
  %v461 = vand.u32 %v55, 4294901760
  %462 = vmatpush.msra.mxu0 %v461
  %v463 = vand.u32 %v54, 4294901760
  %464 = vmatpush.msra.mxu0 %v463
  %v465 = vand.u32 %v53, 4294901760
  %466 = vmatpush.msra.mxu0 %v465
  %v467 = vand.u32 %v52, 4294901760
  %468 = vmatpush.msra.mxu0 %v467
  %v469 = vand.u32 %v51, 4294901760
  %470 = vmatpush.msra.mxu0 %v469
  %v471 = vand.u32 %v50, 4294901760
  %472 = vmatpush.msra.mxu0 %v471
  %v473 = vand.u32 %v49, 4294901760
  %474 = vmatpush.msra.mxu0 %v473
  %v475 = vand.u32 %v48, 4294901760
  %476 = vmatpush.msra.mxu0 %v475
  %v477 = vand.u32 %v47, 4294901760
  %478 = vmatpush.msra.mxu0 %v477
  %v479 = vand.u32 %v46, 4294901760
  %480 = vmatpush.msra.mxu0 %v479
  %v481 = vand.u32 %v45, 4294901760
  %482 = vmatpush.msra.mxu0 %v481
  %v483 = vand.u32 %v253, 4294901760
  %v484 = vsub.f32 %v253, %v483
  %v485 = vand.u32 %v484, 4294901760
  %486 = vmatmul.f32.gmra.mxu0 %v485
  %v487 = vpop.f32.mrf.mxu0
  %v488 = vadd.f32 %v449, %v487
  %489 = vdwg.mxu0
  %v490 = vand.u32 %v60, 4294901760
  %v491 = vsub.f32 %v60, %v490
  %v492 = vand.u32 %v491, 4294901760
  %493 = vmatpush.msra.mxu0 %v492
  %v494 = vand.u32 %v59, 4294901760
  %v495 = vsub.f32 %v59, %v494
  %v496 = vand.u32 %v495, 4294901760
  %497 = vmatpush.msra.mxu0 %v496
  %v498 = vand.u32 %v58, 4294901760
  %v499 = vsub.f32 %v58, %v498
  %v500 = vand.u32 %v499, 4294901760
  %501 = vmatpush.msra.mxu0 %v500
  %v502 = vand.u32 %v57, 4294901760
  %v503 = vsub.f32 %v57, %v502
  %v504 = vand.u32 %v503, 4294901760
  %505 = vmatpush.msra.mxu0 %v504
  %v506 = vand.u32 %v56, 4294901760
  %v507 = vsub.f32 %v56, %v506
  %v508 = vand.u32 %v507, 4294901760
  %509 = vmatpush.msra.mxu0 %v508
  %v510 = vand.u32 %v55, 4294901760
  %v511 = vsub.f32 %v55, %v510
  %v512 = vand.u32 %v511, 4294901760
  %513 = vmatpush.msra.mxu0 %v512
  %v514 = vand.u32 %v54, 4294901760
  %v515 = vsub.f32 %v54, %v514
  %v516 = vand.u32 %v515, 4294901760
  %517 = vmatpush.msra.mxu0 %v516
  %v518 = vand.u32 %v53, 4294901760
  %v519 = vsub.f32 %v53, %v518
  %v520 = vand.u32 %v519, 4294901760
  %521 = vmatpush.msra.mxu0 %v520
  %v522 = vand.u32 %v52, 4294901760
  %v523 = vsub.f32 %v52, %v522
  %v524 = vand.u32 %v523, 4294901760
  %525 = vmatpush.msra.mxu0 %v524
  %v526 = vand.u32 %v51, 4294901760
  %v527 = vsub.f32 %v51, %v526
  %v528 = vand.u32 %v527, 4294901760
  %529 = vmatpush.msra.mxu0 %v528
  %v530 = vand.u32 %v50, 4294901760
  %v531 = vsub.f32 %v50, %v530
  %v532 = vand.u32 %v531, 4294901760
  %533 = vmatpush.msra.mxu0 %v532
  %v534 = vand.u32 %v49, 4294901760
  %v535 = vsub.f32 %v49, %v534
  %v536 = vand.u32 %v535, 4294901760
  %537 = vmatpush.msra.mxu0 %v536
  %v538 = vand.u32 %v48, 4294901760
  %v539 = vsub.f32 %v48, %v538
  %v540 = vand.u32 %v539, 4294901760
  %541 = vmatpush.msra.mxu0 %v540
  %v542 = vand.u32 %v47, 4294901760
  %v543 = vsub.f32 %v47, %v542
  %v544 = vand.u32 %v543, 4294901760
  %545 = vmatpush.msra.mxu0 %v544
  %v546 = vand.u32 %v46, 4294901760
  %v547 = vsub.f32 %v46, %v546
  %v548 = vand.u32 %v547, 4294901760
  %549 = vmatpush.msra.mxu0 %v548
  %v550 = vand.u32 %v45, 4294901760
  %v551 = vsub.f32 %v45, %v550
  %v552 = vand.u32 %v551, 4294901760
  %553 = vmatpush.msra.mxu0 %v552
  %v554 = vand.u32 %v253, 4294901760
  %555 = vmatmul.f32.gmra.mxu0 %v554
  %v556 = vpop.f32.mrf.mxu0
  %v557 = vadd.f32 %v488, %v556
  %558 = vdwg.mxu0
  %v559 = vand.u32 %v60, 4294901760
  %560 = vmatpush.msra.mxu0 %v559
  %v561 = vand.u32 %v59, 4294901760
  %562 = vmatpush.msra.mxu0 %v561
  %v563 = vand.u32 %v58, 4294901760
  %564 = vmatpush.msra.mxu0 %v563
  %v565 = vand.u32 %v57, 4294901760
  %566 = vmatpush.msra.mxu0 %v565
  %v567 = vand.u32 %v56, 4294901760
  %568 = vmatpush.msra.mxu0 %v567
  %v569 = vand.u32 %v55, 4294901760
  %570 = vmatpush.msra.mxu0 %v569
  %v571 = vand.u32 %v54, 4294901760
  %572 = vmatpush.msra.mxu0 %v571
  %v573 = vand.u32 %v53, 4294901760
  %574 = vmatpush.msra.mxu0 %v573
  %v575 = vand.u32 %v52, 4294901760
  %576 = vmatpush.msra.mxu0 %v575
  %v577 = vand.u32 %v51, 4294901760
  %578 = vmatpush.msra.mxu0 %v577
  %v579 = vand.u32 %v50, 4294901760
  %580 = vmatpush.msra.mxu0 %v579
  %v581 = vand.u32 %v49, 4294901760
  %582 = vmatpush.msra.mxu0 %v581
  %v583 = vand.u32 %v48, 4294901760
  %584 = vmatpush.msra.mxu0 %v583
  %v585 = vand.u32 %v47, 4294901760
  %586 = vmatpush.msra.mxu0 %v585
  %v587 = vand.u32 %v46, 4294901760
  %588 = vmatpush.msra.mxu0 %v587
  %v589 = vand.u32 %v45, 4294901760
  %590 = vmatpush.msra.mxu0 %v589
  %v591 = vand.u32 %v253, 4294901760
  %592 = vmatmul.f32.gmra.mxu0 %v591
  %v593 = vpop.f32.mrf.mxu0
  %v594 = vadd.f32 %v557, %v593
  %595 = vdwg.mxu0
  %v596 = vmul.f32 %v253, %v253
  %v597 = vand.u32 %v60, 4294901760
  %598 = vmatpush.msra.mxu0 %v597
  %v599 = vand.u32 %v59, 4294901760
  %600 = vmatpush.msra.mxu0 %v599
  %v601 = vand.u32 %v58, 4294901760
  %602 = vmatpush.msra.mxu0 %v601
  %v603 = vand.u32 %v57, 4294901760
  %604 = vmatpush.msra.mxu0 %v603
  %v605 = vand.u32 %v56, 4294901760
  %606 = vmatpush.msra.mxu0 %v605
  %v607 = vand.u32 %v55, 4294901760
  %608 = vmatpush.msra.mxu0 %v607
  %v609 = vand.u32 %v54, 4294901760
  %610 = vmatpush.msra.mxu0 %v609
  %v611 = vand.u32 %v53, 4294901760
  %612 = vmatpush.msra.mxu0 %v611
  %v613 = vand.u32 %v52, 4294901760
  %614 = vmatpush.msra.mxu0 %v613
  %v615 = vand.u32 %v51, 4294901760
  %616 = vmatpush.msra.mxu0 %v615
  %v617 = vand.u32 %v50, 4294901760
  %618 = vmatpush.msra.mxu0 %v617
  %v619 = vand.u32 %v49, 4294901760
  %620 = vmatpush.msra.mxu0 %v619
  %v621 = vand.u32 %v48, 4294901760
  %622 = vmatpush.msra.mxu0 %v621
  %v623 = vand.u32 %v47, 4294901760
  %624 = vmatpush.msra.mxu0 %v623
  %v625 = vand.u32 %v46, 4294901760
  %626 = vmatpush.msra.mxu0 %v625
  %v627 = vand.u32 %v45, 4294901760
  %628 = vmatpush.msra.mxu0 %v627
  %v629 = vand.u32 %v596, 4294901760
  %v630 = vsub.f32 %v596, %v629
  %v631 = vand.u32 %v630, 4294901760
  %v632 = vsub.f32 %v630, %v631
  %v633 = vand.u32 %v632, 4294901760
  %634 = vmatmul.f32.gmra.mxu0 %v633
  %v635 = vpop.f32.mrf.mxu0
  %v636 = vadd.f32 0.0, %v635
  %637 = vdwg.mxu0
  %v638 = vand.u32 %v60, 4294901760
  %v639 = vsub.f32 %v60, %v638
  %v640 = vand.u32 %v639, 4294901760
  %v641 = vsub.f32 %v639, %v640
  %v642 = vand.u32 %v641, 4294901760
  %643 = vmatpush.msra.mxu0 %v642
  %v644 = vand.u32 %v59, 4294901760
  %v645 = vsub.f32 %v59, %v644
  %v646 = vand.u32 %v645, 4294901760
  %v647 = vsub.f32 %v645, %v646
  %v648 = vand.u32 %v647, 4294901760
  %649 = vmatpush.msra.mxu0 %v648
  %v650 = vand.u32 %v58, 4294901760
  %v651 = vsub.f32 %v58, %v650
  %v652 = vand.u32 %v651, 4294901760
  %v653 = vsub.f32 %v651, %v652
  %v654 = vand.u32 %v653, 4294901760
  %655 = vmatpush.msra.mxu0 %v654
  %v656 = vand.u32 %v57, 4294901760
  %v657 = vsub.f32 %v57, %v656
  %v658 = vand.u32 %v657, 4294901760
  %v659 = vsub.f32 %v657, %v658
  %v660 = vand.u32 %v659, 4294901760
  %661 = vmatpush.msra.mxu0 %v660
  %v662 = vand.u32 %v56, 4294901760
  %v663 = vsub.f32 %v56, %v662
  %v664 = vand.u32 %v663, 4294901760
  %v665 = vsub.f32 %v663, %v664
  %v666 = vand.u32 %v665, 4294901760
  %667 = vmatpush.msra.mxu0 %v666
  %v668 = vand.u32 %v55, 4294901760
  %v669 = vsub.f32 %v55, %v668
  %v670 = vand.u32 %v669, 4294901760
  %v671 = vsub.f32 %v669, %v670
  %v672 = vand.u32 %v671, 4294901760
  %673 = vmatpush.msra.mxu0 %v672
  %v674 = vand.u32 %v54, 4294901760
  %v675 = vsub.f32 %v54, %v674
  %v676 = vand.u32 %v675, 4294901760
  %v677 = vsub.f32 %v675, %v676
  %v678 = vand.u32 %v677, 4294901760
  %679 = vmatpush.msra.mxu0 %v678
  %v680 = vand.u32 %v53, 4294901760
  %v681 = vsub.f32 %v53, %v680
  %v682 = vand.u32 %v681, 4294901760
  %v683 = vsub.f32 %v681, %v682
  %v684 = vand.u32 %v683, 4294901760
  %685 = vmatpush.msra.mxu0 %v684
  %v686 = vand.u32 %v52, 4294901760
  %v687 = vsub.f32 %v52, %v686
  %v688 = vand.u32 %v687, 4294901760
  %v689 = vsub.f32 %v687, %v688
  %v690 = vand.u32 %v689, 4294901760
  %691 = vmatpush.msra.mxu0 %v690
  %v692 = vand.u32 %v51, 4294901760
  %v693 = vsub.f32 %v51, %v692
  %v694 = vand.u32 %v693, 4294901760
  %v695 = vsub.f32 %v693, %v694
  %v696 = vand.u32 %v695, 4294901760
  %697 = vmatpush.msra.mxu0 %v696
  %v698 = vand.u32 %v50, 4294901760
  %v699 = vsub.f32 %v50, %v698
  %v700 = vand.u32 %v699, 4294901760
  %v701 = vsub.f32 %v699, %v700
  %v702 = vand.u32 %v701, 4294901760
  %703 = vmatpush.msra.mxu0 %v702
  %v704 = vand.u32 %v49, 4294901760
  %v705 = vsub.f32 %v49, %v704
  %v706 = vand.u32 %v705, 4294901760
  %v707 = vsub.f32 %v705, %v706
  %v708 = vand.u32 %v707, 4294901760
  %709 = vmatpush.msra.mxu0 %v708
  %v710 = vand.u32 %v48, 4294901760
  %v711 = vsub.f32 %v48, %v710
  %v712 = vand.u32 %v711, 4294901760
  %v713 = vsub.f32 %v711, %v712
  %v714 = vand.u32 %v713, 4294901760
  %715 = vmatpush.msra.mxu0 %v714
  %v716 = vand.u32 %v47, 4294901760
  %v717 = vsub.f32 %v47, %v716
  %v718 = vand.u32 %v717, 4294901760
  %v719 = vsub.f32 %v717, %v718
  %v720 = vand.u32 %v719, 4294901760
  %721 = vmatpush.msra.mxu0 %v720
  %v722 = vand.u32 %v46, 4294901760
  %v723 = vsub.f32 %v46, %v722
  %v724 = vand.u32 %v723, 4294901760
  %v725 = vsub.f32 %v723, %v724
  %v726 = vand.u32 %v725, 4294901760
  %727 = vmatpush.msra.mxu0 %v726
  %v728 = vand.u32 %v45, 4294901760
  %v729 = vsub.f32 %v45, %v728
  %v730 = vand.u32 %v729, 4294901760
  %v731 = vsub.f32 %v729, %v730
  %v732 = vand.u32 %v731, 4294901760
  %733 = vmatpush.msra.mxu0 %v732
  %v734 = vand.u32 %v596, 4294901760
  %735 = vmatmul.f32.gmra.mxu0 %v734
  %v736 = vpop.f32.mrf.mxu0
  %v737 = vadd.f32 %v636, %v736
  %738 = vdwg.mxu0
  %v739 = vand.u32 %v60, 4294901760
  %v740 = vsub.f32 %v60, %v739
  %741 = vmatpush.msra.mxu0 %v740
  %v742 = vand.u32 %v59, 4294901760
  %v743 = vsub.f32 %v59, %v742
  %744 = vmatpush.msra.mxu0 %v743
  %v745 = vand.u32 %v58, 4294901760
  %v746 = vsub.f32 %v58, %v745
  %747 = vmatpush.msra.mxu0 %v746
  %v748 = vand.u32 %v57, 4294901760
  %v749 = vsub.f32 %v57, %v748
  %750 = vmatpush.msra.mxu0 %v749
  %v751 = vand.u32 %v56, 4294901760
  %v752 = vsub.f32 %v56, %v751
  %753 = vmatpush.msra.mxu0 %v752
  %v754 = vand.u32 %v55, 4294901760
  %v755 = vsub.f32 %v55, %v754
  %756 = vmatpush.msra.mxu0 %v755
  %v757 = vand.u32 %v54, 4294901760
  %v758 = vsub.f32 %v54, %v757
  %759 = vmatpush.msra.mxu0 %v758
  %v760 = vand.u32 %v53, 4294901760
  %v761 = vsub.f32 %v53, %v760
  %762 = vmatpush.msra.mxu0 %v761
  %v763 = vand.u32 %v52, 4294901760
  %v764 = vsub.f32 %v52, %v763
  %765 = vmatpush.msra.mxu0 %v764
  %v766 = vand.u32 %v51, 4294901760
  %v767 = vsub.f32 %v51, %v766
  %768 = vmatpush.msra.mxu0 %v767
  %v769 = vand.u32 %v50, 4294901760
  %v770 = vsub.f32 %v50, %v769
  %771 = vmatpush.msra.mxu0 %v770
  %v772 = vand.u32 %v49, 4294901760
  %v773 = vsub.f32 %v49, %v772
  %774 = vmatpush.msra.mxu0 %v773
  %v775 = vand.u32 %v48, 4294901760
  %v776 = vsub.f32 %v48, %v775
  %777 = vmatpush.msra.mxu0 %v776
  %v778 = vand.u32 %v47, 4294901760
  %v779 = vsub.f32 %v47, %v778
  %780 = vmatpush.msra.mxu0 %v779
  %v781 = vand.u32 %v46, 4294901760
  %v782 = vsub.f32 %v46, %v781
  %783 = vmatpush.msra.mxu0 %v782
  %v784 = vand.u32 %v45, 4294901760
  %v785 = vsub.f32 %v45, %v784
  %786 = vmatpush.msra.mxu0 %v785
  %v787 = vand.u32 %v596, 4294901760
  %v788 = vsub.f32 %v596, %v787
  %789 = vmatmul.f32.gmra.mxu0 %v788
  %v790 = vpop.f32.mrf.mxu0
  %v791 = vadd.f32 %v737, %v790
  %792 = vdwg.mxu0
  %v793 = vand.u32 %v60, 4294901760
  %794 = vmatpush.msra.mxu0 %v793
  %v795 = vand.u32 %v59, 4294901760
  %796 = vmatpush.msra.mxu0 %v795
  %v797 = vand.u32 %v58, 4294901760
  %798 = vmatpush.msra.mxu0 %v797
  %v799 = vand.u32 %v57, 4294901760
  %800 = vmatpush.msra.mxu0 %v799
  %v801 = vand.u32 %v56, 4294901760
  %802 = vmatpush.msra.mxu0 %v801
  %v803 = vand.u32 %v55, 4294901760
  %804 = vmatpush.msra.mxu0 %v803
  %v805 = vand.u32 %v54, 4294901760
  %806 = vmatpush.msra.mxu0 %v805
  %v807 = vand.u32 %v53, 4294901760
  %808 = vmatpush.msra.mxu0 %v807
  %v809 = vand.u32 %v52, 4294901760
  %810 = vmatpush.msra.mxu0 %v809
  %v811 = vand.u32 %v51, 4294901760
  %812 = vmatpush.msra.mxu0 %v811
  %v813 = vand.u32 %v50, 4294901760
  %814 = vmatpush.msra.mxu0 %v813
  %v815 = vand.u32 %v49, 4294901760
  %816 = vmatpush.msra.mxu0 %v815
  %v817 = vand.u32 %v48, 4294901760
  %818 = vmatpush.msra.mxu0 %v817
  %v819 = vand.u32 %v47, 4294901760
  %820 = vmatpush.msra.mxu0 %v819
  %v821 = vand.u32 %v46, 4294901760
  %822 = vmatpush.msra.mxu0 %v821
  %v823 = vand.u32 %v45, 4294901760
  %824 = vmatpush.msra.mxu0 %v823
  %v825 = vand.u32 %v596, 4294901760
  %v826 = vsub.f32 %v596, %v825
  %v827 = vand.u32 %v826, 4294901760
  %828 = vmatmul.f32.gmra.mxu0 %v827
  %v829 = vpop.f32.mrf.mxu0
  %v830 = vadd.f32 %v791, %v829
  %831 = vdwg.mxu0
  %v832 = vand.u32 %v60, 4294901760
  %v833 = vsub.f32 %v60, %v832
  %v834 = vand.u32 %v833, 4294901760
  %835 = vmatpush.msra.mxu0 %v834
  %v836 = vand.u32 %v59, 4294901760
  %v837 = vsub.f32 %v59, %v836
  %v838 = vand.u32 %v837, 4294901760
  %839 = vmatpush.msra.mxu0 %v838
  %v840 = vand.u32 %v58, 4294901760
  %v841 = vsub.f32 %v58, %v840
  %v842 = vand.u32 %v841, 4294901760
  %843 = vmatpush.msra.mxu0 %v842
  %v844 = vand.u32 %v57, 4294901760
  %v845 = vsub.f32 %v57, %v844
  %v846 = vand.u32 %v845, 4294901760
  %847 = vmatpush.msra.mxu0 %v846
  %v848 = vand.u32 %v56, 4294901760
  %v849 = vsub.f32 %v56, %v848
  %v850 = vand.u32 %v849, 4294901760
  %851 = vmatpush.msra.mxu0 %v850
  %v852 = vand.u32 %v55, 4294901760
  %v853 = vsub.f32 %v55, %v852
  %v854 = vand.u32 %v853, 4294901760
  %855 = vmatpush.msra.mxu0 %v854
  %v856 = vand.u32 %v54, 4294901760
  %v857 = vsub.f32 %v54, %v856
  %v858 = vand.u32 %v857, 4294901760
  %859 = vmatpush.msra.mxu0 %v858
  %v860 = vand.u32 %v53, 4294901760
  %v861 = vsub.f32 %v53, %v860
  %v862 = vand.u32 %v861, 4294901760
  %863 = vmatpush.msra.mxu0 %v862
  %v864 = vand.u32 %v52, 4294901760
  %v865 = vsub.f32 %v52, %v864
  %v866 = vand.u32 %v865, 4294901760
  %867 = vmatpush.msra.mxu0 %v866
  %v868 = vand.u32 %v51, 4294901760
  %v869 = vsub.f32 %v51, %v868
  %v870 = vand.u32 %v869, 4294901760
  %871 = vmatpush.msra.mxu0 %v870
  %v872 = vand.u32 %v50, 4294901760
  %v873 = vsub.f32 %v50, %v872
  %v874 = vand.u32 %v873, 4294901760
  %875 = vmatpush.msra.mxu0 %v874
  %v876 = vand.u32 %v49, 4294901760
  %v877 = vsub.f32 %v49, %v876
  %v878 = vand.u32 %v877, 4294901760
  %879 = vmatpush.msra.mxu0 %v878
  %v880 = vand.u32 %v48, 4294901760
  %v881 = vsub.f32 %v48, %v880
  %v882 = vand.u32 %v881, 4294901760
  %883 = vmatpush.msra.mxu0 %v882
  %v884 = vand.u32 %v47, 4294901760
  %v885 = vsub.f32 %v47, %v884
  %v886 = vand.u32 %v885, 4294901760
  %887 = vmatpush.msra.mxu0 %v886
  %v888 = vand.u32 %v46, 4294901760
  %v889 = vsub.f32 %v46, %v888
  %v890 = vand.u32 %v889, 4294901760
  %891 = vmatpush.msra.mxu0 %v890
  %v892 = vand.u32 %v45, 4294901760
  %v893 = vsub.f32 %v45, %v892
  %v894 = vand.u32 %v893, 4294901760
  %895 = vmatpush.msra.mxu0 %v894
  %v896 = vand.u32 %v596, 4294901760
  %897 = vmatmul.f32.gmra.mxu0 %v896
  %v898 = vpop.f32.mrf.mxu0
  %v899 = vadd.f32 %v830, %v898
  %900 = vdwg.mxu0
  %v901 = vand.u32 %v60, 4294901760
  %902 = vmatpush.msra.mxu0 %v901
  %v903 = vand.u32 %v59, 4294901760
  %904 = vmatpush.msra.mxu0 %v903
  %v905 = vand.u32 %v58, 4294901760
  %906 = vmatpush.msra.mxu0 %v905
  %v907 = vand.u32 %v57, 4294901760
  %908 = vmatpush.msra.mxu0 %v907
  %v909 = vand.u32 %v56, 4294901760
  %910 = vmatpush.msra.mxu0 %v909
  %v911 = vand.u32 %v55, 4294901760
  %912 = vmatpush.msra.mxu0 %v911
  %v913 = vand.u32 %v54, 4294901760
  %914 = vmatpush.msra.mxu0 %v913
  %v915 = vand.u32 %v53, 4294901760
  %916 = vmatpush.msra.mxu0 %v915
  %v917 = vand.u32 %v52, 4294901760
  %918 = vmatpush.msra.mxu0 %v917
  %v919 = vand.u32 %v51, 4294901760
  %920 = vmatpush.msra.mxu0 %v919
  %v921 = vand.u32 %v50, 4294901760
  %922 = vmatpush.msra.mxu0 %v921
  %v923 = vand.u32 %v49, 4294901760
  %924 = vmatpush.msra.mxu0 %v923
  %v925 = vand.u32 %v48, 4294901760
  %926 = vmatpush.msra.mxu0 %v925
  %v927 = vand.u32 %v47, 4294901760
  %928 = vmatpush.msra.mxu0 %v927
  %v929 = vand.u32 %v46, 4294901760
  %930 = vmatpush.msra.mxu0 %v929
  %v931 = vand.u32 %v45, 4294901760
  %932 = vmatpush.msra.mxu0 %v931
  %v933 = vand.u32 %v596, 4294901760
  %934 = vmatmul.f32.gmra.mxu0 %v933
  %v935 = vpop.f32.mrf.mxu0
  %v936 = vadd.f32 %v899, %v935
  %937 = vdwg.mxu0
  %vm938 = vcmask 64512
  %v939 = vsel %vm938, %v594, 0.0
  %v940 = vrot.slane %v939, 4
  %v941 = vadd.f32 %v939, %v940
  %v942 = vrot.slane %v941, 2
  %v943 = vadd.f32 %v941, %v942
  %v944 = vrot.slane %v943, 1
  %v945 = vadd.f32 %v943, %v944
  %v946 = vmul.f32 %v945, 0.00390625
  %v947 = vsel %vm938, %v936, 0.0
  %v948 = vrot.slane %v947, 4
  %v949 = vadd.f32 %v947, %v948
  %v950 = vrot.slane %v949, 2
  %v951 = vadd.f32 %v949, %v950
  %v952 = vrot.slane %v951, 1
  %v953 = vadd.f32 %v951, %v952
  %v954 = vmul.f32 %v953, 0.00390625
  %v955 = vmul.f32 %v946, %v946
  %v956 = vsub.f32 %v954, %v955
  %v957 = vmax.f32 %v956, 0.0
  %v958 = vadd.f32 %v957, 1e-05
  %v959 = vrsqrt.pop %v958
  %v960 = vmul.f32 %v959, %v958
  %v961 = vmul.f32 %v960, %v959
  %v962 = vmul.f32 0.5, %v961
  %v963 = vsub.f32 1.5, %v962
  %v964 = vmul.f32 %v959, %v963
  %vm965 = vweird.f32 %v958
  %vm966 = vweird.f32 %v959
  %vm967 = vmor %vm965, %vm966
  %v968 = vsel %vm967, %v959, %v964
  %v970 = vsel %vm938, %v946, 0
  %972 = vmatpush.msra.mxu0 0.0
  %973 = vmatpush.msra.mxu0 0.0
  %974 = vmatpush.msra.mxu0 0.0
  %975 = vmatpush.msra.mxu0 0.0
  %976 = vmatpush.msra.mxu0 0.0
  %977 = vmatpush.msra.mxu0 0.0
  %978 = vmatpush.msra.mxu0 0.0
  %979 = vmatpush.msra.mxu0 0.0
  %980 = vmatpush.msra.mxu0 0.0
  %981 = vmatpush.msra.mxu0 0.0
  %982 = vmatpush.msra.mxu0 0.0
  %983 = vmatpush.msra.mxu0 0.0
  %984 = vmatpush.msra.mxu0 0.0
  %985 = vmatpush.msra.mxu0 0.0
  %986 = vmatpush.msra.mxu0 0.0
  %v987 = vand.u32 %v61, 4294901760
  %988 = vmatpush.msra.mxu0 %v987
  %v989 = vand.u32 %v970, 4294901760
  %v990 = vsub.f32 %v970, %v989
  %v991 = vand.u32 %v990, 4294901760
  %v992 = vsub.f32 %v990, %v991
  %v993 = vand.u32 %v992, 4294901760
  %994 = vmatmul.f32.gmra.mxu0 %v993
  %v995 = vpop.f32.mrf.mxu0
  %v996 = vadd.f32 0.0, %v995
  %997 = vdwg.mxu0
  %998 = vmatpush.msra.mxu0 0.0
  %999 = vmatpush.msra.mxu0 0.0
  %1000 = vmatpush.msra.mxu0 0.0
  %1001 = vmatpush.msra.mxu0 0.0
  %1002 = vmatpush.msra.mxu0 0.0
  %1003 = vmatpush.msra.mxu0 0.0
  %1004 = vmatpush.msra.mxu0 0.0
  %1005 = vmatpush.msra.mxu0 0.0
  %1006 = vmatpush.msra.mxu0 0.0
  %1007 = vmatpush.msra.mxu0 0.0
  %1008 = vmatpush.msra.mxu0 0.0
  %1009 = vmatpush.msra.mxu0 0.0
  %1010 = vmatpush.msra.mxu0 0.0
  %1011 = vmatpush.msra.mxu0 0.0
  %1012 = vmatpush.msra.mxu0 0.0
  %v1013 = vand.u32 %v61, 4294901760
  %v1014 = vsub.f32 %v61, %v1013
  %v1015 = vand.u32 %v1014, 4294901760
  %v1016 = vsub.f32 %v1014, %v1015
  %v1017 = vand.u32 %v1016, 4294901760
  %1018 = vmatpush.msra.mxu0 %v1017
  %v1019 = vand.u32 %v970, 4294901760
  %1020 = vmatmul.f32.gmra.mxu0 %v1019
  %v1021 = vpop.f32.mrf.mxu0
  %v1022 = vadd.f32 %v996, %v1021
  %1023 = vdwg.mxu0
  %1024 = vmatpush.msra.mxu0 0.0
  %1025 = vmatpush.msra.mxu0 0.0
  %1026 = vmatpush.msra.mxu0 0.0
  %1027 = vmatpush.msra.mxu0 0.0
  %1028 = vmatpush.msra.mxu0 0.0
  %1029 = vmatpush.msra.mxu0 0.0
  %1030 = vmatpush.msra.mxu0 0.0
  %1031 = vmatpush.msra.mxu0 0.0
  %1032 = vmatpush.msra.mxu0 0.0
  %1033 = vmatpush.msra.mxu0 0.0
  %1034 = vmatpush.msra.mxu0 0.0
  %1035 = vmatpush.msra.mxu0 0.0
  %1036 = vmatpush.msra.mxu0 0.0
  %1037 = vmatpush.msra.mxu0 0.0
  %1038 = vmatpush.msra.mxu0 0.0
  %v1039 = vand.u32 %v61, 4294901760
  %v1040 = vsub.f32 %v61, %v1039
  %1041 = vmatpush.msra.mxu0 %v1040
  %v1042 = vand.u32 %v970, 4294901760
  %v1043 = vsub.f32 %v970, %v1042
  %1044 = vmatmul.f32.gmra.mxu0 %v1043
  %v1045 = vpop.f32.mrf.mxu0
  %v1046 = vadd.f32 %v1022, %v1045
  %1047 = vdwg.mxu0
  %1048 = vmatpush.msra.mxu0 0.0
  %1049 = vmatpush.msra.mxu0 0.0
  %1050 = vmatpush.msra.mxu0 0.0
  %1051 = vmatpush.msra.mxu0 0.0
  %1052 = vmatpush.msra.mxu0 0.0
  %1053 = vmatpush.msra.mxu0 0.0
  %1054 = vmatpush.msra.mxu0 0.0
  %1055 = vmatpush.msra.mxu0 0.0
  %1056 = vmatpush.msra.mxu0 0.0
  %1057 = vmatpush.msra.mxu0 0.0
  %1058 = vmatpush.msra.mxu0 0.0
  %1059 = vmatpush.msra.mxu0 0.0
  %1060 = vmatpush.msra.mxu0 0.0
  %1061 = vmatpush.msra.mxu0 0.0
  %1062 = vmatpush.msra.mxu0 0.0
  %v1063 = vand.u32 %v61, 4294901760
  %1064 = vmatpush.msra.mxu0 %v1063
  %v1065 = vand.u32 %v970, 4294901760
  %v1066 = vsub.f32 %v970, %v1065
  %v1067 = vand.u32 %v1066, 4294901760
  %1068 = vmatmul.f32.gmra.mxu0 %v1067
  %v1069 = vpop.f32.mrf.mxu0
  %v1070 = vadd.f32 %v1046, %v1069
  %1071 = vdwg.mxu0
  %1072 = vmatpush.msra.mxu0 0.0
  %1073 = vmatpush.msra.mxu0 0.0
  %1074 = vmatpush.msra.mxu0 0.0
  %1075 = vmatpush.msra.mxu0 0.0
  %1076 = vmatpush.msra.mxu0 0.0
  %1077 = vmatpush.msra.mxu0 0.0
  %1078 = vmatpush.msra.mxu0 0.0
  %1079 = vmatpush.msra.mxu0 0.0
  %1080 = vmatpush.msra.mxu0 0.0
  %1081 = vmatpush.msra.mxu0 0.0
  %1082 = vmatpush.msra.mxu0 0.0
  %1083 = vmatpush.msra.mxu0 0.0
  %1084 = vmatpush.msra.mxu0 0.0
  %1085 = vmatpush.msra.mxu0 0.0
  %1086 = vmatpush.msra.mxu0 0.0
  %v1087 = vand.u32 %v61, 4294901760
  %v1088 = vsub.f32 %v61, %v1087
  %v1089 = vand.u32 %v1088, 4294901760
  %1090 = vmatpush.msra.mxu0 %v1089
  %v1091 = vand.u32 %v970, 4294901760
  %1092 = vmatmul.f32.gmra.mxu0 %v1091
  %v1093 = vpop.f32.mrf.mxu0
  %v1094 = vadd.f32 %v1070, %v1093
  %1095 = vdwg.mxu0
  %1096 = vmatpush.msra.mxu0 0.0
  %1097 = vmatpush.msra.mxu0 0.0
  %1098 = vmatpush.msra.mxu0 0.0
  %1099 = vmatpush.msra.mxu0 0.0
  %1100 = vmatpush.msra.mxu0 0.0
  %1101 = vmatpush.msra.mxu0 0.0
  %1102 = vmatpush.msra.mxu0 0.0
  %1103 = vmatpush.msra.mxu0 0.0
  %1104 = vmatpush.msra.mxu0 0.0
  %1105 = vmatpush.msra.mxu0 0.0
  %1106 = vmatpush.msra.mxu0 0.0
  %1107 = vmatpush.msra.mxu0 0.0
  %1108 = vmatpush.msra.mxu0 0.0
  %1109 = vmatpush.msra.mxu0 0.0
  %1110 = vmatpush.msra.mxu0 0.0
  %v1111 = vand.u32 %v61, 4294901760
  %1112 = vmatpush.msra.mxu0 %v1111
  %v1113 = vand.u32 %v970, 4294901760
  %1114 = vmatmul.f32.gmra.mxu0 %v1113
  %v1115 = vpop.f32.mrf.mxu0
  %v1116 = vadd.f32 %v1094, %v1115
  %1117 = vdwg.mxu0
  %v1119 = vsel %vm938, %v968, 0
  %1121 = vmatpush.msra.mxu0 0.0
  %1122 = vmatpush.msra.mxu0 0.0
  %1123 = vmatpush.msra.mxu0 0.0
  %1124 = vmatpush.msra.mxu0 0.0
  %1125 = vmatpush.msra.mxu0 0.0
  %1126 = vmatpush.msra.mxu0 0.0
  %1127 = vmatpush.msra.mxu0 0.0
  %1128 = vmatpush.msra.mxu0 0.0
  %1129 = vmatpush.msra.mxu0 0.0
  %1130 = vmatpush.msra.mxu0 0.0
  %1131 = vmatpush.msra.mxu0 0.0
  %1132 = vmatpush.msra.mxu0 0.0
  %1133 = vmatpush.msra.mxu0 0.0
  %1134 = vmatpush.msra.mxu0 0.0
  %1135 = vmatpush.msra.mxu0 0.0
  %v1136 = vand.u32 %v61, 4294901760
  %1137 = vmatpush.msra.mxu0 %v1136
  %v1138 = vand.u32 %v1119, 4294901760
  %v1139 = vsub.f32 %v1119, %v1138
  %v1140 = vand.u32 %v1139, 4294901760
  %v1141 = vsub.f32 %v1139, %v1140
  %v1142 = vand.u32 %v1141, 4294901760
  %1143 = vmatmul.f32.gmra.mxu0 %v1142
  %v1144 = vpop.f32.mrf.mxu0
  %v1145 = vadd.f32 0.0, %v1144
  %1146 = vdwg.mxu0
  %1147 = vmatpush.msra.mxu0 0.0
  %1148 = vmatpush.msra.mxu0 0.0
  %1149 = vmatpush.msra.mxu0 0.0
  %1150 = vmatpush.msra.mxu0 0.0
  %1151 = vmatpush.msra.mxu0 0.0
  %1152 = vmatpush.msra.mxu0 0.0
  %1153 = vmatpush.msra.mxu0 0.0
  %1154 = vmatpush.msra.mxu0 0.0
  %1155 = vmatpush.msra.mxu0 0.0
  %1156 = vmatpush.msra.mxu0 0.0
  %1157 = vmatpush.msra.mxu0 0.0
  %1158 = vmatpush.msra.mxu0 0.0
  %1159 = vmatpush.msra.mxu0 0.0
  %1160 = vmatpush.msra.mxu0 0.0
  %1161 = vmatpush.msra.mxu0 0.0
  %v1162 = vand.u32 %v61, 4294901760
  %v1163 = vsub.f32 %v61, %v1162
  %v1164 = vand.u32 %v1163, 4294901760
  %v1165 = vsub.f32 %v1163, %v1164
  %v1166 = vand.u32 %v1165, 4294901760
  %1167 = vmatpush.msra.mxu0 %v1166
  %v1168 = vand.u32 %v1119, 4294901760
  %1169 = vmatmul.f32.gmra.mxu0 %v1168
  %v1170 = vpop.f32.mrf.mxu0
  %v1171 = vadd.f32 %v1145, %v1170
  %1172 = vdwg.mxu0
  %1173 = vmatpush.msra.mxu0 0.0
  %1174 = vmatpush.msra.mxu0 0.0
  %1175 = vmatpush.msra.mxu0 0.0
  %1176 = vmatpush.msra.mxu0 0.0
  %1177 = vmatpush.msra.mxu0 0.0
  %1178 = vmatpush.msra.mxu0 0.0
  %1179 = vmatpush.msra.mxu0 0.0
  %1180 = vmatpush.msra.mxu0 0.0
  %1181 = vmatpush.msra.mxu0 0.0
  %1182 = vmatpush.msra.mxu0 0.0
  %1183 = vmatpush.msra.mxu0 0.0
  %1184 = vmatpush.msra.mxu0 0.0
  %1185 = vmatpush.msra.mxu0 0.0
  %1186 = vmatpush.msra.mxu0 0.0
  %1187 = vmatpush.msra.mxu0 0.0
  %v1188 = vand.u32 %v61, 4294901760
  %v1189 = vsub.f32 %v61, %v1188
  %1190 = vmatpush.msra.mxu0 %v1189
  %v1191 = vand.u32 %v1119, 4294901760
  %v1192 = vsub.f32 %v1119, %v1191
  %1193 = vmatmul.f32.gmra.mxu0 %v1192
  %v1194 = vpop.f32.mrf.mxu0
  %v1195 = vadd.f32 %v1171, %v1194
  %1196 = vdwg.mxu0
  %1197 = vmatpush.msra.mxu0 0.0
  %1198 = vmatpush.msra.mxu0 0.0
  %1199 = vmatpush.msra.mxu0 0.0
  %1200 = vmatpush.msra.mxu0 0.0
  %1201 = vmatpush.msra.mxu0 0.0
  %1202 = vmatpush.msra.mxu0 0.0
  %1203 = vmatpush.msra.mxu0 0.0
  %1204 = vmatpush.msra.mxu0 0.0
  %1205 = vmatpush.msra.mxu0 0.0
  %1206 = vmatpush.msra.mxu0 0.0
  %1207 = vmatpush.msra.mxu0 0.0
  %1208 = vmatpush.msra.mxu0 0.0
  %1209 = vmatpush.msra.mxu0 0.0
  %1210 = vmatpush.msra.mxu0 0.0
  %1211 = vmatpush.msra.mxu0 0.0
  %v1212 = vand.u32 %v61, 4294901760
  %1213 = vmatpush.msra.mxu0 %v1212
  %v1214 = vand.u32 %v1119, 4294901760
  %v1215 = vsub.f32 %v1119, %v1214
  %v1216 = vand.u32 %v1215, 4294901760
  %1217 = vmatmul.f32.gmra.mxu0 %v1216
  %v1218 = vpop.f32.mrf.mxu0
  %v1219 = vadd.f32 %v1195, %v1218
  %1220 = vdwg.mxu0
  %1221 = vmatpush.msra.mxu0 0.0
  %1222 = vmatpush.msra.mxu0 0.0
  %1223 = vmatpush.msra.mxu0 0.0
  %1224 = vmatpush.msra.mxu0 0.0
  %1225 = vmatpush.msra.mxu0 0.0
  %1226 = vmatpush.msra.mxu0 0.0
  %1227 = vmatpush.msra.mxu0 0.0
  %1228 = vmatpush.msra.mxu0 0.0
  %1229 = vmatpush.msra.mxu0 0.0
  %1230 = vmatpush.msra.mxu0 0.0
  %1231 = vmatpush.msra.mxu0 0.0
  %1232 = vmatpush.msra.mxu0 0.0
  %1233 = vmatpush.msra.mxu0 0.0
  %1234 = vmatpush.msra.mxu0 0.0
  %1235 = vmatpush.msra.mxu0 0.0
  %v1236 = vand.u32 %v61, 4294901760
  %v1237 = vsub.f32 %v61, %v1236
  %v1238 = vand.u32 %v1237, 4294901760
  %1239 = vmatpush.msra.mxu0 %v1238
  %v1240 = vand.u32 %v1119, 4294901760
  %1241 = vmatmul.f32.gmra.mxu0 %v1240
  %v1242 = vpop.f32.mrf.mxu0
  %v1243 = vadd.f32 %v1219, %v1242
  %1244 = vdwg.mxu0
  %1245 = vmatpush.msra.mxu0 0.0
  %1246 = vmatpush.msra.mxu0 0.0
  %1247 = vmatpush.msra.mxu0 0.0
  %1248 = vmatpush.msra.mxu0 0.0
  %1249 = vmatpush.msra.mxu0 0.0
  %1250 = vmatpush.msra.mxu0 0.0
  %1251 = vmatpush.msra.mxu0 0.0
  %1252 = vmatpush.msra.mxu0 0.0
  %1253 = vmatpush.msra.mxu0 0.0
  %1254 = vmatpush.msra.mxu0 0.0
  %1255 = vmatpush.msra.mxu0 0.0
  %1256 = vmatpush.msra.mxu0 0.0
  %1257 = vmatpush.msra.mxu0 0.0
  %1258 = vmatpush.msra.mxu0 0.0
  %1259 = vmatpush.msra.mxu0 0.0
  %v1260 = vand.u32 %v61, 4294901760
  %1261 = vmatpush.msra.mxu0 %v1260
  %v1262 = vand.u32 %v1119, 4294901760
  %1263 = vmatmul.f32.gmra.mxu0 %v1262
  %v1264 = vpop.f32.mrf.mxu0
  %v1265 = vadd.f32 %v1243, %v1264
  %1266 = vdwg.mxu0
  %v1267 = vld [vmem:[%s7] sm:$0xff]
  %v1268 = vperm.slane %v1116, 0
  %v1269 = vsub.f32 %v253, %v1268
  %v1270 = vperm.slane %v1265, 0
  %v1271 = vmul.f32 %v1269, %v1270
  %1273 = vset.pattern.permute.xlu0 0
  %1274 = vperm.xlu0 %1273, %v1267
  %v1275 = vpop.permute.xlu0 %1274
  %v1277 = vmul.f32 %v1275, %v1271
  %v1278 = vld [vmem:[%s8] sm:$0xff]
  %1280 = vset.pattern.permute.xlu0 0
  %1281 = vperm.xlu0 %1280, %v1278
  %v1282 = vpop.permute.xlu0 %1281
  %v1284 = vadd.f32 %v1277, %v1282
  %v1285 = vmul.f32 %v1284, 0.5
  %v1286 = vmul.f32 %v1284, 0.044715
  %v1287 = vmul.f32 %v1286, %v1284
  %v1288 = vmul.f32 %v1287, %v1284
  %v1289 = vadd.f32 %v1284, %v1288
  %v1290 = vmul.f32 %v1289, 0.7978846
  %v1291 = vtanh.pop %v1290
  %v1292 = vadd.f32 %v1291, 1.0
  %v1293 = vmul.f32 %v1285, %v1292
  %1294 = vrot.lane.b32.xlu0 %v1293, 1
  %v1295 = vpop.permute.xlu0 %1294
  %v1296 = vmul.f32 %v1295, %v72
  %1297 = vrot.lane.b32.xlu0 %v1293, 127
  %v1298 = vpop.permute.xlu0 %1297
  %v1299 = vmul.f32 %v1298, %v76
  %s1300 = scalar_lea.vmem %s6, 8
  %v1301 = vld [vmem:[%s1300] sm:$0xff]
  %v1303 = vsel %vm79, %v1301, 0
  %1305 = vmatpush.msra.mxu0 0.0
  %1306 = vmatpush.msra.mxu0 0.0
  %1307 = vmatpush.msra.mxu0 0.0
  %1308 = vmatpush.msra.mxu0 0.0
  %1309 = vmatpush.msra.mxu0 0.0
  %1310 = vmatpush.msra.mxu0 0.0
  %1311 = vmatpush.msra.mxu0 0.0
  %1312 = vmatpush.msra.mxu0 0.0
  %1313 = vmatpush.msra.mxu0 0.0
  %1314 = vmatpush.msra.mxu0 0.0
  %1315 = vmatpush.msra.mxu0 0.0
  %1316 = vmatpush.msra.mxu0 0.0
  %1317 = vmatpush.msra.mxu0 0.0
  %v1318 = vand.u32 %v1299, 4294901760
  %1319 = vmatpush.msra.mxu0 %v1318
  %v1320 = vand.u32 %v1293, 4294901760
  %1321 = vmatpush.msra.mxu0 %v1320
  %v1322 = vand.u32 %v1296, 4294901760
  %1323 = vmatpush.msra.mxu0 %v1322
  %v1324 = vand.u32 %v1303, 4294901760
  %v1325 = vsub.f32 %v1303, %v1324
  %v1326 = vand.u32 %v1325, 4294901760
  %v1327 = vsub.f32 %v1325, %v1326
  %v1328 = vand.u32 %v1327, 4294901760
  %1329 = vmatmul.f32.gmra.mxu0 %v1328
  %v1330 = vpop.f32.mrf.mxu0
  %v1331 = vadd.f32 0.0, %v1330
  %1332 = vdwg.mxu0
  %1333 = vmatpush.msra.mxu0 0.0
  %1334 = vmatpush.msra.mxu0 0.0
  %1335 = vmatpush.msra.mxu0 0.0
  %1336 = vmatpush.msra.mxu0 0.0
  %1337 = vmatpush.msra.mxu0 0.0
  %1338 = vmatpush.msra.mxu0 0.0
  %1339 = vmatpush.msra.mxu0 0.0
  %1340 = vmatpush.msra.mxu0 0.0
  %1341 = vmatpush.msra.mxu0 0.0
  %1342 = vmatpush.msra.mxu0 0.0
  %1343 = vmatpush.msra.mxu0 0.0
  %1344 = vmatpush.msra.mxu0 0.0
  %1345 = vmatpush.msra.mxu0 0.0
  %v1346 = vand.u32 %v1299, 4294901760
  %v1347 = vsub.f32 %v1299, %v1346
  %v1348 = vand.u32 %v1347, 4294901760
  %v1349 = vsub.f32 %v1347, %v1348
  %v1350 = vand.u32 %v1349, 4294901760
  %1351 = vmatpush.msra.mxu0 %v1350
  %v1352 = vand.u32 %v1293, 4294901760
  %v1353 = vsub.f32 %v1293, %v1352
  %v1354 = vand.u32 %v1353, 4294901760
  %v1355 = vsub.f32 %v1353, %v1354
  %v1356 = vand.u32 %v1355, 4294901760
  %1357 = vmatpush.msra.mxu0 %v1356
  %v1358 = vand.u32 %v1296, 4294901760
  %v1359 = vsub.f32 %v1296, %v1358
  %v1360 = vand.u32 %v1359, 4294901760
  %v1361 = vsub.f32 %v1359, %v1360
  %v1362 = vand.u32 %v1361, 4294901760
  %1363 = vmatpush.msra.mxu0 %v1362
  %v1364 = vand.u32 %v1303, 4294901760
  %1365 = vmatmul.f32.gmra.mxu0 %v1364
  %v1366 = vpop.f32.mrf.mxu0
  %v1367 = vadd.f32 %v1331, %v1366
  %1368 = vdwg.mxu0
  %1369 = vmatpush.msra.mxu0 0.0
  %1370 = vmatpush.msra.mxu0 0.0
  %1371 = vmatpush.msra.mxu0 0.0
  %1372 = vmatpush.msra.mxu0 0.0
  %1373 = vmatpush.msra.mxu0 0.0
  %1374 = vmatpush.msra.mxu0 0.0
  %1375 = vmatpush.msra.mxu0 0.0
  %1376 = vmatpush.msra.mxu0 0.0
  %1377 = vmatpush.msra.mxu0 0.0
  %1378 = vmatpush.msra.mxu0 0.0
  %1379 = vmatpush.msra.mxu0 0.0
  %1380 = vmatpush.msra.mxu0 0.0
  %1381 = vmatpush.msra.mxu0 0.0
  %v1382 = vand.u32 %v1299, 4294901760
  %v1383 = vsub.f32 %v1299, %v1382
  %1384 = vmatpush.msra.mxu0 %v1383
  %v1385 = vand.u32 %v1293, 4294901760
  %v1386 = vsub.f32 %v1293, %v1385
  %1387 = vmatpush.msra.mxu0 %v1386
  %v1388 = vand.u32 %v1296, 4294901760
  %v1389 = vsub.f32 %v1296, %v1388
  %1390 = vmatpush.msra.mxu0 %v1389
  %v1391 = vand.u32 %v1303, 4294901760
  %v1392 = vsub.f32 %v1303, %v1391
  %1393 = vmatmul.f32.gmra.mxu0 %v1392
  %v1394 = vpop.f32.mrf.mxu0
  %v1395 = vadd.f32 %v1367, %v1394
  %1396 = vdwg.mxu0
  %1397 = vmatpush.msra.mxu0 0.0
  %1398 = vmatpush.msra.mxu0 0.0
  %1399 = vmatpush.msra.mxu0 0.0
  %1400 = vmatpush.msra.mxu0 0.0
  %1401 = vmatpush.msra.mxu0 0.0
  %1402 = vmatpush.msra.mxu0 0.0
  %1403 = vmatpush.msra.mxu0 0.0
  %1404 = vmatpush.msra.mxu0 0.0
  %1405 = vmatpush.msra.mxu0 0.0
  %1406 = vmatpush.msra.mxu0 0.0
  %1407 = vmatpush.msra.mxu0 0.0
  %1408 = vmatpush.msra.mxu0 0.0
  %1409 = vmatpush.msra.mxu0 0.0
  %v1410 = vand.u32 %v1299, 4294901760
  %1411 = vmatpush.msra.mxu0 %v1410
  %v1412 = vand.u32 %v1293, 4294901760
  %1413 = vmatpush.msra.mxu0 %v1412
  %v1414 = vand.u32 %v1296, 4294901760
  %1415 = vmatpush.msra.mxu0 %v1414
  %v1416 = vand.u32 %v1303, 4294901760
  %v1417 = vsub.f32 %v1303, %v1416
  %v1418 = vand.u32 %v1417, 4294901760
  %1419 = vmatmul.f32.gmra.mxu0 %v1418
  %v1420 = vpop.f32.mrf.mxu0
  %v1421 = vadd.f32 %v1395, %v1420
  %1422 = vdwg.mxu0
  %1423 = vmatpush.msra.mxu0 0.0
  %1424 = vmatpush.msra.mxu0 0.0
  %1425 = vmatpush.msra.mxu0 0.0
  %1426 = vmatpush.msra.mxu0 0.0
  %1427 = vmatpush.msra.mxu0 0.0
  %1428 = vmatpush.msra.mxu0 0.0
  %1429 = vmatpush.msra.mxu0 0.0
  %1430 = vmatpush.msra.mxu0 0.0
  %1431 = vmatpush.msra.mxu0 0.0
  %1432 = vmatpush.msra.mxu0 0.0
  %1433 = vmatpush.msra.mxu0 0.0
  %1434 = vmatpush.msra.mxu0 0.0
  %1435 = vmatpush.msra.mxu0 0.0
  %v1436 = vand.u32 %v1299, 4294901760
  %v1437 = vsub.f32 %v1299, %v1436
  %v1438 = vand.u32 %v1437, 4294901760
  %1439 = vmatpush.msra.mxu0 %v1438
  %v1440 = vand.u32 %v1293, 4294901760
  %v1441 = vsub.f32 %v1293, %v1440
  %v1442 = vand.u32 %v1441, 4294901760
  %1443 = vmatpush.msra.mxu0 %v1442
  %v1444 = vand.u32 %v1296, 4294901760
  %v1445 = vsub.f32 %v1296, %v1444
  %v1446 = vand.u32 %v1445, 4294901760
  %1447 = vmatpush.msra.mxu0 %v1446
  %v1448 = vand.u32 %v1303, 4294901760
  %1449 = vmatmul.f32.gmra.mxu0 %v1448
  %v1450 = vpop.f32.mrf.mxu0
  %v1451 = vadd.f32 %v1421, %v1450
  %1452 = vdwg.mxu0
  %1453 = vmatpush.msra.mxu0 0.0
  %1454 = vmatpush.msra.mxu0 0.0
  %1455 = vmatpush.msra.mxu0 0.0
  %1456 = vmatpush.msra.mxu0 0.0
  %1457 = vmatpush.msra.mxu0 0.0
  %1458 = vmatpush.msra.mxu0 0.0
  %1459 = vmatpush.msra.mxu0 0.0
  %1460 = vmatpush.msra.mxu0 0.0
  %1461 = vmatpush.msra.mxu0 0.0
  %1462 = vmatpush.msra.mxu0 0.0
  %1463 = vmatpush.msra.mxu0 0.0
  %1464 = vmatpush.msra.mxu0 0.0
  %1465 = vmatpush.msra.mxu0 0.0
  %v1466 = vand.u32 %v1299, 4294901760
  %1467 = vmatpush.msra.mxu0 %v1466
  %v1468 = vand.u32 %v1293, 4294901760
  %1469 = vmatpush.msra.mxu0 %v1468
  %v1470 = vand.u32 %v1296, 4294901760
  %1471 = vmatpush.msra.mxu0 %v1470
  %v1472 = vand.u32 %v1303, 4294901760
  %1473 = vmatmul.f32.gmra.mxu0 %v1472
  %v1474 = vpop.f32.mrf.mxu0
  %v1475 = vadd.f32 %v1451, %v1474
  %1476 = vdwg.mxu0
  %v1477 = vand.u32 %v60, 4294901760
  %1478 = vmatpush.msra.mxu0 %v1477
  %v1479 = vand.u32 %v59, 4294901760
  %1480 = vmatpush.msra.mxu0 %v1479
  %v1481 = vand.u32 %v58, 4294901760
  %1482 = vmatpush.msra.mxu0 %v1481
  %v1483 = vand.u32 %v57, 4294901760
  %1484 = vmatpush.msra.mxu0 %v1483
  %v1485 = vand.u32 %v56, 4294901760
  %1486 = vmatpush.msra.mxu0 %v1485
  %v1487 = vand.u32 %v55, 4294901760
  %1488 = vmatpush.msra.mxu0 %v1487
  %v1489 = vand.u32 %v54, 4294901760
  %1490 = vmatpush.msra.mxu0 %v1489
  %v1491 = vand.u32 %v53, 4294901760
  %1492 = vmatpush.msra.mxu0 %v1491
  %v1493 = vand.u32 %v52, 4294901760
  %1494 = vmatpush.msra.mxu0 %v1493
  %v1495 = vand.u32 %v51, 4294901760
  %1496 = vmatpush.msra.mxu0 %v1495
  %v1497 = vand.u32 %v50, 4294901760
  %1498 = vmatpush.msra.mxu0 %v1497
  %v1499 = vand.u32 %v49, 4294901760
  %1500 = vmatpush.msra.mxu0 %v1499
  %v1501 = vand.u32 %v48, 4294901760
  %1502 = vmatpush.msra.mxu0 %v1501
  %v1503 = vand.u32 %v47, 4294901760
  %1504 = vmatpush.msra.mxu0 %v1503
  %v1505 = vand.u32 %v46, 4294901760
  %1506 = vmatpush.msra.mxu0 %v1505
  %v1507 = vand.u32 %v45, 4294901760
  %1508 = vmatpush.msra.mxu0 %v1507
  %v1509 = vand.u32 %v1475, 4294901760
  %v1510 = vsub.f32 %v1475, %v1509
  %v1511 = vand.u32 %v1510, 4294901760
  %v1512 = vsub.f32 %v1510, %v1511
  %v1513 = vand.u32 %v1512, 4294901760
  %1514 = vmatmul.f32.gmra.mxu0 %v1513
  %v1515 = vpop.f32.mrf.mxu0
  %v1516 = vadd.f32 0.0, %v1515
  %1517 = vdwg.mxu0
  %v1518 = vand.u32 %v60, 4294901760
  %v1519 = vsub.f32 %v60, %v1518
  %v1520 = vand.u32 %v1519, 4294901760
  %v1521 = vsub.f32 %v1519, %v1520
  %v1522 = vand.u32 %v1521, 4294901760
  %1523 = vmatpush.msra.mxu0 %v1522
  %v1524 = vand.u32 %v59, 4294901760
  %v1525 = vsub.f32 %v59, %v1524
  %v1526 = vand.u32 %v1525, 4294901760
  %v1527 = vsub.f32 %v1525, %v1526
  %v1528 = vand.u32 %v1527, 4294901760
  %1529 = vmatpush.msra.mxu0 %v1528
  %v1530 = vand.u32 %v58, 4294901760
  %v1531 = vsub.f32 %v58, %v1530
  %v1532 = vand.u32 %v1531, 4294901760
  %v1533 = vsub.f32 %v1531, %v1532
  %v1534 = vand.u32 %v1533, 4294901760
  %1535 = vmatpush.msra.mxu0 %v1534
  %v1536 = vand.u32 %v57, 4294901760
  %v1537 = vsub.f32 %v57, %v1536
  %v1538 = vand.u32 %v1537, 4294901760
  %v1539 = vsub.f32 %v1537, %v1538
  %v1540 = vand.u32 %v1539, 4294901760
  %1541 = vmatpush.msra.mxu0 %v1540
  %v1542 = vand.u32 %v56, 4294901760
  %v1543 = vsub.f32 %v56, %v1542
  %v1544 = vand.u32 %v1543, 4294901760
  %v1545 = vsub.f32 %v1543, %v1544
  %v1546 = vand.u32 %v1545, 4294901760
  %1547 = vmatpush.msra.mxu0 %v1546
  %v1548 = vand.u32 %v55, 4294901760
  %v1549 = vsub.f32 %v55, %v1548
  %v1550 = vand.u32 %v1549, 4294901760
  %v1551 = vsub.f32 %v1549, %v1550
  %v1552 = vand.u32 %v1551, 4294901760
  %1553 = vmatpush.msra.mxu0 %v1552
  %v1554 = vand.u32 %v54, 4294901760
  %v1555 = vsub.f32 %v54, %v1554
  %v1556 = vand.u32 %v1555, 4294901760
  %v1557 = vsub.f32 %v1555, %v1556
  %v1558 = vand.u32 %v1557, 4294901760
  %1559 = vmatpush.msra.mxu0 %v1558
  %v1560 = vand.u32 %v53, 4294901760
  %v1561 = vsub.f32 %v53, %v1560
  %v1562 = vand.u32 %v1561, 4294901760
  %v1563 = vsub.f32 %v1561, %v1562
  %v1564 = vand.u32 %v1563, 4294901760
  %1565 = vmatpush.msra.mxu0 %v1564
  %v1566 = vand.u32 %v52, 4294901760
  %v1567 = vsub.f32 %v52, %v1566
  %v1568 = vand.u32 %v1567, 4294901760
  %v1569 = vsub.f32 %v1567, %v1568
  %v1570 = vand.u32 %v1569, 4294901760
  %1571 = vmatpush.msra.mxu0 %v1570
  %v1572 = vand.u32 %v51, 4294901760
  %v1573 = vsub.f32 %v51, %v1572
  %v1574 = vand.u32 %v1573, 4294901760
  %v1575 = vsub.f32 %v1573, %v1574
  %v1576 = vand.u32 %v1575, 4294901760
  %1577 = vmatpush.msra.mxu0 %v1576
  %v1578 = vand.u32 %v50, 4294901760
  %v1579 = vsub.f32 %v50, %v1578
  %v1580 = vand.u32 %v1579, 4294901760
  %v1581 = vsub.f32 %v1579, %v1580
  %v1582 = vand.u32 %v1581, 4294901760
  %1583 = vmatpush.msra.mxu0 %v1582
  %v1584 = vand.u32 %v49, 4294901760
  %v1585 = vsub.f32 %v49, %v1584
  %v1586 = vand.u32 %v1585, 4294901760
  %v1587 = vsub.f32 %v1585, %v1586
  %v1588 = vand.u32 %v1587, 4294901760
  %1589 = vmatpush.msra.mxu0 %v1588
  %v1590 = vand.u32 %v48, 4294901760
  %v1591 = vsub.f32 %v48, %v1590
  %v1592 = vand.u32 %v1591, 4294901760
  %v1593 = vsub.f32 %v1591, %v1592
  %v1594 = vand.u32 %v1593, 4294901760
  %1595 = vmatpush.msra.mxu0 %v1594
  %v1596 = vand.u32 %v47, 4294901760
  %v1597 = vsub.f32 %v47, %v1596
  %v1598 = vand.u32 %v1597, 4294901760
  %v1599 = vsub.f32 %v1597, %v1598
  %v1600 = vand.u32 %v1599, 4294901760
  %1601 = vmatpush.msra.mxu0 %v1600
  %v1602 = vand.u32 %v46, 4294901760
  %v1603 = vsub.f32 %v46, %v1602
  %v1604 = vand.u32 %v1603, 4294901760
  %v1605 = vsub.f32 %v1603, %v1604
  %v1606 = vand.u32 %v1605, 4294901760
  %1607 = vmatpush.msra.mxu0 %v1606
  %v1608 = vand.u32 %v45, 4294901760
  %v1609 = vsub.f32 %v45, %v1608
  %v1610 = vand.u32 %v1609, 4294901760
  %v1611 = vsub.f32 %v1609, %v1610
  %v1612 = vand.u32 %v1611, 4294901760
  %1613 = vmatpush.msra.mxu0 %v1612
  %v1614 = vand.u32 %v1475, 4294901760
  %1615 = vmatmul.f32.gmra.mxu0 %v1614
  %v1616 = vpop.f32.mrf.mxu0
  %v1617 = vadd.f32 %v1516, %v1616
  %1618 = vdwg.mxu0
  %v1619 = vand.u32 %v60, 4294901760
  %v1620 = vsub.f32 %v60, %v1619
  %1621 = vmatpush.msra.mxu0 %v1620
  %v1622 = vand.u32 %v59, 4294901760
  %v1623 = vsub.f32 %v59, %v1622
  %1624 = vmatpush.msra.mxu0 %v1623
  %v1625 = vand.u32 %v58, 4294901760
  %v1626 = vsub.f32 %v58, %v1625
  %1627 = vmatpush.msra.mxu0 %v1626
  %v1628 = vand.u32 %v57, 4294901760
  %v1629 = vsub.f32 %v57, %v1628
  %1630 = vmatpush.msra.mxu0 %v1629
  %v1631 = vand.u32 %v56, 4294901760
  %v1632 = vsub.f32 %v56, %v1631
  %1633 = vmatpush.msra.mxu0 %v1632
  %v1634 = vand.u32 %v55, 4294901760
  %v1635 = vsub.f32 %v55, %v1634
  %1636 = vmatpush.msra.mxu0 %v1635
  %v1637 = vand.u32 %v54, 4294901760
  %v1638 = vsub.f32 %v54, %v1637
  %1639 = vmatpush.msra.mxu0 %v1638
  %v1640 = vand.u32 %v53, 4294901760
  %v1641 = vsub.f32 %v53, %v1640
  %1642 = vmatpush.msra.mxu0 %v1641
  %v1643 = vand.u32 %v52, 4294901760
  %v1644 = vsub.f32 %v52, %v1643
  %1645 = vmatpush.msra.mxu0 %v1644
  %v1646 = vand.u32 %v51, 4294901760
  %v1647 = vsub.f32 %v51, %v1646
  %1648 = vmatpush.msra.mxu0 %v1647
  %v1649 = vand.u32 %v50, 4294901760
  %v1650 = vsub.f32 %v50, %v1649
  %1651 = vmatpush.msra.mxu0 %v1650
  %v1652 = vand.u32 %v49, 4294901760
  %v1653 = vsub.f32 %v49, %v1652
  %1654 = vmatpush.msra.mxu0 %v1653
  %v1655 = vand.u32 %v48, 4294901760
  %v1656 = vsub.f32 %v48, %v1655
  %1657 = vmatpush.msra.mxu0 %v1656
  %v1658 = vand.u32 %v47, 4294901760
  %v1659 = vsub.f32 %v47, %v1658
  %1660 = vmatpush.msra.mxu0 %v1659
  %v1661 = vand.u32 %v46, 4294901760
  %v1662 = vsub.f32 %v46, %v1661
  %1663 = vmatpush.msra.mxu0 %v1662
  %v1664 = vand.u32 %v45, 4294901760
  %v1665 = vsub.f32 %v45, %v1664
  %1666 = vmatpush.msra.mxu0 %v1665
  %v1667 = vand.u32 %v1475, 4294901760
  %v1668 = vsub.f32 %v1475, %v1667
  %1669 = vmatmul.f32.gmra.mxu0 %v1668
  %v1670 = vpop.f32.mrf.mxu0
  %v1671 = vadd.f32 %v1617, %v1670
  %1672 = vdwg.mxu0
  %v1673 = vand.u32 %v60, 4294901760
  %1674 = vmatpush.msra.mxu0 %v1673
  %v1675 = vand.u32 %v59, 4294901760
  %1676 = vmatpush.msra.mxu0 %v1675
  %v1677 = vand.u32 %v58, 4294901760
  %1678 = vmatpush.msra.mxu0 %v1677
  %v1679 = vand.u32 %v57, 4294901760
  %1680 = vmatpush.msra.mxu0 %v1679
  %v1681 = vand.u32 %v56, 4294901760
  %1682 = vmatpush.msra.mxu0 %v1681
  %v1683 = vand.u32 %v55, 4294901760
  %1684 = vmatpush.msra.mxu0 %v1683
  %v1685 = vand.u32 %v54, 4294901760
  %1686 = vmatpush.msra.mxu0 %v1685
  %v1687 = vand.u32 %v53, 4294901760
  %1688 = vmatpush.msra.mxu0 %v1687
  %v1689 = vand.u32 %v52, 4294901760
  %1690 = vmatpush.msra.mxu0 %v1689
  %v1691 = vand.u32 %v51, 4294901760
  %1692 = vmatpush.msra.mxu0 %v1691
  %v1693 = vand.u32 %v50, 4294901760
  %1694 = vmatpush.msra.mxu0 %v1693
  %v1695 = vand.u32 %v49, 4294901760
  %1696 = vmatpush.msra.mxu0 %v1695
  %v1697 = vand.u32 %v48, 4294901760
  %1698 = vmatpush.msra.mxu0 %v1697
  %v1699 = vand.u32 %v47, 4294901760
  %1700 = vmatpush.msra.mxu0 %v1699
  %v1701 = vand.u32 %v46, 4294901760
  %1702 = vmatpush.msra.mxu0 %v1701
  %v1703 = vand.u32 %v45, 4294901760
  %1704 = vmatpush.msra.mxu0 %v1703
  %v1705 = vand.u32 %v1475, 4294901760
  %v1706 = vsub.f32 %v1475, %v1705
  %v1707 = vand.u32 %v1706, 4294901760
  %1708 = vmatmul.f32.gmra.mxu0 %v1707
  %v1709 = vpop.f32.mrf.mxu0
  %v1710 = vadd.f32 %v1671, %v1709
  %1711 = vdwg.mxu0
  %v1712 = vand.u32 %v60, 4294901760
  %v1713 = vsub.f32 %v60, %v1712
  %v1714 = vand.u32 %v1713, 4294901760
  %1715 = vmatpush.msra.mxu0 %v1714
  %v1716 = vand.u32 %v59, 4294901760
  %v1717 = vsub.f32 %v59, %v1716
  %v1718 = vand.u32 %v1717, 4294901760
  %1719 = vmatpush.msra.mxu0 %v1718
  %v1720 = vand.u32 %v58, 4294901760
  %v1721 = vsub.f32 %v58, %v1720
  %v1722 = vand.u32 %v1721, 4294901760
  %1723 = vmatpush.msra.mxu0 %v1722
  %v1724 = vand.u32 %v57, 4294901760
  %v1725 = vsub.f32 %v57, %v1724
  %v1726 = vand.u32 %v1725, 4294901760
  %1727 = vmatpush.msra.mxu0 %v1726
  %v1728 = vand.u32 %v56, 4294901760
  %v1729 = vsub.f32 %v56, %v1728
  %v1730 = vand.u32 %v1729, 4294901760
  %1731 = vmatpush.msra.mxu0 %v1730
  %v1732 = vand.u32 %v55, 4294901760
  %v1733 = vsub.f32 %v55, %v1732
  %v1734 = vand.u32 %v1733, 4294901760
  %1735 = vmatpush.msra.mxu0 %v1734
  %v1736 = vand.u32 %v54, 4294901760
  %v1737 = vsub.f32 %v54, %v1736
  %v1738 = vand.u32 %v1737, 4294901760
  %1739 = vmatpush.msra.mxu0 %v1738
  %v1740 = vand.u32 %v53, 4294901760
  %v1741 = vsub.f32 %v53, %v1740
  %v1742 = vand.u32 %v1741, 4294901760
  %1743 = vmatpush.msra.mxu0 %v1742
  %v1744 = vand.u32 %v52, 4294901760
  %v1745 = vsub.f32 %v52, %v1744
  %v1746 = vand.u32 %v1745, 4294901760
  %1747 = vmatpush.msra.mxu0 %v1746
  %v1748 = vand.u32 %v51, 4294901760
  %v1749 = vsub.f32 %v51, %v1748
  %v1750 = vand.u32 %v1749, 4294901760
  %1751 = vmatpush.msra.mxu0 %v1750
  %v1752 = vand.u32 %v50, 4294901760
  %v1753 = vsub.f32 %v50, %v1752
  %v1754 = vand.u32 %v1753, 4294901760
  %1755 = vmatpush.msra.mxu0 %v1754
  %v1756 = vand.u32 %v49, 4294901760
  %v1757 = vsub.f32 %v49, %v1756
  %v1758 = vand.u32 %v1757, 4294901760
  %1759 = vmatpush.msra.mxu0 %v1758
  %v1760 = vand.u32 %v48, 4294901760
  %v1761 = vsub.f32 %v48, %v1760
  %v1762 = vand.u32 %v1761, 4294901760
  %1763 = vmatpush.msra.mxu0 %v1762
  %v1764 = vand.u32 %v47, 4294901760
  %v1765 = vsub.f32 %v47, %v1764
  %v1766 = vand.u32 %v1765, 4294901760
  %1767 = vmatpush.msra.mxu0 %v1766
  %v1768 = vand.u32 %v46, 4294901760
  %v1769 = vsub.f32 %v46, %v1768
  %v1770 = vand.u32 %v1769, 4294901760
  %1771 = vmatpush.msra.mxu0 %v1770
  %v1772 = vand.u32 %v45, 4294901760
  %v1773 = vsub.f32 %v45, %v1772
  %v1774 = vand.u32 %v1773, 4294901760
  %1775 = vmatpush.msra.mxu0 %v1774
  %v1776 = vand.u32 %v1475, 4294901760
  %1777 = vmatmul.f32.gmra.mxu0 %v1776
  %v1778 = vpop.f32.mrf.mxu0
  %v1779 = vadd.f32 %v1710, %v1778
  %1780 = vdwg.mxu0
  %v1781 = vand.u32 %v60, 4294901760
  %1782 = vmatpush.msra.mxu0 %v1781
  %v1783 = vand.u32 %v59, 4294901760
  %1784 = vmatpush.msra.mxu0 %v1783
  %v1785 = vand.u32 %v58, 4294901760
  %1786 = vmatpush.msra.mxu0 %v1785
  %v1787 = vand.u32 %v57, 4294901760
  %1788 = vmatpush.msra.mxu0 %v1787
  %v1789 = vand.u32 %v56, 4294901760
  %1790 = vmatpush.msra.mxu0 %v1789
  %v1791 = vand.u32 %v55, 4294901760
  %1792 = vmatpush.msra.mxu0 %v1791
  %v1793 = vand.u32 %v54, 4294901760
  %1794 = vmatpush.msra.mxu0 %v1793
  %v1795 = vand.u32 %v53, 4294901760
  %1796 = vmatpush.msra.mxu0 %v1795
  %v1797 = vand.u32 %v52, 4294901760
  %1798 = vmatpush.msra.mxu0 %v1797
  %v1799 = vand.u32 %v51, 4294901760
  %1800 = vmatpush.msra.mxu0 %v1799
  %v1801 = vand.u32 %v50, 4294901760
  %1802 = vmatpush.msra.mxu0 %v1801
  %v1803 = vand.u32 %v49, 4294901760
  %1804 = vmatpush.msra.mxu0 %v1803
  %v1805 = vand.u32 %v48, 4294901760
  %1806 = vmatpush.msra.mxu0 %v1805
  %v1807 = vand.u32 %v47, 4294901760
  %1808 = vmatpush.msra.mxu0 %v1807
  %v1809 = vand.u32 %v46, 4294901760
  %1810 = vmatpush.msra.mxu0 %v1809
  %v1811 = vand.u32 %v45, 4294901760
  %1812 = vmatpush.msra.mxu0 %v1811
  %v1813 = vand.u32 %v1475, 4294901760
  %1814 = vmatmul.f32.gmra.mxu0 %v1813
  %v1815 = vpop.f32.mrf.mxu0
  %v1816 = vadd.f32 %v1779, %v1815
  %1817 = vdwg.mxu0
  %v1818 = vmul.f32 %v1475, %v1475
  %v1819 = vand.u32 %v60, 4294901760
  %1820 = vmatpush.msra.mxu0 %v1819
  %v1821 = vand.u32 %v59, 4294901760
  %1822 = vmatpush.msra.mxu0 %v1821
  %v1823 = vand.u32 %v58, 4294901760
  %1824 = vmatpush.msra.mxu0 %v1823
  %v1825 = vand.u32 %v57, 4294901760
  %1826 = vmatpush.msra.mxu0 %v1825
  %v1827 = vand.u32 %v56, 4294901760
  %1828 = vmatpush.msra.mxu0 %v1827
  %v1829 = vand.u32 %v55, 4294901760
  %1830 = vmatpush.msra.mxu0 %v1829
  %v1831 = vand.u32 %v54, 4294901760
  %1832 = vmatpush.msra.mxu0 %v1831
  %v1833 = vand.u32 %v53, 4294901760
  %1834 = vmatpush.msra.mxu0 %v1833
  %v1835 = vand.u32 %v52, 4294901760
  %1836 = vmatpush.msra.mxu0 %v1835
  %v1837 = vand.u32 %v51, 4294901760
  %1838 = vmatpush.msra.mxu0 %v1837
  %v1839 = vand.u32 %v50, 4294901760
  %1840 = vmatpush.msra.mxu0 %v1839
  %v1841 = vand.u32 %v49, 4294901760
  %1842 = vmatpush.msra.mxu0 %v1841
  %v1843 = vand.u32 %v48, 4294901760
  %1844 = vmatpush.msra.mxu0 %v1843
  %v1845 = vand.u32 %v47, 4294901760
  %1846 = vmatpush.msra.mxu0 %v1845
  %v1847 = vand.u32 %v46, 4294901760
  %1848 = vmatpush.msra.mxu0 %v1847
  %v1849 = vand.u32 %v45, 4294901760
  %1850 = vmatpush.msra.mxu0 %v1849
  %v1851 = vand.u32 %v1818, 4294901760
  %v1852 = vsub.f32 %v1818, %v1851
  %v1853 = vand.u32 %v1852, 4294901760
  %v1854 = vsub.f32 %v1852, %v1853
  %v1855 = vand.u32 %v1854, 4294901760
  %1856 = vmatmul.f32.gmra.mxu0 %v1855
  %v1857 = vpop.f32.mrf.mxu0
  %v1858 = vadd.f32 0.0, %v1857
  %1859 = vdwg.mxu0
  %v1860 = vand.u32 %v60, 4294901760
  %v1861 = vsub.f32 %v60, %v1860
  %v1862 = vand.u32 %v1861, 4294901760
  %v1863 = vsub.f32 %v1861, %v1862
  %v1864 = vand.u32 %v1863, 4294901760
  %1865 = vmatpush.msra.mxu0 %v1864
  %v1866 = vand.u32 %v59, 4294901760
  %v1867 = vsub.f32 %v59, %v1866
  %v1868 = vand.u32 %v1867, 4294901760
  %v1869 = vsub.f32 %v1867, %v1868
  %v1870 = vand.u32 %v1869, 4294901760
  %1871 = vmatpush.msra.mxu0 %v1870
  %v1872 = vand.u32 %v58, 4294901760
  %v1873 = vsub.f32 %v58, %v1872
  %v1874 = vand.u32 %v1873, 4294901760
  %v1875 = vsub.f32 %v1873, %v1874
  %v1876 = vand.u32 %v1875, 4294901760
  %1877 = vmatpush.msra.mxu0 %v1876
  %v1878 = vand.u32 %v57, 4294901760
  %v1879 = vsub.f32 %v57, %v1878
  %v1880 = vand.u32 %v1879, 4294901760
  %v1881 = vsub.f32 %v1879, %v1880
  %v1882 = vand.u32 %v1881, 4294901760
  %1883 = vmatpush.msra.mxu0 %v1882
  %v1884 = vand.u32 %v56, 4294901760
  %v1885 = vsub.f32 %v56, %v1884
  %v1886 = vand.u32 %v1885, 4294901760
  %v1887 = vsub.f32 %v1885, %v1886
  %v1888 = vand.u32 %v1887, 4294901760
  %1889 = vmatpush.msra.mxu0 %v1888
  %v1890 = vand.u32 %v55, 4294901760
  %v1891 = vsub.f32 %v55, %v1890
  %v1892 = vand.u32 %v1891, 4294901760
  %v1893 = vsub.f32 %v1891, %v1892
  %v1894 = vand.u32 %v1893, 4294901760
  %1895 = vmatpush.msra.mxu0 %v1894
  %v1896 = vand.u32 %v54, 4294901760
  %v1897 = vsub.f32 %v54, %v1896
  %v1898 = vand.u32 %v1897, 4294901760
  %v1899 = vsub.f32 %v1897, %v1898
  %v1900 = vand.u32 %v1899, 4294901760
  %1901 = vmatpush.msra.mxu0 %v1900
  %v1902 = vand.u32 %v53, 4294901760
  %v1903 = vsub.f32 %v53, %v1902
  %v1904 = vand.u32 %v1903, 4294901760
  %v1905 = vsub.f32 %v1903, %v1904
  %v1906 = vand.u32 %v1905, 4294901760
  %1907 = vmatpush.msra.mxu0 %v1906
  %v1908 = vand.u32 %v52, 4294901760
  %v1909 = vsub.f32 %v52, %v1908
  %v1910 = vand.u32 %v1909, 4294901760
  %v1911 = vsub.f32 %v1909, %v1910
  %v1912 = vand.u32 %v1911, 4294901760
  %1913 = vmatpush.msra.mxu0 %v1912
  %v1914 = vand.u32 %v51, 4294901760
  %v1915 = vsub.f32 %v51, %v1914
  %v1916 = vand.u32 %v1915, 4294901760
  %v1917 = vsub.f32 %v1915, %v1916
  %v1918 = vand.u32 %v1917, 4294901760
  %1919 = vmatpush.msra.mxu0 %v1918
  %v1920 = vand.u32 %v50, 4294901760
  %v1921 = vsub.f32 %v50, %v1920
  %v1922 = vand.u32 %v1921, 4294901760
  %v1923 = vsub.f32 %v1921, %v1922
  %v1924 = vand.u32 %v1923, 4294901760
  %1925 = vmatpush.msra.mxu0 %v1924
  %v1926 = vand.u32 %v49, 4294901760
  %v1927 = vsub.f32 %v49, %v1926
  %v1928 = vand.u32 %v1927, 4294901760
  %v1929 = vsub.f32 %v1927, %v1928
  %v1930 = vand.u32 %v1929, 4294901760
  %1931 = vmatpush.msra.mxu0 %v1930
  %v1932 = vand.u32 %v48, 4294901760
  %v1933 = vsub.f32 %v48, %v1932
  %v1934 = vand.u32 %v1933, 4294901760
  %v1935 = vsub.f32 %v1933, %v1934
  %v1936 = vand.u32 %v1935, 4294901760
  %1937 = vmatpush.msra.mxu0 %v1936
  %v1938 = vand.u32 %v47, 4294901760
  %v1939 = vsub.f32 %v47, %v1938
  %v1940 = vand.u32 %v1939, 4294901760
  %v1941 = vsub.f32 %v1939, %v1940
  %v1942 = vand.u32 %v1941, 4294901760
  %1943 = vmatpush.msra.mxu0 %v1942
  %v1944 = vand.u32 %v46, 4294901760
  %v1945 = vsub.f32 %v46, %v1944
  %v1946 = vand.u32 %v1945, 4294901760
  %v1947 = vsub.f32 %v1945, %v1946
  %v1948 = vand.u32 %v1947, 4294901760
  %1949 = vmatpush.msra.mxu0 %v1948
  %v1950 = vand.u32 %v45, 4294901760
  %v1951 = vsub.f32 %v45, %v1950
  %v1952 = vand.u32 %v1951, 4294901760
  %v1953 = vsub.f32 %v1951, %v1952
  %v1954 = vand.u32 %v1953, 4294901760
  %1955 = vmatpush.msra.mxu0 %v1954
  %v1956 = vand.u32 %v1818, 4294901760
  %1957 = vmatmul.f32.gmra.mxu0 %v1956
  %v1958 = vpop.f32.mrf.mxu0
  %v1959 = vadd.f32 %v1858, %v1958
  %1960 = vdwg.mxu0
  %v1961 = vand.u32 %v60, 4294901760
  %v1962 = vsub.f32 %v60, %v1961
  %1963 = vmatpush.msra.mxu0 %v1962
  %v1964 = vand.u32 %v59, 4294901760
  %v1965 = vsub.f32 %v59, %v1964
  %1966 = vmatpush.msra.mxu0 %v1965
  %v1967 = vand.u32 %v58, 4294901760
  %v1968 = vsub.f32 %v58, %v1967
  %1969 = vmatpush.msra.mxu0 %v1968
  %v1970 = vand.u32 %v57, 4294901760
  %v1971 = vsub.f32 %v57, %v1970
  %1972 = vmatpush.msra.mxu0 %v1971
  %v1973 = vand.u32 %v56, 4294901760
  %v1974 = vsub.f32 %v56, %v1973
  %1975 = vmatpush.msra.mxu0 %v1974
  %v1976 = vand.u32 %v55, 4294901760
  %v1977 = vsub.f32 %v55, %v1976
  %1978 = vmatpush.msra.mxu0 %v1977
  %v1979 = vand.u32 %v54, 4294901760
  %v1980 = vsub.f32 %v54, %v1979
  %1981 = vmatpush.msra.mxu0 %v1980
  %v1982 = vand.u32 %v53, 4294901760
  %v1983 = vsub.f32 %v53, %v1982
  %1984 = vmatpush.msra.mxu0 %v1983
  %v1985 = vand.u32 %v52, 4294901760
  %v1986 = vsub.f32 %v52, %v1985
  %1987 = vmatpush.msra.mxu0 %v1986
  %v1988 = vand.u32 %v51, 4294901760
  %v1989 = vsub.f32 %v51, %v1988
  %1990 = vmatpush.msra.mxu0 %v1989
  %v1991 = vand.u32 %v50, 4294901760
  %v1992 = vsub.f32 %v50, %v1991
  %1993 = vmatpush.msra.mxu0 %v1992
  %v1994 = vand.u32 %v49, 4294901760
  %v1995 = vsub.f32 %v49, %v1994
  %1996 = vmatpush.msra.mxu0 %v1995
  %v1997 = vand.u32 %v48, 4294901760
  %v1998 = vsub.f32 %v48, %v1997
  %1999 = vmatpush.msra.mxu0 %v1998
  %v2000 = vand.u32 %v47, 4294901760
  %v2001 = vsub.f32 %v47, %v2000
  %2002 = vmatpush.msra.mxu0 %v2001
  %v2003 = vand.u32 %v46, 4294901760
  %v2004 = vsub.f32 %v46, %v2003
  %2005 = vmatpush.msra.mxu0 %v2004
  %v2006 = vand.u32 %v45, 4294901760
  %v2007 = vsub.f32 %v45, %v2006
  %2008 = vmatpush.msra.mxu0 %v2007
  %v2009 = vand.u32 %v1818, 4294901760
  %v2010 = vsub.f32 %v1818, %v2009
  %2011 = vmatmul.f32.gmra.mxu0 %v2010
  %v2012 = vpop.f32.mrf.mxu0
  %v2013 = vadd.f32 %v1959, %v2012
  %2014 = vdwg.mxu0
  %v2015 = vand.u32 %v60, 4294901760
  %2016 = vmatpush.msra.mxu0 %v2015
  %v2017 = vand.u32 %v59, 4294901760
  %2018 = vmatpush.msra.mxu0 %v2017
  %v2019 = vand.u32 %v58, 4294901760
  %2020 = vmatpush.msra.mxu0 %v2019
  %v2021 = vand.u32 %v57, 4294901760
  %2022 = vmatpush.msra.mxu0 %v2021
  %v2023 = vand.u32 %v56, 4294901760
  %2024 = vmatpush.msra.mxu0 %v2023
  %v2025 = vand.u32 %v55, 4294901760
  %2026 = vmatpush.msra.mxu0 %v2025
  %v2027 = vand.u32 %v54, 4294901760
  %2028 = vmatpush.msra.mxu0 %v2027
  %v2029 = vand.u32 %v53, 4294901760
  %2030 = vmatpush.msra.mxu0 %v2029
  %v2031 = vand.u32 %v52, 4294901760
  %2032 = vmatpush.msra.mxu0 %v2031
  %v2033 = vand.u32 %v51, 4294901760
  %2034 = vmatpush.msra.mxu0 %v2033
  %v2035 = vand.u32 %v50, 4294901760
  %2036 = vmatpush.msra.mxu0 %v2035
  %v2037 = vand.u32 %v49, 4294901760
  %2038 = vmatpush.msra.mxu0 %v2037
  %v2039 = vand.u32 %v48, 4294901760
  %2040 = vmatpush.msra.mxu0 %v2039
  %v2041 = vand.u32 %v47, 4294901760
  %2042 = vmatpush.msra.mxu0 %v2041
  %v2043 = vand.u32 %v46, 4294901760
  %2044 = vmatpush.msra.mxu0 %v2043
  %v2045 = vand.u32 %v45, 4294901760
  %2046 = vmatpush.msra.mxu0 %v2045
  %v2047 = vand.u32 %v1818, 4294901760
  %v2048 = vsub.f32 %v1818, %v2047
  %v2049 = vand.u32 %v2048, 4294901760
  %2050 = vmatmul.f32.gmra.mxu0 %v2049
  %v2051 = vpop.f32.mrf.mxu0
  %v2052 = vadd.f32 %v2013, %v2051
  %2053 = vdwg.mxu0
  %v2054 = vand.u32 %v60, 4294901760
  %v2055 = vsub.f32 %v60, %v2054
  %v2056 = vand.u32 %v2055, 4294901760
  %2057 = vmatpush.msra.mxu0 %v2056
  %v2058 = vand.u32 %v59, 4294901760
  %v2059 = vsub.f32 %v59, %v2058
  %v2060 = vand.u32 %v2059, 4294901760
  %2061 = vmatpush.msra.mxu0 %v2060
  %v2062 = vand.u32 %v58, 4294901760
  %v2063 = vsub.f32 %v58, %v2062
  %v2064 = vand.u32 %v2063, 4294901760
  %2065 = vmatpush.msra.mxu0 %v2064
  %v2066 = vand.u32 %v57, 4294901760
  %v2067 = vsub.f32 %v57, %v2066
  %v2068 = vand.u32 %v2067, 4294901760
  %2069 = vmatpush.msra.mxu0 %v2068
  %v2070 = vand.u32 %v56, 4294901760
  %v2071 = vsub.f32 %v56, %v2070
  %v2072 = vand.u32 %v2071, 4294901760
  %2073 = vmatpush.msra.mxu0 %v2072
  %v2074 = vand.u32 %v55, 4294901760
  %v2075 = vsub.f32 %v55, %v2074
  %v2076 = vand.u32 %v2075, 4294901760
  %2077 = vmatpush.msra.mxu0 %v2076
  %v2078 = vand.u32 %v54, 4294901760
  %v2079 = vsub.f32 %v54, %v2078
  %v2080 = vand.u32 %v2079, 4294901760
  %2081 = vmatpush.msra.mxu0 %v2080
  %v2082 = vand.u32 %v53, 4294901760
  %v2083 = vsub.f32 %v53, %v2082
  %v2084 = vand.u32 %v2083, 4294901760
  %2085 = vmatpush.msra.mxu0 %v2084
  %v2086 = vand.u32 %v52, 4294901760
  %v2087 = vsub.f32 %v52, %v2086
  %v2088 = vand.u32 %v2087, 4294901760
  %2089 = vmatpush.msra.mxu0 %v2088
  %v2090 = vand.u32 %v51, 4294901760
  %v2091 = vsub.f32 %v51, %v2090
  %v2092 = vand.u32 %v2091, 4294901760
  %2093 = vmatpush.msra.mxu0 %v2092
  %v2094 = vand.u32 %v50, 4294901760
  %v2095 = vsub.f32 %v50, %v2094
  %v2096 = vand.u32 %v2095, 4294901760
  %2097 = vmatpush.msra.mxu0 %v2096
  %v2098 = vand.u32 %v49, 4294901760
  %v2099 = vsub.f32 %v49, %v2098
  %v2100 = vand.u32 %v2099, 4294901760
  %2101 = vmatpush.msra.mxu0 %v2100
  %v2102 = vand.u32 %v48, 4294901760
  %v2103 = vsub.f32 %v48, %v2102
  %v2104 = vand.u32 %v2103, 4294901760
  %2105 = vmatpush.msra.mxu0 %v2104
  %v2106 = vand.u32 %v47, 4294901760
  %v2107 = vsub.f32 %v47, %v2106
  %v2108 = vand.u32 %v2107, 4294901760
  %2109 = vmatpush.msra.mxu0 %v2108
  %v2110 = vand.u32 %v46, 4294901760
  %v2111 = vsub.f32 %v46, %v2110
  %v2112 = vand.u32 %v2111, 4294901760
  %2113 = vmatpush.msra.mxu0 %v2112
  %v2114 = vand.u32 %v45, 4294901760
  %v2115 = vsub.f32 %v45, %v2114
  %v2116 = vand.u32 %v2115, 4294901760
  %2117 = vmatpush.msra.mxu0 %v2116
  %v2118 = vand.u32 %v1818, 4294901760
  %2119 = vmatmul.f32.gmra.mxu0 %v2118
  %v2120 = vpop.f32.mrf.mxu0
  %v2121 = vadd.f32 %v2052, %v2120
  %2122 = vdwg.mxu0
  %v2123 = vand.u32 %v60, 4294901760
  %2124 = vmatpush.msra.mxu0 %v2123
  %v2125 = vand.u32 %v59, 4294901760
  %2126 = vmatpush.msra.mxu0 %v2125
  %v2127 = vand.u32 %v58, 4294901760
  %2128 = vmatpush.msra.mxu0 %v2127
  %v2129 = vand.u32 %v57, 4294901760
  %2130 = vmatpush.msra.mxu0 %v2129
  %v2131 = vand.u32 %v56, 4294901760
  %2132 = vmatpush.msra.mxu0 %v2131
  %v2133 = vand.u32 %v55, 4294901760
  %2134 = vmatpush.msra.mxu0 %v2133
  %v2135 = vand.u32 %v54, 4294901760
  %2136 = vmatpush.msra.mxu0 %v2135
  %v2137 = vand.u32 %v53, 4294901760
  %2138 = vmatpush.msra.mxu0 %v2137
  %v2139 = vand.u32 %v52, 4294901760
  %2140 = vmatpush.msra.mxu0 %v2139
  %v2141 = vand.u32 %v51, 4294901760
  %2142 = vmatpush.msra.mxu0 %v2141
  %v2143 = vand.u32 %v50, 4294901760
  %2144 = vmatpush.msra.mxu0 %v2143
  %v2145 = vand.u32 %v49, 4294901760
  %2146 = vmatpush.msra.mxu0 %v2145
  %v2147 = vand.u32 %v48, 4294901760
  %2148 = vmatpush.msra.mxu0 %v2147
  %v2149 = vand.u32 %v47, 4294901760
  %2150 = vmatpush.msra.mxu0 %v2149
  %v2151 = vand.u32 %v46, 4294901760
  %2152 = vmatpush.msra.mxu0 %v2151
  %v2153 = vand.u32 %v45, 4294901760
  %2154 = vmatpush.msra.mxu0 %v2153
  %v2155 = vand.u32 %v1818, 4294901760
  %2156 = vmatmul.f32.gmra.mxu0 %v2155
  %v2157 = vpop.f32.mrf.mxu0
  %v2158 = vadd.f32 %v2121, %v2157
  %2159 = vdwg.mxu0
  %v2160 = vsel %vm938, %v1816, 0.0
  %v2161 = vrot.slane %v2160, 4
  %v2162 = vadd.f32 %v2160, %v2161
  %v2163 = vrot.slane %v2162, 2
  %v2164 = vadd.f32 %v2162, %v2163
  %v2165 = vrot.slane %v2164, 1
  %v2166 = vadd.f32 %v2164, %v2165
  %v2167 = vmul.f32 %v2166, 0.00390625
  %v2168 = vsel %vm938, %v2158, 0.0
  %v2169 = vrot.slane %v2168, 4
  %v2170 = vadd.f32 %v2168, %v2169
  %v2171 = vrot.slane %v2170, 2
  %v2172 = vadd.f32 %v2170, %v2171
  %v2173 = vrot.slane %v2172, 1
  %v2174 = vadd.f32 %v2172, %v2173
  %v2175 = vmul.f32 %v2174, 0.00390625
  %v2176 = vmul.f32 %v2167, %v2167
  %v2177 = vsub.f32 %v2175, %v2176
  %v2178 = vmax.f32 %v2177, 0.0
  %v2179 = vadd.f32 %v2178, 1e-05
  %v2180 = vrsqrt.pop %v2179
  %v2181 = vmul.f32 %v2180, %v2179
  %v2182 = vmul.f32 %v2181, %v2180
  %v2183 = vmul.f32 0.5, %v2182
  %v2184 = vsub.f32 1.5, %v2183
  %v2185 = vmul.f32 %v2180, %v2184
  %vm2186 = vweird.f32 %v2179
  %vm2187 = vweird.f32 %v2180
  %vm2188 = vmor %vm2186, %vm2187
  %v2189 = vsel %vm2188, %v2180, %v2185
  %v2191 = vsel %vm938, %v2167, 0
  %2193 = vmatpush.msra.mxu0 0.0
  %2194 = vmatpush.msra.mxu0 0.0
  %2195 = vmatpush.msra.mxu0 0.0
  %2196 = vmatpush.msra.mxu0 0.0
  %2197 = vmatpush.msra.mxu0 0.0
  %2198 = vmatpush.msra.mxu0 0.0
  %2199 = vmatpush.msra.mxu0 0.0
  %2200 = vmatpush.msra.mxu0 0.0
  %2201 = vmatpush.msra.mxu0 0.0
  %2202 = vmatpush.msra.mxu0 0.0
  %2203 = vmatpush.msra.mxu0 0.0
  %2204 = vmatpush.msra.mxu0 0.0
  %2205 = vmatpush.msra.mxu0 0.0
  %2206 = vmatpush.msra.mxu0 0.0
  %2207 = vmatpush.msra.mxu0 0.0
  %v2208 = vand.u32 %v61, 4294901760
  %2209 = vmatpush.msra.mxu0 %v2208
  %v2210 = vand.u32 %v2191, 4294901760
  %v2211 = vsub.f32 %v2191, %v2210
  %v2212 = vand.u32 %v2211, 4294901760
  %v2213 = vsub.f32 %v2211, %v2212
  %v2214 = vand.u32 %v2213, 4294901760
  %2215 = vmatmul.f32.gmra.mxu0 %v2214
  %v2216 = vpop.f32.mrf.mxu0
  %v2217 = vadd.f32 0.0, %v2216
  %2218 = vdwg.mxu0
  %2219 = vmatpush.msra.mxu0 0.0
  %2220 = vmatpush.msra.mxu0 0.0
  %2221 = vmatpush.msra.mxu0 0.0
  %2222 = vmatpush.msra.mxu0 0.0
  %2223 = vmatpush.msra.mxu0 0.0
  %2224 = vmatpush.msra.mxu0 0.0
  %2225 = vmatpush.msra.mxu0 0.0
  %2226 = vmatpush.msra.mxu0 0.0
  %2227 = vmatpush.msra.mxu0 0.0
  %2228 = vmatpush.msra.mxu0 0.0
  %2229 = vmatpush.msra.mxu0 0.0
  %2230 = vmatpush.msra.mxu0 0.0
  %2231 = vmatpush.msra.mxu0 0.0
  %2232 = vmatpush.msra.mxu0 0.0
  %2233 = vmatpush.msra.mxu0 0.0
  %v2234 = vand.u32 %v61, 4294901760
  %v2235 = vsub.f32 %v61, %v2234
  %v2236 = vand.u32 %v2235, 4294901760
  %v2237 = vsub.f32 %v2235, %v2236
  %v2238 = vand.u32 %v2237, 4294901760
  %2239 = vmatpush.msra.mxu0 %v2238
  %v2240 = vand.u32 %v2191, 4294901760
  %2241 = vmatmul.f32.gmra.mxu0 %v2240
  %v2242 = vpop.f32.mrf.mxu0
  %v2243 = vadd.f32 %v2217, %v2242
  %2244 = vdwg.mxu0
  %2245 = vmatpush.msra.mxu0 0.0
  %2246 = vmatpush.msra.mxu0 0.0
  %2247 = vmatpush.msra.mxu0 0.0
  %2248 = vmatpush.msra.mxu0 0.0
  %2249 = vmatpush.msra.mxu0 0.0
  %2250 = vmatpush.msra.mxu0 0.0
  %2251 = vmatpush.msra.mxu0 0.0
  %2252 = vmatpush.msra.mxu0 0.0
  %2253 = vmatpush.msra.mxu0 0.0
  %2254 = vmatpush.msra.mxu0 0.0
  %2255 = vmatpush.msra.mxu0 0.0
  %2256 = vmatpush.msra.mxu0 0.0
  %2257 = vmatpush.msra.mxu0 0.0
  %2258 = vmatpush.msra.mxu0 0.0
  %2259 = vmatpush.msra.mxu0 0.0
  %v2260 = vand.u32 %v61, 4294901760
  %v2261 = vsub.f32 %v61, %v2260
  %2262 = vmatpush.msra.mxu0 %v2261
  %v2263 = vand.u32 %v2191, 4294901760
  %v2264 = vsub.f32 %v2191, %v2263
  %2265 = vmatmul.f32.gmra.mxu0 %v2264
  %v2266 = vpop.f32.mrf.mxu0
  %v2267 = vadd.f32 %v2243, %v2266
  %2268 = vdwg.mxu0
  %2269 = vmatpush.msra.mxu0 0.0
  %2270 = vmatpush.msra.mxu0 0.0
  %2271 = vmatpush.msra.mxu0 0.0
  %2272 = vmatpush.msra.mxu0 0.0
  %2273 = vmatpush.msra.mxu0 0.0
  %2274 = vmatpush.msra.mxu0 0.0
  %2275 = vmatpush.msra.mxu0 0.0
  %2276 = vmatpush.msra.mxu0 0.0
  %2277 = vmatpush.msra.mxu0 0.0
  %2278 = vmatpush.msra.mxu0 0.0
  %2279 = vmatpush.msra.mxu0 0.0
  %2280 = vmatpush.msra.mxu0 0.0
  %2281 = vmatpush.msra.mxu0 0.0
  %2282 = vmatpush.msra.mxu0 0.0
  %2283 = vmatpush.msra.mxu0 0.0
  %v2284 = vand.u32 %v61, 4294901760
  %2285 = vmatpush.msra.mxu0 %v2284
  %v2286 = vand.u32 %v2191, 4294901760
  %v2287 = vsub.f32 %v2191, %v2286
  %v2288 = vand.u32 %v2287, 4294901760
  %2289 = vmatmul.f32.gmra.mxu0 %v2288
  %v2290 = vpop.f32.mrf.mxu0
  %v2291 = vadd.f32 %v2267, %v2290
  %2292 = vdwg.mxu0
  %2293 = vmatpush.msra.mxu0 0.0
  %2294 = vmatpush.msra.mxu0 0.0
  %2295 = vmatpush.msra.mxu0 0.0
  %2296 = vmatpush.msra.mxu0 0.0
  %2297 = vmatpush.msra.mxu0 0.0
  %2298 = vmatpush.msra.mxu0 0.0
  %2299 = vmatpush.msra.mxu0 0.0
  %2300 = vmatpush.msra.mxu0 0.0
  %2301 = vmatpush.msra.mxu0 0.0
  %2302 = vmatpush.msra.mxu0 0.0
  %2303 = vmatpush.msra.mxu0 0.0
  %2304 = vmatpush.msra.mxu0 0.0
  %2305 = vmatpush.msra.mxu0 0.0
  %2306 = vmatpush.msra.mxu0 0.0
  %2307 = vmatpush.msra.mxu0 0.0
  %v2308 = vand.u32 %v61, 4294901760
  %v2309 = vsub.f32 %v61, %v2308
  %v2310 = vand.u32 %v2309, 4294901760
  %2311 = vmatpush.msra.mxu0 %v2310
  %v2312 = vand.u32 %v2191, 4294901760
  %2313 = vmatmul.f32.gmra.mxu0 %v2312
  %v2314 = vpop.f32.mrf.mxu0
  %v2315 = vadd.f32 %v2291, %v2314
  %2316 = vdwg.mxu0
  %2317 = vmatpush.msra.mxu0 0.0
  %2318 = vmatpush.msra.mxu0 0.0
  %2319 = vmatpush.msra.mxu0 0.0
  %2320 = vmatpush.msra.mxu0 0.0
  %2321 = vmatpush.msra.mxu0 0.0
  %2322 = vmatpush.msra.mxu0 0.0
  %2323 = vmatpush.msra.mxu0 0.0
  %2324 = vmatpush.msra.mxu0 0.0
  %2325 = vmatpush.msra.mxu0 0.0
  %2326 = vmatpush.msra.mxu0 0.0
  %2327 = vmatpush.msra.mxu0 0.0
  %2328 = vmatpush.msra.mxu0 0.0
  %2329 = vmatpush.msra.mxu0 0.0
  %2330 = vmatpush.msra.mxu0 0.0
  %2331 = vmatpush.msra.mxu0 0.0
  %v2332 = vand.u32 %v61, 4294901760
  %2333 = vmatpush.msra.mxu0 %v2332
  %v2334 = vand.u32 %v2191, 4294901760
  %2335 = vmatmul.f32.gmra.mxu0 %v2334
  %v2336 = vpop.f32.mrf.mxu0
  %v2337 = vadd.f32 %v2315, %v2336
  %2338 = vdwg.mxu0
  %v2340 = vsel %vm938, %v2189, 0
  %2342 = vmatpush.msra.mxu0 0.0
  %2343 = vmatpush.msra.mxu0 0.0
  %2344 = vmatpush.msra.mxu0 0.0
  %2345 = vmatpush.msra.mxu0 0.0
  %2346 = vmatpush.msra.mxu0 0.0
  %2347 = vmatpush.msra.mxu0 0.0
  %2348 = vmatpush.msra.mxu0 0.0
  %2349 = vmatpush.msra.mxu0 0.0
  %2350 = vmatpush.msra.mxu0 0.0
  %2351 = vmatpush.msra.mxu0 0.0
  %2352 = vmatpush.msra.mxu0 0.0
  %2353 = vmatpush.msra.mxu0 0.0
  %2354 = vmatpush.msra.mxu0 0.0
  %2355 = vmatpush.msra.mxu0 0.0
  %2356 = vmatpush.msra.mxu0 0.0
  %v2357 = vand.u32 %v61, 4294901760
  %2358 = vmatpush.msra.mxu0 %v2357
  %v2359 = vand.u32 %v2340, 4294901760
  %v2360 = vsub.f32 %v2340, %v2359
  %v2361 = vand.u32 %v2360, 4294901760
  %v2362 = vsub.f32 %v2360, %v2361
  %v2363 = vand.u32 %v2362, 4294901760
  %2364 = vmatmul.f32.gmra.mxu0 %v2363
  %v2365 = vpop.f32.mrf.mxu0
  %v2366 = vadd.f32 0.0, %v2365
  %2367 = vdwg.mxu0
  %2368 = vmatpush.msra.mxu0 0.0
  %2369 = vmatpush.msra.mxu0 0.0
  %2370 = vmatpush.msra.mxu0 0.0
  %2371 = vmatpush.msra.mxu0 0.0
  %2372 = vmatpush.msra.mxu0 0.0
  %2373 = vmatpush.msra.mxu0 0.0
  %2374 = vmatpush.msra.mxu0 0.0
  %2375 = vmatpush.msra.mxu0 0.0
  %2376 = vmatpush.msra.mxu0 0.0
  %2377 = vmatpush.msra.mxu0 0.0
  %2378 = vmatpush.msra.mxu0 0.0
  %2379 = vmatpush.msra.mxu0 0.0
  %2380 = vmatpush.msra.mxu0 0.0
  %2381 = vmatpush.msra.mxu0 0.0
  %2382 = vmatpush.msra.mxu0 0.0
  %v2383 = vand.u32 %v61, 4294901760
  %v2384 = vsub.f32 %v61, %v2383
  %v2385 = vand.u32 %v2384, 4294901760
  %v2386 = vsub.f32 %v2384, %v2385
  %v2387 = vand.u32 %v2386, 4294901760
  %2388 = vmatpush.msra.mxu0 %v2387
  %v2389 = vand.u32 %v2340, 4294901760
  %2390 = vmatmul.f32.gmra.mxu0 %v2389
  %v2391 = vpop.f32.mrf.mxu0
  %v2392 = vadd.f32 %v2366, %v2391
  %2393 = vdwg.mxu0
  %2394 = vmatpush.msra.mxu0 0.0
  %2395 = vmatpush.msra.mxu0 0.0
  %2396 = vmatpush.msra.mxu0 0.0
  %2397 = vmatpush.msra.mxu0 0.0
  %2398 = vmatpush.msra.mxu0 0.0
  %2399 = vmatpush.msra.mxu0 0.0
  %2400 = vmatpush.msra.mxu0 0.0
  %2401 = vmatpush.msra.mxu0 0.0
  %2402 = vmatpush.msra.mxu0 0.0
  %2403 = vmatpush.msra.mxu0 0.0
  %2404 = vmatpush.msra.mxu0 0.0
  %2405 = vmatpush.msra.mxu0 0.0
  %2406 = vmatpush.msra.mxu0 0.0
  %2407 = vmatpush.msra.mxu0 0.0
  %2408 = vmatpush.msra.mxu0 0.0
  %v2409 = vand.u32 %v61, 4294901760
  %v2410 = vsub.f32 %v61, %v2409
  %2411 = vmatpush.msra.mxu0 %v2410
  %v2412 = vand.u32 %v2340, 4294901760
  %v2413 = vsub.f32 %v2340, %v2412
  %2414 = vmatmul.f32.gmra.mxu0 %v2413
  %v2415 = vpop.f32.mrf.mxu0
  %v2416 = vadd.f32 %v2392, %v2415
  %2417 = vdwg.mxu0
  %2418 = vmatpush.msra.mxu0 0.0
  %2419 = vmatpush.msra.mxu0 0.0
  %2420 = vmatpush.msra.mxu0 0.0
  %2421 = vmatpush.msra.mxu0 0.0
  %2422 = vmatpush.msra.mxu0 0.0
  %2423 = vmatpush.msra.mxu0 0.0
  %2424 = vmatpush.msra.mxu0 0.0
  %2425 = vmatpush.msra.mxu0 0.0
  %2426 = vmatpush.msra.mxu0 0.0
  %2427 = vmatpush.msra.mxu0 0.0
  %2428 = vmatpush.msra.mxu0 0.0
  %2429 = vmatpush.msra.mxu0 0.0
  %2430 = vmatpush.msra.mxu0 0.0
  %2431 = vmatpush.msra.mxu0 0.0
  %2432 = vmatpush.msra.mxu0 0.0
  %v2433 = vand.u32 %v61, 4294901760
  %2434 = vmatpush.msra.mxu0 %v2433
  %v2435 = vand.u32 %v2340, 4294901760
  %v2436 = vsub.f32 %v2340, %v2435
  %v2437 = vand.u32 %v2436, 4294901760
  %2438 = vmatmul.f32.gmra.mxu0 %v2437
  %v2439 = vpop.f32.mrf.mxu0
  %v2440 = vadd.f32 %v2416, %v2439
  %2441 = vdwg.mxu0
  %2442 = vmatpush.msra.mxu0 0.0
  %2443 = vmatpush.msra.mxu0 0.0
  %2444 = vmatpush.msra.mxu0 0.0
  %2445 = vmatpush.msra.mxu0 0.0
  %2446 = vmatpush.msra.mxu0 0.0
  %2447 = vmatpush.msra.mxu0 0.0
  %2448 = vmatpush.msra.mxu0 0.0
  %2449 = vmatpush.msra.mxu0 0.0
  %2450 = vmatpush.msra.mxu0 0.0
  %2451 = vmatpush.msra.mxu0 0.0
  %2452 = vmatpush.msra.mxu0 0.0
  %2453 = vmatpush.msra.mxu0 0.0
  %2454 = vmatpush.msra.mxu0 0.0
  %2455 = vmatpush.msra.mxu0 0.0
  %2456 = vmatpush.msra.mxu0 0.0
  %v2457 = vand.u32 %v61, 4294901760
  %v2458 = vsub.f32 %v61, %v2457
  %v2459 = vand.u32 %v2458, 4294901760
  %2460 = vmatpush.msra.mxu0 %v2459
  %v2461 = vand.u32 %v2340, 4294901760
  %2462 = vmatmul.f32.gmra.mxu0 %v2461
  %v2463 = vpop.f32.mrf.mxu0
  %v2464 = vadd.f32 %v2440, %v2463
  %2465 = vdwg.mxu0
  %2466 = vmatpush.msra.mxu0 0.0
  %2467 = vmatpush.msra.mxu0 0.0
  %2468 = vmatpush.msra.mxu0 0.0
  %2469 = vmatpush.msra.mxu0 0.0
  %2470 = vmatpush.msra.mxu0 0.0
  %2471 = vmatpush.msra.mxu0 0.0
  %2472 = vmatpush.msra.mxu0 0.0
  %2473 = vmatpush.msra.mxu0 0.0
  %2474 = vmatpush.msra.mxu0 0.0
  %2475 = vmatpush.msra.mxu0 0.0
  %2476 = vmatpush.msra.mxu0 0.0
  %2477 = vmatpush.msra.mxu0 0.0
  %2478 = vmatpush.msra.mxu0 0.0
  %2479 = vmatpush.msra.mxu0 0.0
  %2480 = vmatpush.msra.mxu0 0.0
  %v2481 = vand.u32 %v61, 4294901760
  %2482 = vmatpush.msra.mxu0 %v2481
  %v2483 = vand.u32 %v2340, 4294901760
  %2484 = vmatmul.f32.gmra.mxu0 %v2483
  %v2485 = vpop.f32.mrf.mxu0
  %v2486 = vadd.f32 %v2464, %v2485
  %2487 = vdwg.mxu0
  %s2488 = scalar_lea.vmem %s7, 8
  %v2489 = vld [vmem:[%s2488] sm:$0xff]
  %v2490 = vperm.slane %v2337, 0
  %v2491 = vsub.f32 %v1475, %v2490
  %v2492 = vperm.slane %v2486, 0
  %v2493 = vmul.f32 %v2491, %v2492
  %2495 = vset.pattern.permute.xlu0 0
  %2496 = vperm.xlu0 %2495, %v2489
  %v2497 = vpop.permute.xlu0 %2496
  %v2499 = vmul.f32 %v2497, %v2493
  %s2500 = scalar_lea.vmem %s8, 8
  %v2501 = vld [vmem:[%s2500] sm:$0xff]
  %2503 = vset.pattern.permute.xlu0 0
  %2504 = vperm.xlu0 %2503, %v2501
  %v2505 = vpop.permute.xlu0 %2504
  %v2507 = vadd.f32 %v2499, %v2505
  %v2508 = vadd.f32 %v69, %v2507
  %v2509 = vmul.f32 %v2508, 0.5
  %v2510 = vmul.f32 %v2508, 0.044715
  %v2511 = vmul.f32 %v2510, %v2508
  %v2512 = vmul.f32 %v2511, %v2508
  %v2513 = vadd.f32 %v2508, %v2512
  %v2514 = vmul.f32 %v2513, 0.7978846
  %v2515 = vtanh.pop %v2514
  %v2516 = vadd.f32 %v2515, 1.0
  %v2517 = vmul.f32 %v2509, %v2516
  %2518 = vrot.lane.b32.xlu0 %v2517, 1
  %v2519 = vpop.permute.xlu0 %2518
  %v2520 = vmul.f32 %v2519, %v72
  %2521 = vrot.lane.b32.xlu0 %v2517, 127
  %v2522 = vpop.permute.xlu0 %2521
  %v2523 = vmul.f32 %v2522, %v76
  %s2524 = scalar_lea.vmem %s6, 16
  %v2525 = vld [vmem:[%s2524] sm:$0xff]
  %v2527 = vsel %vm79, %v2525, 0
  %2529 = vmatpush.msra.mxu0 0.0
  %2530 = vmatpush.msra.mxu0 0.0
  %2531 = vmatpush.msra.mxu0 0.0
  %2532 = vmatpush.msra.mxu0 0.0
  %2533 = vmatpush.msra.mxu0 0.0
  %2534 = vmatpush.msra.mxu0 0.0
  %2535 = vmatpush.msra.mxu0 0.0
  %2536 = vmatpush.msra.mxu0 0.0
  %2537 = vmatpush.msra.mxu0 0.0
  %2538 = vmatpush.msra.mxu0 0.0
  %2539 = vmatpush.msra.mxu0 0.0
  %2540 = vmatpush.msra.mxu0 0.0
  %2541 = vmatpush.msra.mxu0 0.0
  %v2542 = vand.u32 %v2523, 4294901760
  %2543 = vmatpush.msra.mxu0 %v2542
  %v2544 = vand.u32 %v2517, 4294901760
  %2545 = vmatpush.msra.mxu0 %v2544
  %v2546 = vand.u32 %v2520, 4294901760
  %2547 = vmatpush.msra.mxu0 %v2546
  %v2548 = vand.u32 %v2527, 4294901760
  %v2549 = vsub.f32 %v2527, %v2548
  %v2550 = vand.u32 %v2549, 4294901760
  %v2551 = vsub.f32 %v2549, %v2550
  %v2552 = vand.u32 %v2551, 4294901760
  %2553 = vmatmul.f32.gmra.mxu0 %v2552
  %v2554 = vpop.f32.mrf.mxu0
  %v2555 = vadd.f32 0.0, %v2554
  %2556 = vdwg.mxu0
  %2557 = vmatpush.msra.mxu0 0.0
  %2558 = vmatpush.msra.mxu0 0.0
  %2559 = vmatpush.msra.mxu0 0.0
  %2560 = vmatpush.msra.mxu0 0.0
  %2561 = vmatpush.msra.mxu0 0.0
  %2562 = vmatpush.msra.mxu0 0.0
  %2563 = vmatpush.msra.mxu0 0.0
  %2564 = vmatpush.msra.mxu0 0.0
  %2565 = vmatpush.msra.mxu0 0.0
  %2566 = vmatpush.msra.mxu0 0.0
  %2567 = vmatpush.msra.mxu0 0.0
  %2568 = vmatpush.msra.mxu0 0.0
  %2569 = vmatpush.msra.mxu0 0.0
  %v2570 = vand.u32 %v2523, 4294901760
  %v2571 = vsub.f32 %v2523, %v2570
  %v2572 = vand.u32 %v2571, 4294901760
  %v2573 = vsub.f32 %v2571, %v2572
  %v2574 = vand.u32 %v2573, 4294901760
  %2575 = vmatpush.msra.mxu0 %v2574
  %v2576 = vand.u32 %v2517, 4294901760
  %v2577 = vsub.f32 %v2517, %v2576
  %v2578 = vand.u32 %v2577, 4294901760
  %v2579 = vsub.f32 %v2577, %v2578
  %v2580 = vand.u32 %v2579, 4294901760
  %2581 = vmatpush.msra.mxu0 %v2580
  %v2582 = vand.u32 %v2520, 4294901760
  %v2583 = vsub.f32 %v2520, %v2582
  %v2584 = vand.u32 %v2583, 4294901760
  %v2585 = vsub.f32 %v2583, %v2584
  %v2586 = vand.u32 %v2585, 4294901760
  %2587 = vmatpush.msra.mxu0 %v2586
  %v2588 = vand.u32 %v2527, 4294901760
  %2589 = vmatmul.f32.gmra.mxu0 %v2588
  %v2590 = vpop.f32.mrf.mxu0
  %v2591 = vadd.f32 %v2555, %v2590
  %2592 = vdwg.mxu0
  %2593 = vmatpush.msra.mxu0 0.0
  %2594 = vmatpush.msra.mxu0 0.0
  %2595 = vmatpush.msra.mxu0 0.0
  %2596 = vmatpush.msra.mxu0 0.0
  %2597 = vmatpush.msra.mxu0 0.0
  %2598 = vmatpush.msra.mxu0 0.0
  %2599 = vmatpush.msra.mxu0 0.0
  %2600 = vmatpush.msra.mxu0 0.0
  %2601 = vmatpush.msra.mxu0 0.0
  %2602 = vmatpush.msra.mxu0 0.0
  %2603 = vmatpush.msra.mxu0 0.0
  %2604 = vmatpush.msra.mxu0 0.0
  %2605 = vmatpush.msra.mxu0 0.0
  %v2606 = vand.u32 %v2523, 4294901760
  %v2607 = vsub.f32 %v2523, %v2606
  %2608 = vmatpush.msra.mxu0 %v2607
  %v2609 = vand.u32 %v2517, 4294901760
  %v2610 = vsub.f32 %v2517, %v2609
  %2611 = vmatpush.msra.mxu0 %v2610
  %v2612 = vand.u32 %v2520, 4294901760
  %v2613 = vsub.f32 %v2520, %v2612
  %2614 = vmatpush.msra.mxu0 %v2613
  %v2615 = vand.u32 %v2527, 4294901760
  %v2616 = vsub.f32 %v2527, %v2615
  %2617 = vmatmul.f32.gmra.mxu0 %v2616
  %v2618 = vpop.f32.mrf.mxu0
  %v2619 = vadd.f32 %v2591, %v2618
  %2620 = vdwg.mxu0
  %2621 = vmatpush.msra.mxu0 0.0
  %2622 = vmatpush.msra.mxu0 0.0
  %2623 = vmatpush.msra.mxu0 0.0
  %2624 = vmatpush.msra.mxu0 0.0
  %2625 = vmatpush.msra.mxu0 0.0
  %2626 = vmatpush.msra.mxu0 0.0
  %2627 = vmatpush.msra.mxu0 0.0
  %2628 = vmatpush.msra.mxu0 0.0
  %2629 = vmatpush.msra.mxu0 0.0
  %2630 = vmatpush.msra.mxu0 0.0
  %2631 = vmatpush.msra.mxu0 0.0
  %2632 = vmatpush.msra.mxu0 0.0
  %2633 = vmatpush.msra.mxu0 0.0
  %v2634 = vand.u32 %v2523, 4294901760
  %2635 = vmatpush.msra.mxu0 %v2634
  %v2636 = vand.u32 %v2517, 4294901760
  %2637 = vmatpush.msra.mxu0 %v2636
  %v2638 = vand.u32 %v2520, 4294901760
  %2639 = vmatpush.msra.mxu0 %v2638
  %v2640 = vand.u32 %v2527, 4294901760
  %v2641 = vsub.f32 %v2527, %v2640
  %v2642 = vand.u32 %v2641, 4294901760
  %2643 = vmatmul.f32.gmra.mxu0 %v2642
  %v2644 = vpop.f32.mrf.mxu0
  %v2645 = vadd.f32 %v2619, %v2644
  %2646 = vdwg.mxu0
  %2647 = vmatpush.msra.mxu0 0.0
  %2648 = vmatpush.msra.mxu0 0.0
  %2649 = vmatpush.msra.mxu0 0.0
  %2650 = vmatpush.msra.mxu0 0.0
  %2651 = vmatpush.msra.mxu0 0.0
  %2652 = vmatpush.msra.mxu0 0.0
  %2653 = vmatpush.msra.mxu0 0.0
  %2654 = vmatpush.msra.mxu0 0.0
  %2655 = vmatpush.msra.mxu0 0.0
  %2656 = vmatpush.msra.mxu0 0.0
  %2657 = vmatpush.msra.mxu0 0.0
  %2658 = vmatpush.msra.mxu0 0.0
  %2659 = vmatpush.msra.mxu0 0.0
  %v2660 = vand.u32 %v2523, 4294901760
  %v2661 = vsub.f32 %v2523, %v2660
  %v2662 = vand.u32 %v2661, 4294901760
  %2663 = vmatpush.msra.mxu0 %v2662
  %v2664 = vand.u32 %v2517, 4294901760
  %v2665 = vsub.f32 %v2517, %v2664
  %v2666 = vand.u32 %v2665, 4294901760
  %2667 = vmatpush.msra.mxu0 %v2666
  %v2668 = vand.u32 %v2520, 4294901760
  %v2669 = vsub.f32 %v2520, %v2668
  %v2670 = vand.u32 %v2669, 4294901760
  %2671 = vmatpush.msra.mxu0 %v2670
  %v2672 = vand.u32 %v2527, 4294901760
  %2673 = vmatmul.f32.gmra.mxu0 %v2672
  %v2674 = vpop.f32.mrf.mxu0
  %v2675 = vadd.f32 %v2645, %v2674
  %2676 = vdwg.mxu0
  %2677 = vmatpush.msra.mxu0 0.0
  %2678 = vmatpush.msra.mxu0 0.0
  %2679 = vmatpush.msra.mxu0 0.0
  %2680 = vmatpush.msra.mxu0 0.0
  %2681 = vmatpush.msra.mxu0 0.0
  %2682 = vmatpush.msra.mxu0 0.0
  %2683 = vmatpush.msra.mxu0 0.0
  %2684 = vmatpush.msra.mxu0 0.0
  %2685 = vmatpush.msra.mxu0 0.0
  %2686 = vmatpush.msra.mxu0 0.0
  %2687 = vmatpush.msra.mxu0 0.0
  %2688 = vmatpush.msra.mxu0 0.0
  %2689 = vmatpush.msra.mxu0 0.0
  %v2690 = vand.u32 %v2523, 4294901760
  %2691 = vmatpush.msra.mxu0 %v2690
  %v2692 = vand.u32 %v2517, 4294901760
  %2693 = vmatpush.msra.mxu0 %v2692
  %v2694 = vand.u32 %v2520, 4294901760
  %2695 = vmatpush.msra.mxu0 %v2694
  %v2696 = vand.u32 %v2527, 4294901760
  %2697 = vmatmul.f32.gmra.mxu0 %v2696
  %v2698 = vpop.f32.mrf.mxu0
  %v2699 = vadd.f32 %v2675, %v2698
  %2700 = vdwg.mxu0
  %v2701 = vand.u32 %v60, 4294901760
  %2702 = vmatpush.msra.mxu0 %v2701
  %v2703 = vand.u32 %v59, 4294901760
  %2704 = vmatpush.msra.mxu0 %v2703
  %v2705 = vand.u32 %v58, 4294901760
  %2706 = vmatpush.msra.mxu0 %v2705
  %v2707 = vand.u32 %v57, 4294901760
  %2708 = vmatpush.msra.mxu0 %v2707
  %v2709 = vand.u32 %v56, 4294901760
  %2710 = vmatpush.msra.mxu0 %v2709
  %v2711 = vand.u32 %v55, 4294901760
  %2712 = vmatpush.msra.mxu0 %v2711
  %v2713 = vand.u32 %v54, 4294901760
  %2714 = vmatpush.msra.mxu0 %v2713
  %v2715 = vand.u32 %v53, 4294901760
  %2716 = vmatpush.msra.mxu0 %v2715
  %v2717 = vand.u32 %v52, 4294901760
  %2718 = vmatpush.msra.mxu0 %v2717
  %v2719 = vand.u32 %v51, 4294901760
  %2720 = vmatpush.msra.mxu0 %v2719
  %v2721 = vand.u32 %v50, 4294901760
  %2722 = vmatpush.msra.mxu0 %v2721
  %v2723 = vand.u32 %v49, 4294901760
  %2724 = vmatpush.msra.mxu0 %v2723
  %v2725 = vand.u32 %v48, 4294901760
  %2726 = vmatpush.msra.mxu0 %v2725
  %v2727 = vand.u32 %v47, 4294901760
  %2728 = vmatpush.msra.mxu0 %v2727
  %v2729 = vand.u32 %v46, 4294901760
  %2730 = vmatpush.msra.mxu0 %v2729
  %v2731 = vand.u32 %v45, 4294901760
  %2732 = vmatpush.msra.mxu0 %v2731
  %v2733 = vand.u32 %v2699, 4294901760
  %v2734 = vsub.f32 %v2699, %v2733
  %v2735 = vand.u32 %v2734, 4294901760
  %v2736 = vsub.f32 %v2734, %v2735
  %v2737 = vand.u32 %v2736, 4294901760
  %2738 = vmatmul.f32.gmra.mxu0 %v2737
  %v2739 = vpop.f32.mrf.mxu0
  %v2740 = vadd.f32 0.0, %v2739
  %2741 = vdwg.mxu0
  %v2742 = vand.u32 %v60, 4294901760
  %v2743 = vsub.f32 %v60, %v2742
  %v2744 = vand.u32 %v2743, 4294901760
  %v2745 = vsub.f32 %v2743, %v2744
  %v2746 = vand.u32 %v2745, 4294901760
  %2747 = vmatpush.msra.mxu0 %v2746
  %v2748 = vand.u32 %v59, 4294901760
  %v2749 = vsub.f32 %v59, %v2748
  %v2750 = vand.u32 %v2749, 4294901760
  %v2751 = vsub.f32 %v2749, %v2750
  %v2752 = vand.u32 %v2751, 4294901760
  %2753 = vmatpush.msra.mxu0 %v2752
  %v2754 = vand.u32 %v58, 4294901760
  %v2755 = vsub.f32 %v58, %v2754
  %v2756 = vand.u32 %v2755, 4294901760
  %v2757 = vsub.f32 %v2755, %v2756
  %v2758 = vand.u32 %v2757, 4294901760
  %2759 = vmatpush.msra.mxu0 %v2758
  %v2760 = vand.u32 %v57, 4294901760
  %v2761 = vsub.f32 %v57, %v2760
  %v2762 = vand.u32 %v2761, 4294901760
  %v2763 = vsub.f32 %v2761, %v2762
  %v2764 = vand.u32 %v2763, 4294901760
  %2765 = vmatpush.msra.mxu0 %v2764
  %v2766 = vand.u32 %v56, 4294901760
  %v2767 = vsub.f32 %v56, %v2766
  %v2768 = vand.u32 %v2767, 4294901760
  %v2769 = vsub.f32 %v2767, %v2768
  %v2770 = vand.u32 %v2769, 4294901760
  %2771 = vmatpush.msra.mxu0 %v2770
  %v2772 = vand.u32 %v55, 4294901760
  %v2773 = vsub.f32 %v55, %v2772
  %v2774 = vand.u32 %v2773, 4294901760
  %v2775 = vsub.f32 %v2773, %v2774
  %v2776 = vand.u32 %v2775, 4294901760
  %2777 = vmatpush.msra.mxu0 %v2776
  %v2778 = vand.u32 %v54, 4294901760
  %v2779 = vsub.f32 %v54, %v2778
  %v2780 = vand.u32 %v2779, 4294901760
  %v2781 = vsub.f32 %v2779, %v2780
  %v2782 = vand.u32 %v2781, 4294901760
  %2783 = vmatpush.msra.mxu0 %v2782
  %v2784 = vand.u32 %v53, 4294901760
  %v2785 = vsub.f32 %v53, %v2784
  %v2786 = vand.u32 %v2785, 4294901760
  %v2787 = vsub.f32 %v2785, %v2786
  %v2788 = vand.u32 %v2787, 4294901760
  %2789 = vmatpush.msra.mxu0 %v2788
  %v2790 = vand.u32 %v52, 4294901760
  %v2791 = vsub.f32 %v52, %v2790
  %v2792 = vand.u32 %v2791, 4294901760
  %v2793 = vsub.f32 %v2791, %v2792
  %v2794 = vand.u32 %v2793, 4294901760
  %2795 = vmatpush.msra.mxu0 %v2794
  %v2796 = vand.u32 %v51, 4294901760
  %v2797 = vsub.f32 %v51, %v2796
  %v2798 = vand.u32 %v2797, 4294901760
  %v2799 = vsub.f32 %v2797, %v2798
  %v2800 = vand.u32 %v2799, 4294901760
  %2801 = vmatpush.msra.mxu0 %v2800
  %v2802 = vand.u32 %v50, 4294901760
  %v2803 = vsub.f32 %v50, %v2802
  %v2804 = vand.u32 %v2803, 4294901760
  %v2805 = vsub.f32 %v2803, %v2804
  %v2806 = vand.u32 %v2805, 4294901760
  %2807 = vmatpush.msra.mxu0 %v2806
  %v2808 = vand.u32 %v49, 4294901760
  %v2809 = vsub.f32 %v49, %v2808
  %v2810 = vand.u32 %v2809, 4294901760
  %v2811 = vsub.f32 %v2809, %v2810
  %v2812 = vand.u32 %v2811, 4294901760
  %2813 = vmatpush.msra.mxu0 %v2812
  %v2814 = vand.u32 %v48, 4294901760
  %v2815 = vsub.f32 %v48, %v2814
  %v2816 = vand.u32 %v2815, 4294901760
  %v2817 = vsub.f32 %v2815, %v2816
  %v2818 = vand.u32 %v2817, 4294901760
  %2819 = vmatpush.msra.mxu0 %v2818
  %v2820 = vand.u32 %v47, 4294901760
  %v2821 = vsub.f32 %v47, %v2820
  %v2822 = vand.u32 %v2821, 4294901760
  %v2823 = vsub.f32 %v2821, %v2822
  %v2824 = vand.u32 %v2823, 4294901760
  %2825 = vmatpush.msra.mxu0 %v2824
  %v2826 = vand.u32 %v46, 4294901760
  %v2827 = vsub.f32 %v46, %v2826
  %v2828 = vand.u32 %v2827, 4294901760
  %v2829 = vsub.f32 %v2827, %v2828
  %v2830 = vand.u32 %v2829, 4294901760
  %2831 = vmatpush.msra.mxu0 %v2830
  %v2832 = vand.u32 %v45, 4294901760
  %v2833 = vsub.f32 %v45, %v2832
  %v2834 = vand.u32 %v2833, 4294901760
  %v2835 = vsub.f32 %v2833, %v2834
  %v2836 = vand.u32 %v2835, 4294901760
  %2837 = vmatpush.msra.mxu0 %v2836
  %v2838 = vand.u32 %v2699, 4294901760
  %2839 = vmatmul.f32.gmra.mxu0 %v2838
  %v2840 = vpop.f32.mrf.mxu0
  %v2841 = vadd.f32 %v2740, %v2840
  %2842 = vdwg.mxu0
  %v2843 = vand.u32 %v60, 4294901760
  %v2844 = vsub.f32 %v60, %v2843
  %2845 = vmatpush.msra.mxu0 %v2844
  %v2846 = vand.u32 %v59, 4294901760
  %v2847 = vsub.f32 %v59, %v2846
  %2848 = vmatpush.msra.mxu0 %v2847
  %v2849 = vand.u32 %v58, 4294901760
  %v2850 = vsub.f32 %v58, %v2849
  %2851 = vmatpush.msra.mxu0 %v2850
  %v2852 = vand.u32 %v57, 4294901760
  %v2853 = vsub.f32 %v57, %v2852
  %2854 = vmatpush.msra.mxu0 %v2853
  %v2855 = vand.u32 %v56, 4294901760
  %v2856 = vsub.f32 %v56, %v2855
  %2857 = vmatpush.msra.mxu0 %v2856
  %v2858 = vand.u32 %v55, 4294901760
  %v2859 = vsub.f32 %v55, %v2858
  %2860 = vmatpush.msra.mxu0 %v2859
  %v2861 = vand.u32 %v54, 4294901760
  %v2862 = vsub.f32 %v54, %v2861
  %2863 = vmatpush.msra.mxu0 %v2862
  %v2864 = vand.u32 %v53, 4294901760
  %v2865 = vsub.f32 %v53, %v2864
  %2866 = vmatpush.msra.mxu0 %v2865
  %v2867 = vand.u32 %v52, 4294901760
  %v2868 = vsub.f32 %v52, %v2867
  %2869 = vmatpush.msra.mxu0 %v2868
  %v2870 = vand.u32 %v51, 4294901760
  %v2871 = vsub.f32 %v51, %v2870
  %2872 = vmatpush.msra.mxu0 %v2871
  %v2873 = vand.u32 %v50, 4294901760
  %v2874 = vsub.f32 %v50, %v2873
  %2875 = vmatpush.msra.mxu0 %v2874
  %v2876 = vand.u32 %v49, 4294901760
  %v2877 = vsub.f32 %v49, %v2876
  %2878 = vmatpush.msra.mxu0 %v2877
  %v2879 = vand.u32 %v48, 4294901760
  %v2880 = vsub.f32 %v48, %v2879
  %2881 = vmatpush.msra.mxu0 %v2880
  %v2882 = vand.u32 %v47, 4294901760
  %v2883 = vsub.f32 %v47, %v2882
  %2884 = vmatpush.msra.mxu0 %v2883
  %v2885 = vand.u32 %v46, 4294901760
  %v2886 = vsub.f32 %v46, %v2885
  %2887 = vmatpush.msra.mxu0 %v2886
  %v2888 = vand.u32 %v45, 4294901760
  %v2889 = vsub.f32 %v45, %v2888
  %2890 = vmatpush.msra.mxu0 %v2889
  %v2891 = vand.u32 %v2699, 4294901760
  %v2892 = vsub.f32 %v2699, %v2891
  %2893 = vmatmul.f32.gmra.mxu0 %v2892
  %v2894 = vpop.f32.mrf.mxu0
  %v2895 = vadd.f32 %v2841, %v2894
  %2896 = vdwg.mxu0
  %v2897 = vand.u32 %v60, 4294901760
  %2898 = vmatpush.msra.mxu0 %v2897
  %v2899 = vand.u32 %v59, 4294901760
  %2900 = vmatpush.msra.mxu0 %v2899
  %v2901 = vand.u32 %v58, 4294901760
  %2902 = vmatpush.msra.mxu0 %v2901
  %v2903 = vand.u32 %v57, 4294901760
  %2904 = vmatpush.msra.mxu0 %v2903
  %v2905 = vand.u32 %v56, 4294901760
  %2906 = vmatpush.msra.mxu0 %v2905
  %v2907 = vand.u32 %v55, 4294901760
  %2908 = vmatpush.msra.mxu0 %v2907
  %v2909 = vand.u32 %v54, 4294901760
  %2910 = vmatpush.msra.mxu0 %v2909
  %v2911 = vand.u32 %v53, 4294901760
  %2912 = vmatpush.msra.mxu0 %v2911
  %v2913 = vand.u32 %v52, 4294901760
  %2914 = vmatpush.msra.mxu0 %v2913
  %v2915 = vand.u32 %v51, 4294901760
  %2916 = vmatpush.msra.mxu0 %v2915
  %v2917 = vand.u32 %v50, 4294901760
  %2918 = vmatpush.msra.mxu0 %v2917
  %v2919 = vand.u32 %v49, 4294901760
  %2920 = vmatpush.msra.mxu0 %v2919
  %v2921 = vand.u32 %v48, 4294901760
  %2922 = vmatpush.msra.mxu0 %v2921
  %v2923 = vand.u32 %v47, 4294901760
  %2924 = vmatpush.msra.mxu0 %v2923
  %v2925 = vand.u32 %v46, 4294901760
  %2926 = vmatpush.msra.mxu0 %v2925
  %v2927 = vand.u32 %v45, 4294901760
  %2928 = vmatpush.msra.mxu0 %v2927
  %v2929 = vand.u32 %v2699, 4294901760
  %v2930 = vsub.f32 %v2699, %v2929
  %v2931 = vand.u32 %v2930, 4294901760
  %2932 = vmatmul.f32.gmra.mxu0 %v2931
  %v2933 = vpop.f32.mrf.mxu0
  %v2934 = vadd.f32 %v2895, %v2933
  %2935 = vdwg.mxu0
  %v2936 = vand.u32 %v60, 4294901760
  %v2937 = vsub.f32 %v60, %v2936
  %v2938 = vand.u32 %v2937, 4294901760
  %2939 = vmatpush.msra.mxu0 %v2938
  %v2940 = vand.u32 %v59, 4294901760
  %v2941 = vsub.f32 %v59, %v2940
  %v2942 = vand.u32 %v2941, 4294901760
  %2943 = vmatpush.msra.mxu0 %v2942
  %v2944 = vand.u32 %v58, 4294901760
  %v2945 = vsub.f32 %v58, %v2944
  %v2946 = vand.u32 %v2945, 4294901760
  %2947 = vmatpush.msra.mxu0 %v2946
  %v2948 = vand.u32 %v57, 4294901760
  %v2949 = vsub.f32 %v57, %v2948
  %v2950 = vand.u32 %v2949, 4294901760
  %2951 = vmatpush.msra.mxu0 %v2950
  %v2952 = vand.u32 %v56, 4294901760
  %v2953 = vsub.f32 %v56, %v2952
  %v2954 = vand.u32 %v2953, 4294901760
  %2955 = vmatpush.msra.mxu0 %v2954
  %v2956 = vand.u32 %v55, 4294901760
  %v2957 = vsub.f32 %v55, %v2956
  %v2958 = vand.u32 %v2957, 4294901760
  %2959 = vmatpush.msra.mxu0 %v2958
  %v2960 = vand.u32 %v54, 4294901760
  %v2961 = vsub.f32 %v54, %v2960
  %v2962 = vand.u32 %v2961, 4294901760
  %2963 = vmatpush.msra.mxu0 %v2962
  %v2964 = vand.u32 %v53, 4294901760
  %v2965 = vsub.f32 %v53, %v2964
  %v2966 = vand.u32 %v2965, 4294901760
  %2967 = vmatpush.msra.mxu0 %v2966
  %v2968 = vand.u32 %v52, 4294901760
  %v2969 = vsub.f32 %v52, %v2968
  %v2970 = vand.u32 %v2969, 4294901760
  %2971 = vmatpush.msra.mxu0 %v2970
  %v2972 = vand.u32 %v51, 4294901760
  %v2973 = vsub.f32 %v51, %v2972
  %v2974 = vand.u32 %v2973, 4294901760
  %2975 = vmatpush.msra.mxu0 %v2974
  %v2976 = vand.u32 %v50, 4294901760
  %v2977 = vsub.f32 %v50, %v2976
  %v2978 = vand.u32 %v2977, 4294901760
  %2979 = vmatpush.msra.mxu0 %v2978
  %v2980 = vand.u32 %v49, 4294901760
  %v2981 = vsub.f32 %v49, %v2980
  %v2982 = vand.u32 %v2981, 4294901760
  %2983 = vmatpush.msra.mxu0 %v2982
  %v2984 = vand.u32 %v48, 4294901760
  %v2985 = vsub.f32 %v48, %v2984
  %v2986 = vand.u32 %v2985, 4294901760
  %2987 = vmatpush.msra.mxu0 %v2986
  %v2988 = vand.u32 %v47, 4294901760
  %v2989 = vsub.f32 %v47, %v2988
  %v2990 = vand.u32 %v2989, 4294901760
  %2991 = vmatpush.msra.mxu0 %v2990
  %v2992 = vand.u32 %v46, 4294901760
  %v2993 = vsub.f32 %v46, %v2992
  %v2994 = vand.u32 %v2993, 4294901760
  %2995 = vmatpush.msra.mxu0 %v2994
  %v2996 = vand.u32 %v45, 4294901760
  %v2997 = vsub.f32 %v45, %v2996
  %v2998 = vand.u32 %v2997, 4294901760
  %2999 = vmatpush.msra.mxu0 %v2998
  %v3000 = vand.u32 %v2699, 4294901760
  %3001 = vmatmul.f32.gmra.mxu0 %v3000
  %v3002 = vpop.f32.mrf.mxu0
  %v3003 = vadd.f32 %v2934, %v3002
  %3004 = vdwg.mxu0
  %v3005 = vand.u32 %v60, 4294901760
  %3006 = vmatpush.msra.mxu0 %v3005
  %v3007 = vand.u32 %v59, 4294901760
  %3008 = vmatpush.msra.mxu0 %v3007
  %v3009 = vand.u32 %v58, 4294901760
  %3010 = vmatpush.msra.mxu0 %v3009
  %v3011 = vand.u32 %v57, 4294901760
  %3012 = vmatpush.msra.mxu0 %v3011
  %v3013 = vand.u32 %v56, 4294901760
  %3014 = vmatpush.msra.mxu0 %v3013
  %v3015 = vand.u32 %v55, 4294901760
  %3016 = vmatpush.msra.mxu0 %v3015
  %v3017 = vand.u32 %v54, 4294901760
  %3018 = vmatpush.msra.mxu0 %v3017
  %v3019 = vand.u32 %v53, 4294901760
  %3020 = vmatpush.msra.mxu0 %v3019
  %v3021 = vand.u32 %v52, 4294901760
  %3022 = vmatpush.msra.mxu0 %v3021
  %v3023 = vand.u32 %v51, 4294901760
  %3024 = vmatpush.msra.mxu0 %v3023
  %v3025 = vand.u32 %v50, 4294901760
  %3026 = vmatpush.msra.mxu0 %v3025
  %v3027 = vand.u32 %v49, 4294901760
  %3028 = vmatpush.msra.mxu0 %v3027
  %v3029 = vand.u32 %v48, 4294901760
  %3030 = vmatpush.msra.mxu0 %v3029
  %v3031 = vand.u32 %v47, 4294901760
  %3032 = vmatpush.msra.mxu0 %v3031
  %v3033 = vand.u32 %v46, 4294901760
  %3034 = vmatpush.msra.mxu0 %v3033
  %v3035 = vand.u32 %v45, 4294901760
  %3036 = vmatpush.msra.mxu0 %v3035
  %v3037 = vand.u32 %v2699, 4294901760
  %3038 = vmatmul.f32.gmra.mxu0 %v3037
  %v3039 = vpop.f32.mrf.mxu0
  %v3040 = vadd.f32 %v3003, %v3039
  %3041 = vdwg.mxu0
  %v3042 = vmul.f32 %v2699, %v2699
  %v3043 = vand.u32 %v60, 4294901760
  %3044 = vmatpush.msra.mxu0 %v3043
  %v3045 = vand.u32 %v59, 4294901760
  %3046 = vmatpush.msra.mxu0 %v3045
  %v3047 = vand.u32 %v58, 4294901760
  %3048 = vmatpush.msra.mxu0 %v3047
  %v3049 = vand.u32 %v57, 4294901760
  %3050 = vmatpush.msra.mxu0 %v3049
  %v3051 = vand.u32 %v56, 4294901760
  %3052 = vmatpush.msra.mxu0 %v3051
  %v3053 = vand.u32 %v55, 4294901760
  %3054 = vmatpush.msra.mxu0 %v3053
  %v3055 = vand.u32 %v54, 4294901760
  %3056 = vmatpush.msra.mxu0 %v3055
  %v3057 = vand.u32 %v53, 4294901760
  %3058 = vmatpush.msra.mxu0 %v3057
  %v3059 = vand.u32 %v52, 4294901760
  %3060 = vmatpush.msra.mxu0 %v3059
  %v3061 = vand.u32 %v51, 4294901760
  %3062 = vmatpush.msra.mxu0 %v3061
  %v3063 = vand.u32 %v50, 4294901760
  %3064 = vmatpush.msra.mxu0 %v3063
  %v3065 = vand.u32 %v49, 4294901760
  %3066 = vmatpush.msra.mxu0 %v3065
  %v3067 = vand.u32 %v48, 4294901760
  %3068 = vmatpush.msra.mxu0 %v3067
  %v3069 = vand.u32 %v47, 4294901760
  %3070 = vmatpush.msra.mxu0 %v3069
  %v3071 = vand.u32 %v46, 4294901760
  %3072 = vmatpush.msra.mxu0 %v3071
  %v3073 = vand.u32 %v45, 4294901760
  %3074 = vmatpush.msra.mxu0 %v3073
  %v3075 = vand.u32 %v3042, 4294901760
  %v3076 = vsub.f32 %v3042, %v3075
  %v3077 = vand.u32 %v3076, 4294901760
  %v3078 = vsub.f32 %v3076, %v3077
  %v3079 = vand.u32 %v3078, 4294901760
  %3080 = vmatmul.f32.gmra.mxu0 %v3079
  %v3081 = vpop.f32.mrf.mxu0
  %v3082 = vadd.f32 0.0, %v3081
  %3083 = vdwg.mxu0
  %v3084 = vand.u32 %v60, 4294901760
  %v3085 = vsub.f32 %v60, %v3084
  %v3086 = vand.u32 %v3085, 4294901760
  %v3087 = vsub.f32 %v3085, %v3086
  %v3088 = vand.u32 %v3087, 4294901760
  %3089 = vmatpush.msra.mxu0 %v3088
  %v3090 = vand.u32 %v59, 4294901760
  %v3091 = vsub.f32 %v59, %v3090
  %v3092 = vand.u32 %v3091, 4294901760
  %v3093 = vsub.f32 %v3091, %v3092
  %v3094 = vand.u32 %v3093, 4294901760
  %3095 = vmatpush.msra.mxu0 %v3094
  %v3096 = vand.u32 %v58, 4294901760
  %v3097 = vsub.f32 %v58, %v3096
  %v3098 = vand.u32 %v3097, 4294901760
  %v3099 = vsub.f32 %v3097, %v3098
  %v3100 = vand.u32 %v3099, 4294901760
  %3101 = vmatpush.msra.mxu0 %v3100
  %v3102 = vand.u32 %v57, 4294901760
  %v3103 = vsub.f32 %v57, %v3102
  %v3104 = vand.u32 %v3103, 4294901760
  %v3105 = vsub.f32 %v3103, %v3104
  %v3106 = vand.u32 %v3105, 4294901760
  %3107 = vmatpush.msra.mxu0 %v3106
  %v3108 = vand.u32 %v56, 4294901760
  %v3109 = vsub.f32 %v56, %v3108
  %v3110 = vand.u32 %v3109, 4294901760
  %v3111 = vsub.f32 %v3109, %v3110
  %v3112 = vand.u32 %v3111, 4294901760
  %3113 = vmatpush.msra.mxu0 %v3112
  %v3114 = vand.u32 %v55, 4294901760
  %v3115 = vsub.f32 %v55, %v3114
  %v3116 = vand.u32 %v3115, 4294901760
  %v3117 = vsub.f32 %v3115, %v3116
  %v3118 = vand.u32 %v3117, 4294901760
  %3119 = vmatpush.msra.mxu0 %v3118
  %v3120 = vand.u32 %v54, 4294901760
  %v3121 = vsub.f32 %v54, %v3120
  %v3122 = vand.u32 %v3121, 4294901760
  %v3123 = vsub.f32 %v3121, %v3122
  %v3124 = vand.u32 %v3123, 4294901760
  %3125 = vmatpush.msra.mxu0 %v3124
  %v3126 = vand.u32 %v53, 4294901760
  %v3127 = vsub.f32 %v53, %v3126
  %v3128 = vand.u32 %v3127, 4294901760
  %v3129 = vsub.f32 %v3127, %v3128
  %v3130 = vand.u32 %v3129, 4294901760
  %3131 = vmatpush.msra.mxu0 %v3130
  %v3132 = vand.u32 %v52, 4294901760
  %v3133 = vsub.f32 %v52, %v3132
  %v3134 = vand.u32 %v3133, 4294901760
  %v3135 = vsub.f32 %v3133, %v3134
  %v3136 = vand.u32 %v3135, 4294901760
  %3137 = vmatpush.msra.mxu0 %v3136
  %v3138 = vand.u32 %v51, 4294901760
  %v3139 = vsub.f32 %v51, %v3138
  %v3140 = vand.u32 %v3139, 4294901760
  %v3141 = vsub.f32 %v3139, %v3140
  %v3142 = vand.u32 %v3141, 4294901760
  %3143 = vmatpush.msra.mxu0 %v3142
  %v3144 = vand.u32 %v50, 4294901760
  %v3145 = vsub.f32 %v50, %v3144
  %v3146 = vand.u32 %v3145, 4294901760
  %v3147 = vsub.f32 %v3145, %v3146
  %v3148 = vand.u32 %v3147, 4294901760
  %3149 = vmatpush.msra.mxu0 %v3148
  %v3150 = vand.u32 %v49, 4294901760
  %v3151 = vsub.f32 %v49, %v3150
  %v3152 = vand.u32 %v3151, 4294901760
  %v3153 = vsub.f32 %v3151, %v3152
  %v3154 = vand.u32 %v3153, 4294901760
  %3155 = vmatpush.msra.mxu0 %v3154
  %v3156 = vand.u32 %v48, 4294901760
  %v3157 = vsub.f32 %v48, %v3156
  %v3158 = vand.u32 %v3157, 4294901760
  %v3159 = vsub.f32 %v3157, %v3158
  %v3160 = vand.u32 %v3159, 4294901760
  %3161 = vmatpush.msra.mxu0 %v3160
  %v3162 = vand.u32 %v47, 4294901760
  %v3163 = vsub.f32 %v47, %v3162
  %v3164 = vand.u32 %v3163, 4294901760
  %v3165 = vsub.f32 %v3163, %v3164
  %v3166 = vand.u32 %v3165, 4294901760
  %3167 = vmatpush.msra.mxu0 %v3166
  %v3168 = vand.u32 %v46, 4294901760
  %v3169 = vsub.f32 %v46, %v3168
  %v3170 = vand.u32 %v3169, 4294901760
  %v3171 = vsub.f32 %v3169, %v3170
  %v3172 = vand.u32 %v3171, 4294901760
  %3173 = vmatpush.msra.mxu0 %v3172
  %v3174 = vand.u32 %v45, 4294901760
  %v3175 = vsub.f32 %v45, %v3174
  %v3176 = vand.u32 %v3175, 4294901760
  %v3177 = vsub.f32 %v3175, %v3176
  %v3178 = vand.u32 %v3177, 4294901760
  %3179 = vmatpush.msra.mxu0 %v3178
  %v3180 = vand.u32 %v3042, 4294901760
  %3181 = vmatmul.f32.gmra.mxu0 %v3180
  %v3182 = vpop.f32.mrf.mxu0
  %v3183 = vadd.f32 %v3082, %v3182
  %3184 = vdwg.mxu0
  %v3185 = vand.u32 %v60, 4294901760
  %v3186 = vsub.f32 %v60, %v3185
  %3187 = vmatpush.msra.mxu0 %v3186
  %v3188 = vand.u32 %v59, 4294901760
  %v3189 = vsub.f32 %v59, %v3188
  %3190 = vmatpush.msra.mxu0 %v3189
  %v3191 = vand.u32 %v58, 4294901760
  %v3192 = vsub.f32 %v58, %v3191
  %3193 = vmatpush.msra.mxu0 %v3192
  %v3194 = vand.u32 %v57, 4294901760
  %v3195 = vsub.f32 %v57, %v3194
  %3196 = vmatpush.msra.mxu0 %v3195
  %v3197 = vand.u32 %v56, 4294901760
  %v3198 = vsub.f32 %v56, %v3197
  %3199 = vmatpush.msra.mxu0 %v3198
  %v3200 = vand.u32 %v55, 4294901760
  %v3201 = vsub.f32 %v55, %v3200
  %3202 = vmatpush.msra.mxu0 %v3201
  %v3203 = vand.u32 %v54, 4294901760
  %v3204 = vsub.f32 %v54, %v3203
  %3205 = vmatpush.msra.mxu0 %v3204
  %v3206 = vand.u32 %v53, 4294901760
  %v3207 = vsub.f32 %v53, %v3206
  %3208 = vmatpush.msra.mxu0 %v3207
  %v3209 = vand.u32 %v52, 4294901760
  %v3210 = vsub.f32 %v52, %v3209
  %3211 = vmatpush.msra.mxu0 %v3210
  %v3212 = vand.u32 %v51, 4294901760
  %v3213 = vsub.f32 %v51, %v3212
  %3214 = vmatpush.msra.mxu0 %v3213
  %v3215 = vand.u32 %v50, 4294901760
  %v3216 = vsub.f32 %v50, %v3215
  %3217 = vmatpush.msra.mxu0 %v3216
  %v3218 = vand.u32 %v49, 4294901760
  %v3219 = vsub.f32 %v49, %v3218
  %3220 = vmatpush.msra.mxu0 %v3219
  %v3221 = vand.u32 %v48, 4294901760
  %v3222 = vsub.f32 %v48, %v3221
  %3223 = vmatpush.msra.mxu0 %v3222
  %v3224 = vand.u32 %v47, 4294901760
  %v3225 = vsub.f32 %v47, %v3224
  %3226 = vmatpush.msra.mxu0 %v3225
  %v3227 = vand.u32 %v46, 4294901760
  %v3228 = vsub.f32 %v46, %v3227
  %3229 = vmatpush.msra.mxu0 %v3228
  %v3230 = vand.u32 %v45, 4294901760
  %v3231 = vsub.f32 %v45, %v3230
  %3232 = vmatpush.msra.mxu0 %v3231
  %v3233 = vand.u32 %v3042, 4294901760
  %v3234 = vsub.f32 %v3042, %v3233
  %3235 = vmatmul.f32.gmra.mxu0 %v3234
  %v3236 = vpop.f32.mrf.mxu0
  %v3237 = vadd.f32 %v3183, %v3236
  %3238 = vdwg.mxu0
  %v3239 = vand.u32 %v60, 4294901760
  %3240 = vmatpush.msra.mxu0 %v3239
  %v3241 = vand.u32 %v59, 4294901760
  %3242 = vmatpush.msra.mxu0 %v3241
  %v3243 = vand.u32 %v58, 4294901760
  %3244 = vmatpush.msra.mxu0 %v3243
  %v3245 = vand.u32 %v57, 4294901760
  %3246 = vmatpush.msra.mxu0 %v3245
  %v3247 = vand.u32 %v56, 4294901760
  %3248 = vmatpush.msra.mxu0 %v3247
  %v3249 = vand.u32 %v55, 4294901760
  %3250 = vmatpush.msra.mxu0 %v3249
  %v3251 = vand.u32 %v54, 4294901760
  %3252 = vmatpush.msra.mxu0 %v3251
  %v3253 = vand.u32 %v53, 4294901760
  %3254 = vmatpush.msra.mxu0 %v3253
  %v3255 = vand.u32 %v52, 4294901760
  %3256 = vmatpush.msra.mxu0 %v3255
  %v3257 = vand.u32 %v51, 4294901760
  %3258 = vmatpush.msra.mxu0 %v3257
  %v3259 = vand.u32 %v50, 4294901760
  %3260 = vmatpush.msra.mxu0 %v3259
  %v3261 = vand.u32 %v49, 4294901760
  %3262 = vmatpush.msra.mxu0 %v3261
  %v3263 = vand.u32 %v48, 4294901760
  %3264 = vmatpush.msra.mxu0 %v3263
  %v3265 = vand.u32 %v47, 4294901760
  %3266 = vmatpush.msra.mxu0 %v3265
  %v3267 = vand.u32 %v46, 4294901760
  %3268 = vmatpush.msra.mxu0 %v3267
  %v3269 = vand.u32 %v45, 4294901760
  %3270 = vmatpush.msra.mxu0 %v3269
  %v3271 = vand.u32 %v3042, 4294901760
  %v3272 = vsub.f32 %v3042, %v3271
  %v3273 = vand.u32 %v3272, 4294901760
  %3274 = vmatmul.f32.gmra.mxu0 %v3273
  %v3275 = vpop.f32.mrf.mxu0
  %v3276 = vadd.f32 %v3237, %v3275
  %3277 = vdwg.mxu0
  %v3278 = vand.u32 %v60, 4294901760
  %v3279 = vsub.f32 %v60, %v3278
  %v3280 = vand.u32 %v3279, 4294901760
  %3281 = vmatpush.msra.mxu0 %v3280
  %v3282 = vand.u32 %v59, 4294901760
  %v3283 = vsub.f32 %v59, %v3282
  %v3284 = vand.u32 %v3283, 4294901760
  %3285 = vmatpush.msra.mxu0 %v3284
  %v3286 = vand.u32 %v58, 4294901760
  %v3287 = vsub.f32 %v58, %v3286
  %v3288 = vand.u32 %v3287, 4294901760
  %3289 = vmatpush.msra.mxu0 %v3288
  %v3290 = vand.u32 %v57, 4294901760
  %v3291 = vsub.f32 %v57, %v3290
  %v3292 = vand.u32 %v3291, 4294901760
  %3293 = vmatpush.msra.mxu0 %v3292
  %v3294 = vand.u32 %v56, 4294901760
  %v3295 = vsub.f32 %v56, %v3294
  %v3296 = vand.u32 %v3295, 4294901760
  %3297 = vmatpush.msra.mxu0 %v3296
  %v3298 = vand.u32 %v55, 4294901760
  %v3299 = vsub.f32 %v55, %v3298
  %v3300 = vand.u32 %v3299, 4294901760
  %3301 = vmatpush.msra.mxu0 %v3300
  %v3302 = vand.u32 %v54, 4294901760
  %v3303 = vsub.f32 %v54, %v3302
  %v3304 = vand.u32 %v3303, 4294901760
  %3305 = vmatpush.msra.mxu0 %v3304
  %v3306 = vand.u32 %v53, 4294901760
  %v3307 = vsub.f32 %v53, %v3306
  %v3308 = vand.u32 %v3307, 4294901760
  %3309 = vmatpush.msra.mxu0 %v3308
  %v3310 = vand.u32 %v52, 4294901760
  %v3311 = vsub.f32 %v52, %v3310
  %v3312 = vand.u32 %v3311, 4294901760
  %3313 = vmatpush.msra.mxu0 %v3312
  %v3314 = vand.u32 %v51, 4294901760
  %v3315 = vsub.f32 %v51, %v3314
  %v3316 = vand.u32 %v3315, 4294901760
  %3317 = vmatpush.msra.mxu0 %v3316
  %v3318 = vand.u32 %v50, 4294901760
  %v3319 = vsub.f32 %v50, %v3318
  %v3320 = vand.u32 %v3319, 4294901760
  %3321 = vmatpush.msra.mxu0 %v3320
  %v3322 = vand.u32 %v49, 4294901760
  %v3323 = vsub.f32 %v49, %v3322
  %v3324 = vand.u32 %v3323, 4294901760
  %3325 = vmatpush.msra.mxu0 %v3324
  %v3326 = vand.u32 %v48, 4294901760
  %v3327 = vsub.f32 %v48, %v3326
  %v3328 = vand.u32 %v3327, 4294901760
  %3329 = vmatpush.msra.mxu0 %v3328
  %v3330 = vand.u32 %v47, 4294901760
  %v3331 = vsub.f32 %v47, %v3330
  %v3332 = vand.u32 %v3331, 4294901760
  %3333 = vmatpush.msra.mxu0 %v3332
  %v3334 = vand.u32 %v46, 4294901760
  %v3335 = vsub.f32 %v46, %v3334
  %v3336 = vand.u32 %v3335, 4294901760
  %3337 = vmatpush.msra.mxu0 %v3336
  %v3338 = vand.u32 %v45, 4294901760
  %v3339 = vsub.f32 %v45, %v3338
  %v3340 = vand.u32 %v3339, 4294901760
  %3341 = vmatpush.msra.mxu0 %v3340
  %v3342 = vand.u32 %v3042, 4294901760
  %3343 = vmatmul.f32.gmra.mxu0 %v3342
  %v3344 = vpop.f32.mrf.mxu0
  %v3345 = vadd.f32 %v3276, %v3344
  %3346 = vdwg.mxu0
  %v3347 = vand.u32 %v60, 4294901760
  %3348 = vmatpush.msra.mxu0 %v3347
  %v3349 = vand.u32 %v59, 4294901760
  %3350 = vmatpush.msra.mxu0 %v3349
  %v3351 = vand.u32 %v58, 4294901760
  %3352 = vmatpush.msra.mxu0 %v3351
  %v3353 = vand.u32 %v57, 4294901760
  %3354 = vmatpush.msra.mxu0 %v3353
  %v3355 = vand.u32 %v56, 4294901760
  %3356 = vmatpush.msra.mxu0 %v3355
  %v3357 = vand.u32 %v55, 4294901760
  %3358 = vmatpush.msra.mxu0 %v3357
  %v3359 = vand.u32 %v54, 4294901760
  %3360 = vmatpush.msra.mxu0 %v3359
  %v3361 = vand.u32 %v53, 4294901760
  %3362 = vmatpush.msra.mxu0 %v3361
  %v3363 = vand.u32 %v52, 4294901760
  %3364 = vmatpush.msra.mxu0 %v3363
  %v3365 = vand.u32 %v51, 4294901760
  %3366 = vmatpush.msra.mxu0 %v3365
  %v3367 = vand.u32 %v50, 4294901760
  %3368 = vmatpush.msra.mxu0 %v3367
  %v3369 = vand.u32 %v49, 4294901760
  %3370 = vmatpush.msra.mxu0 %v3369
  %v3371 = vand.u32 %v48, 4294901760
  %3372 = vmatpush.msra.mxu0 %v3371
  %v3373 = vand.u32 %v47, 4294901760
  %3374 = vmatpush.msra.mxu0 %v3373
  %v3375 = vand.u32 %v46, 4294901760
  %3376 = vmatpush.msra.mxu0 %v3375
  %v3377 = vand.u32 %v45, 4294901760
  %3378 = vmatpush.msra.mxu0 %v3377
  %v3379 = vand.u32 %v3042, 4294901760
  %3380 = vmatmul.f32.gmra.mxu0 %v3379
  %v3381 = vpop.f32.mrf.mxu0
  %v3382 = vadd.f32 %v3345, %v3381
  %3383 = vdwg.mxu0
  %v3384 = vsel %vm938, %v3040, 0.0
  %v3385 = vrot.slane %v3384, 4
  %v3386 = vadd.f32 %v3384, %v3385
  %v3387 = vrot.slane %v3386, 2
  %v3388 = vadd.f32 %v3386, %v3387
  %v3389 = vrot.slane %v3388, 1
  %v3390 = vadd.f32 %v3388, %v3389
  %v3391 = vmul.f32 %v3390, 0.0078125
  %v3392 = vsel %vm938, %v3382, 0.0
  %v3393 = vrot.slane %v3392, 4
  %v3394 = vadd.f32 %v3392, %v3393
  %v3395 = vrot.slane %v3394, 2
  %v3396 = vadd.f32 %v3394, %v3395
  %v3397 = vrot.slane %v3396, 1
  %v3398 = vadd.f32 %v3396, %v3397
  %v3399 = vmul.f32 %v3398, 0.0078125
  %v3400 = vmul.f32 %v3391, %v3391
  %v3401 = vsub.f32 %v3399, %v3400
  %v3402 = vmax.f32 %v3401, 0.0
  %v3403 = vadd.f32 %v3402, 1e-05
  %v3404 = vrsqrt.pop %v3403
  %v3405 = vmul.f32 %v3404, %v3403
  %v3406 = vmul.f32 %v3405, %v3404
  %v3407 = vmul.f32 0.5, %v3406
  %v3408 = vsub.f32 1.5, %v3407
  %v3409 = vmul.f32 %v3404, %v3408
  %vm3410 = vweird.f32 %v3403
  %vm3411 = vweird.f32 %v3404
  %vm3412 = vmor %vm3410, %vm3411
  %v3413 = vsel %vm3412, %v3404, %v3409
  %v3415 = vsel %vm938, %v3391, 0
  %3417 = vmatpush.msra.mxu0 0.0
  %3418 = vmatpush.msra.mxu0 0.0
  %3419 = vmatpush.msra.mxu0 0.0
  %3420 = vmatpush.msra.mxu0 0.0
  %3421 = vmatpush.msra.mxu0 0.0
  %3422 = vmatpush.msra.mxu0 0.0
  %3423 = vmatpush.msra.mxu0 0.0
  %3424 = vmatpush.msra.mxu0 0.0
  %3425 = vmatpush.msra.mxu0 0.0
  %3426 = vmatpush.msra.mxu0 0.0
  %3427 = vmatpush.msra.mxu0 0.0
  %3428 = vmatpush.msra.mxu0 0.0
  %3429 = vmatpush.msra.mxu0 0.0
  %3430 = vmatpush.msra.mxu0 0.0
  %3431 = vmatpush.msra.mxu0 0.0
  %v3432 = vand.u32 %v61, 4294901760
  %3433 = vmatpush.msra.mxu0 %v3432
  %v3434 = vand.u32 %v3415, 4294901760
  %v3435 = vsub.f32 %v3415, %v3434
  %v3436 = vand.u32 %v3435, 4294901760
  %v3437 = vsub.f32 %v3435, %v3436
  %v3438 = vand.u32 %v3437, 4294901760
  %3439 = vmatmul.f32.gmra.mxu0 %v3438
  %v3440 = vpop.f32.mrf.mxu0
  %v3441 = vadd.f32 0.0, %v3440
  %3442 = vdwg.mxu0
  %3443 = vmatpush.msra.mxu0 0.0
  %3444 = vmatpush.msra.mxu0 0.0
  %3445 = vmatpush.msra.mxu0 0.0
  %3446 = vmatpush.msra.mxu0 0.0
  %3447 = vmatpush.msra.mxu0 0.0
  %3448 = vmatpush.msra.mxu0 0.0
  %3449 = vmatpush.msra.mxu0 0.0
  %3450 = vmatpush.msra.mxu0 0.0
  %3451 = vmatpush.msra.mxu0 0.0
  %3452 = vmatpush.msra.mxu0 0.0
  %3453 = vmatpush.msra.mxu0 0.0
  %3454 = vmatpush.msra.mxu0 0.0
  %3455 = vmatpush.msra.mxu0 0.0
  %3456 = vmatpush.msra.mxu0 0.0
  %3457 = vmatpush.msra.mxu0 0.0
  %v3458 = vand.u32 %v61, 4294901760
  %v3459 = vsub.f32 %v61, %v3458
  %v3460 = vand.u32 %v3459, 4294901760
  %v3461 = vsub.f32 %v3459, %v3460
  %v3462 = vand.u32 %v3461, 4294901760
  %3463 = vmatpush.msra.mxu0 %v3462
  %v3464 = vand.u32 %v3415, 4294901760
  %3465 = vmatmul.f32.gmra.mxu0 %v3464
  %v3466 = vpop.f32.mrf.mxu0
  %v3467 = vadd.f32 %v3441, %v3466
  %3468 = vdwg.mxu0
  %3469 = vmatpush.msra.mxu0 0.0
  %3470 = vmatpush.msra.mxu0 0.0
  %3471 = vmatpush.msra.mxu0 0.0
  %3472 = vmatpush.msra.mxu0 0.0
  %3473 = vmatpush.msra.mxu0 0.0
  %3474 = vmatpush.msra.mxu0 0.0
  %3475 = vmatpush.msra.mxu0 0.0
  %3476 = vmatpush.msra.mxu0 0.0
  %3477 = vmatpush.msra.mxu0 0.0
  %3478 = vmatpush.msra.mxu0 0.0
  %3479 = vmatpush.msra.mxu0 0.0
  %3480 = vmatpush.msra.mxu0 0.0
  %3481 = vmatpush.msra.mxu0 0.0
  %3482 = vmatpush.msra.mxu0 0.0
  %3483 = vmatpush.msra.mxu0 0.0
  %v3484 = vand.u32 %v61, 4294901760
  %v3485 = vsub.f32 %v61, %v3484
  %3486 = vmatpush.msra.mxu0 %v3485
  %v3487 = vand.u32 %v3415, 4294901760
  %v3488 = vsub.f32 %v3415, %v3487
  %3489 = vmatmul.f32.gmra.mxu0 %v3488
  %v3490 = vpop.f32.mrf.mxu0
  %v3491 = vadd.f32 %v3467, %v3490
  %3492 = vdwg.mxu0
  %3493 = vmatpush.msra.mxu0 0.0
  %3494 = vmatpush.msra.mxu0 0.0
  %3495 = vmatpush.msra.mxu0 0.0
  %3496 = vmatpush.msra.mxu0 0.0
  %3497 = vmatpush.msra.mxu0 0.0
  %3498 = vmatpush.msra.mxu0 0.0
  %3499 = vmatpush.msra.mxu0 0.0
  %3500 = vmatpush.msra.mxu0 0.0
  %3501 = vmatpush.msra.mxu0 0.0
  %3502 = vmatpush.msra.mxu0 0.0
  %3503 = vmatpush.msra.mxu0 0.0
  %3504 = vmatpush.msra.mxu0 0.0
  %3505 = vmatpush.msra.mxu0 0.0
  %3506 = vmatpush.msra.mxu0 0.0
  %3507 = vmatpush.msra.mxu0 0.0
  %v3508 = vand.u32 %v61, 4294901760
  %3509 = vmatpush.msra.mxu0 %v3508
  %v3510 = vand.u32 %v3415, 4294901760
  %v3511 = vsub.f32 %v3415, %v3510
  %v3512 = vand.u32 %v3511, 4294901760
  %3513 = vmatmul.f32.gmra.mxu0 %v3512
  %v3514 = vpop.f32.mrf.mxu0
  %v3515 = vadd.f32 %v3491, %v3514
  %3516 = vdwg.mxu0
  %3517 = vmatpush.msra.mxu0 0.0
  %3518 = vmatpush.msra.mxu0 0.0
  %3519 = vmatpush.msra.mxu0 0.0
  %3520 = vmatpush.msra.mxu0 0.0
  %3521 = vmatpush.msra.mxu0 0.0
  %3522 = vmatpush.msra.mxu0 0.0
  %3523 = vmatpush.msra.mxu0 0.0
  %3524 = vmatpush.msra.mxu0 0.0
  %3525 = vmatpush.msra.mxu0 0.0
  %3526 = vmatpush.msra.mxu0 0.0
  %3527 = vmatpush.msra.mxu0 0.0
  %3528 = vmatpush.msra.mxu0 0.0
  %3529 = vmatpush.msra.mxu0 0.0
  %3530 = vmatpush.msra.mxu0 0.0
  %3531 = vmatpush.msra.mxu0 0.0
  %v3532 = vand.u32 %v61, 4294901760
  %v3533 = vsub.f32 %v61, %v3532
  %v3534 = vand.u32 %v3533, 4294901760
  %3535 = vmatpush.msra.mxu0 %v3534
  %v3536 = vand.u32 %v3415, 4294901760
  %3537 = vmatmul.f32.gmra.mxu0 %v3536
  %v3538 = vpop.f32.mrf.mxu0
  %v3539 = vadd.f32 %v3515, %v3538
  %3540 = vdwg.mxu0
  %3541 = vmatpush.msra.mxu0 0.0
  %3542 = vmatpush.msra.mxu0 0.0
  %3543 = vmatpush.msra.mxu0 0.0
  %3544 = vmatpush.msra.mxu0 0.0
  %3545 = vmatpush.msra.mxu0 0.0
  %3546 = vmatpush.msra.mxu0 0.0
  %3547 = vmatpush.msra.mxu0 0.0
  %3548 = vmatpush.msra.mxu0 0.0
  %3549 = vmatpush.msra.mxu0 0.0
  %3550 = vmatpush.msra.mxu0 0.0
  %3551 = vmatpush.msra.mxu0 0.0
  %3552 = vmatpush.msra.mxu0 0.0
  %3553 = vmatpush.msra.mxu0 0.0
  %3554 = vmatpush.msra.mxu0 0.0
  %3555 = vmatpush.msra.mxu0 0.0
  %v3556 = vand.u32 %v61, 4294901760
  %3557 = vmatpush.msra.mxu0 %v3556
  %v3558 = vand.u32 %v3415, 4294901760
  %3559 = vmatmul.f32.gmra.mxu0 %v3558
  %v3560 = vpop.f32.mrf.mxu0
  %v3561 = vadd.f32 %v3539, %v3560
  %3562 = vdwg.mxu0
  %v3564 = vsel %vm938, %v3413, 0
  %3566 = vmatpush.msra.mxu0 0.0
  %3567 = vmatpush.msra.mxu0 0.0
  %3568 = vmatpush.msra.mxu0 0.0
  %3569 = vmatpush.msra.mxu0 0.0
  %3570 = vmatpush.msra.mxu0 0.0
  %3571 = vmatpush.msra.mxu0 0.0
  %3572 = vmatpush.msra.mxu0 0.0
  %3573 = vmatpush.msra.mxu0 0.0
  %3574 = vmatpush.msra.mxu0 0.0
  %3575 = vmatpush.msra.mxu0 0.0
  %3576 = vmatpush.msra.mxu0 0.0
  %3577 = vmatpush.msra.mxu0 0.0
  %3578 = vmatpush.msra.mxu0 0.0
  %3579 = vmatpush.msra.mxu0 0.0
  %3580 = vmatpush.msra.mxu0 0.0
  %v3581 = vand.u32 %v61, 4294901760
  %3582 = vmatpush.msra.mxu0 %v3581
  %v3583 = vand.u32 %v3564, 4294901760
  %v3584 = vsub.f32 %v3564, %v3583
  %v3585 = vand.u32 %v3584, 4294901760
  %v3586 = vsub.f32 %v3584, %v3585
  %v3587 = vand.u32 %v3586, 4294901760
  %3588 = vmatmul.f32.gmra.mxu0 %v3587
  %v3589 = vpop.f32.mrf.mxu0
  %v3590 = vadd.f32 0.0, %v3589
  %3591 = vdwg.mxu0
  %3592 = vmatpush.msra.mxu0 0.0
  %3593 = vmatpush.msra.mxu0 0.0
  %3594 = vmatpush.msra.mxu0 0.0
  %3595 = vmatpush.msra.mxu0 0.0
  %3596 = vmatpush.msra.mxu0 0.0
  %3597 = vmatpush.msra.mxu0 0.0
  %3598 = vmatpush.msra.mxu0 0.0
  %3599 = vmatpush.msra.mxu0 0.0
  %3600 = vmatpush.msra.mxu0 0.0
  %3601 = vmatpush.msra.mxu0 0.0
  %3602 = vmatpush.msra.mxu0 0.0
  %3603 = vmatpush.msra.mxu0 0.0
  %3604 = vmatpush.msra.mxu0 0.0
  %3605 = vmatpush.msra.mxu0 0.0
  %3606 = vmatpush.msra.mxu0 0.0
  %v3607 = vand.u32 %v61, 4294901760
  %v3608 = vsub.f32 %v61, %v3607
  %v3609 = vand.u32 %v3608, 4294901760
  %v3610 = vsub.f32 %v3608, %v3609
  %v3611 = vand.u32 %v3610, 4294901760
  %3612 = vmatpush.msra.mxu0 %v3611
  %v3613 = vand.u32 %v3564, 4294901760
  %3614 = vmatmul.f32.gmra.mxu0 %v3613
  %v3615 = vpop.f32.mrf.mxu0
  %v3616 = vadd.f32 %v3590, %v3615
  %3617 = vdwg.mxu0
  %3618 = vmatpush.msra.mxu0 0.0
  %3619 = vmatpush.msra.mxu0 0.0
  %3620 = vmatpush.msra.mxu0 0.0
  %3621 = vmatpush.msra.mxu0 0.0
  %3622 = vmatpush.msra.mxu0 0.0
  %3623 = vmatpush.msra.mxu0 0.0
  %3624 = vmatpush.msra.mxu0 0.0
  %3625 = vmatpush.msra.mxu0 0.0
  %3626 = vmatpush.msra.mxu0 0.0
  %3627 = vmatpush.msra.mxu0 0.0
  %3628 = vmatpush.msra.mxu0 0.0
  %3629 = vmatpush.msra.mxu0 0.0
  %3630 = vmatpush.msra.mxu0 0.0
  %3631 = vmatpush.msra.mxu0 0.0
  %3632 = vmatpush.msra.mxu0 0.0
  %v3633 = vand.u32 %v61, 4294901760
  %v3634 = vsub.f32 %v61, %v3633
  %3635 = vmatpush.msra.mxu0 %v3634
  %v3636 = vand.u32 %v3564, 4294901760
  %v3637 = vsub.f32 %v3564, %v3636
  %3638 = vmatmul.f32.gmra.mxu0 %v3637
  %v3639 = vpop.f32.mrf.mxu0
  %v3640 = vadd.f32 %v3616, %v3639
  %3641 = vdwg.mxu0
  %3642 = vmatpush.msra.mxu0 0.0
  %3643 = vmatpush.msra.mxu0 0.0
  %3644 = vmatpush.msra.mxu0 0.0
  %3645 = vmatpush.msra.mxu0 0.0
  %3646 = vmatpush.msra.mxu0 0.0
  %3647 = vmatpush.msra.mxu0 0.0
  %3648 = vmatpush.msra.mxu0 0.0
  %3649 = vmatpush.msra.mxu0 0.0
  %3650 = vmatpush.msra.mxu0 0.0
  %3651 = vmatpush.msra.mxu0 0.0
  %3652 = vmatpush.msra.mxu0 0.0
  %3653 = vmatpush.msra.mxu0 0.0
  %3654 = vmatpush.msra.mxu0 0.0
  %3655 = vmatpush.msra.mxu0 0.0
  %3656 = vmatpush.msra.mxu0 0.0
  %v3657 = vand.u32 %v61, 4294901760
  %3658 = vmatpush.msra.mxu0 %v3657
  %v3659 = vand.u32 %v3564, 4294901760
  %v3660 = vsub.f32 %v3564, %v3659
  %v3661 = vand.u32 %v3660, 4294901760
  %3662 = vmatmul.f32.gmra.mxu0 %v3661
  %v3663 = vpop.f32.mrf.mxu0
  %v3664 = vadd.f32 %v3640, %v3663
  %3665 = vdwg.mxu0
  %3666 = vmatpush.msra.mxu0 0.0
  %3667 = vmatpush.msra.mxu0 0.0
  %3668 = vmatpush.msra.mxu0 0.0
  %3669 = vmatpush.msra.mxu0 0.0
  %3670 = vmatpush.msra.mxu0 0.0
  %3671 = vmatpush.msra.mxu0 0.0
  %3672 = vmatpush.msra.mxu0 0.0
  %3673 = vmatpush.msra.mxu0 0.0
  %3674 = vmatpush.msra.mxu0 0.0
  %3675 = vmatpush.msra.mxu0 0.0
  %3676 = vmatpush.msra.mxu0 0.0
  %3677 = vmatpush.msra.mxu0 0.0
  %3678 = vmatpush.msra.mxu0 0.0
  %3679 = vmatpush.msra.mxu0 0.0
  %3680 = vmatpush.msra.mxu0 0.0
  %v3681 = vand.u32 %v61, 4294901760
  %v3682 = vsub.f32 %v61, %v3681
  %v3683 = vand.u32 %v3682, 4294901760
  %3684 = vmatpush.msra.mxu0 %v3683
  %v3685 = vand.u32 %v3564, 4294901760
  %3686 = vmatmul.f32.gmra.mxu0 %v3685
  %v3687 = vpop.f32.mrf.mxu0
  %v3688 = vadd.f32 %v3664, %v3687
  %3689 = vdwg.mxu0
  %3690 = vmatpush.msra.mxu0 0.0
  %3691 = vmatpush.msra.mxu0 0.0
  %3692 = vmatpush.msra.mxu0 0.0
  %3693 = vmatpush.msra.mxu0 0.0
  %3694 = vmatpush.msra.mxu0 0.0
  %3695 = vmatpush.msra.mxu0 0.0
  %3696 = vmatpush.msra.mxu0 0.0
  %3697 = vmatpush.msra.mxu0 0.0
  %3698 = vmatpush.msra.mxu0 0.0
  %3699 = vmatpush.msra.mxu0 0.0
  %3700 = vmatpush.msra.mxu0 0.0
  %3701 = vmatpush.msra.mxu0 0.0
  %3702 = vmatpush.msra.mxu0 0.0
  %3703 = vmatpush.msra.mxu0 0.0
  %3704 = vmatpush.msra.mxu0 0.0
  %v3705 = vand.u32 %v61, 4294901760
  %3706 = vmatpush.msra.mxu0 %v3705
  %v3707 = vand.u32 %v3564, 4294901760
  %3708 = vmatmul.f32.gmra.mxu0 %v3707
  %v3709 = vpop.f32.mrf.mxu0
  %v3710 = vadd.f32 %v3688, %v3709
  %3711 = vdwg.mxu0
  %s3712 = scalar_lea.vmem %s7, 16
  %v3713 = vld [vmem:[%s3712] sm:$0xff]
  %v3714 = vperm.slane %v3561, 0
  %v3715 = vsub.f32 %v2699, %v3714
  %v3716 = vperm.slane %v3710, 0
  %v3717 = vmul.f32 %v3715, %v3716
  %3719 = vset.pattern.permute.xlu0 0
  %3720 = vperm.xlu0 %3719, %v3713
  %v3721 = vpop.permute.xlu0 %3720
  %v3723 = vmul.f32 %v3721, %v3717
  %s3724 = scalar_lea.vmem %s8, 16
  %v3725 = vld [vmem:[%s3724] sm:$0xff]
  %3727 = vset.pattern.permute.xlu0 0
  %3728 = vperm.xlu0 %3727, %v3725
  %v3729 = vpop.permute.xlu0 %3728
  %v3731 = vadd.f32 %v3723, %v3729
  %v3732 = vmul.f32 %v3731, 0.5
  %v3733 = vmul.f32 %v3731, 0.044715
  %v3734 = vmul.f32 %v3733, %v3731
  %v3735 = vmul.f32 %v3734, %v3731
  %v3736 = vadd.f32 %v3731, %v3735
  %v3737 = vmul.f32 %v3736, 0.7978846
  %v3738 = vtanh.pop %v3737
  %v3739 = vadd.f32 %v3738, 1.0
  %v3740 = vmul.f32 %v3732, %v3739
  %3741 = vrot.lane.b32.xlu0 %v3740, 1
  %v3742 = vpop.permute.xlu0 %3741
  %v3743 = vmul.f32 %v3742, %v72
  %3744 = vrot.lane.b32.xlu0 %v3740, 127
  %v3745 = vpop.permute.xlu0 %3744
  %v3746 = vmul.f32 %v3745, %v76
  %s3747 = scalar_lea.vmem %s6, 24
  %v3748 = vld [vmem:[%s3747] sm:$0xff]
  %v3750 = vsel %vm79, %v3748, 0
  %3752 = vmatpush.msra.mxu0 0.0
  %3753 = vmatpush.msra.mxu0 0.0
  %3754 = vmatpush.msra.mxu0 0.0
  %3755 = vmatpush.msra.mxu0 0.0
  %3756 = vmatpush.msra.mxu0 0.0
  %3757 = vmatpush.msra.mxu0 0.0
  %3758 = vmatpush.msra.mxu0 0.0
  %3759 = vmatpush.msra.mxu0 0.0
  %3760 = vmatpush.msra.mxu0 0.0
  %3761 = vmatpush.msra.mxu0 0.0
  %3762 = vmatpush.msra.mxu0 0.0
  %3763 = vmatpush.msra.mxu0 0.0
  %3764 = vmatpush.msra.mxu0 0.0
  %v3765 = vand.u32 %v3746, 4294901760
  %3766 = vmatpush.msra.mxu0 %v3765
  %v3767 = vand.u32 %v3740, 4294901760
  %3768 = vmatpush.msra.mxu0 %v3767
  %v3769 = vand.u32 %v3743, 4294901760
  %3770 = vmatpush.msra.mxu0 %v3769
  %v3771 = vand.u32 %v3750, 4294901760
  %v3772 = vsub.f32 %v3750, %v3771
  %v3773 = vand.u32 %v3772, 4294901760
  %v3774 = vsub.f32 %v3772, %v3773
  %v3775 = vand.u32 %v3774, 4294901760
  %3776 = vmatmul.f32.gmra.mxu0 %v3775
  %v3777 = vpop.f32.mrf.mxu0
  %v3778 = vadd.f32 0.0, %v3777
  %3779 = vdwg.mxu0
  %3780 = vmatpush.msra.mxu0 0.0
  %3781 = vmatpush.msra.mxu0 0.0
  %3782 = vmatpush.msra.mxu0 0.0
  %3783 = vmatpush.msra.mxu0 0.0
  %3784 = vmatpush.msra.mxu0 0.0
  %3785 = vmatpush.msra.mxu0 0.0
  %3786 = vmatpush.msra.mxu0 0.0
  %3787 = vmatpush.msra.mxu0 0.0
  %3788 = vmatpush.msra.mxu0 0.0
  %3789 = vmatpush.msra.mxu0 0.0
  %3790 = vmatpush.msra.mxu0 0.0
  %3791 = vmatpush.msra.mxu0 0.0
  %3792 = vmatpush.msra.mxu0 0.0
  %v3793 = vand.u32 %v3746, 4294901760
  %v3794 = vsub.f32 %v3746, %v3793
  %v3795 = vand.u32 %v3794, 4294901760
  %v3796 = vsub.f32 %v3794, %v3795
  %v3797 = vand.u32 %v3796, 4294901760
  %3798 = vmatpush.msra.mxu0 %v3797
  %v3799 = vand.u32 %v3740, 4294901760
  %v3800 = vsub.f32 %v3740, %v3799
  %v3801 = vand.u32 %v3800, 4294901760
  %v3802 = vsub.f32 %v3800, %v3801
  %v3803 = vand.u32 %v3802, 4294901760
  %3804 = vmatpush.msra.mxu0 %v3803
  %v3805 = vand.u32 %v3743, 4294901760
  %v3806 = vsub.f32 %v3743, %v3805
  %v3807 = vand.u32 %v3806, 4294901760
  %v3808 = vsub.f32 %v3806, %v3807
  %v3809 = vand.u32 %v3808, 4294901760
  %3810 = vmatpush.msra.mxu0 %v3809
  %v3811 = vand.u32 %v3750, 4294901760
  %3812 = vmatmul.f32.gmra.mxu0 %v3811
  %v3813 = vpop.f32.mrf.mxu0
  %v3814 = vadd.f32 %v3778, %v3813
  %3815 = vdwg.mxu0
  %3816 = vmatpush.msra.mxu0 0.0
  %3817 = vmatpush.msra.mxu0 0.0
  %3818 = vmatpush.msra.mxu0 0.0
  %3819 = vmatpush.msra.mxu0 0.0
  %3820 = vmatpush.msra.mxu0 0.0
  %3821 = vmatpush.msra.mxu0 0.0
  %3822 = vmatpush.msra.mxu0 0.0
  %3823 = vmatpush.msra.mxu0 0.0
  %3824 = vmatpush.msra.mxu0 0.0
  %3825 = vmatpush.msra.mxu0 0.0
  %3826 = vmatpush.msra.mxu0 0.0
  %3827 = vmatpush.msra.mxu0 0.0
  %3828 = vmatpush.msra.mxu0 0.0
  %v3829 = vand.u32 %v3746, 4294901760
  %v3830 = vsub.f32 %v3746, %v3829
  %3831 = vmatpush.msra.mxu0 %v3830
  %v3832 = vand.u32 %v3740, 4294901760
  %v3833 = vsub.f32 %v3740, %v3832
  %3834 = vmatpush.msra.mxu0 %v3833
  %v3835 = vand.u32 %v3743, 4294901760
  %v3836 = vsub.f32 %v3743, %v3835
  %3837 = vmatpush.msra.mxu0 %v3836
  %v3838 = vand.u32 %v3750, 4294901760
  %v3839 = vsub.f32 %v3750, %v3838
  %3840 = vmatmul.f32.gmra.mxu0 %v3839
  %v3841 = vpop.f32.mrf.mxu0
  %v3842 = vadd.f32 %v3814, %v3841
  %3843 = vdwg.mxu0
  %3844 = vmatpush.msra.mxu0 0.0
  %3845 = vmatpush.msra.mxu0 0.0
  %3846 = vmatpush.msra.mxu0 0.0
  %3847 = vmatpush.msra.mxu0 0.0
  %3848 = vmatpush.msra.mxu0 0.0
  %3849 = vmatpush.msra.mxu0 0.0
  %3850 = vmatpush.msra.mxu0 0.0
  %3851 = vmatpush.msra.mxu0 0.0
  %3852 = vmatpush.msra.mxu0 0.0
  %3853 = vmatpush.msra.mxu0 0.0
  %3854 = vmatpush.msra.mxu0 0.0
  %3855 = vmatpush.msra.mxu0 0.0
  %3856 = vmatpush.msra.mxu0 0.0
  %v3857 = vand.u32 %v3746, 4294901760
  %3858 = vmatpush.msra.mxu0 %v3857
  %v3859 = vand.u32 %v3740, 4294901760
  %3860 = vmatpush.msra.mxu0 %v3859
  %v3861 = vand.u32 %v3743, 4294901760
  %3862 = vmatpush.msra.mxu0 %v3861
  %v3863 = vand.u32 %v3750, 4294901760
  %v3864 = vsub.f32 %v3750, %v3863
  %v3865 = vand.u32 %v3864, 4294901760
  %3866 = vmatmul.f32.gmra.mxu0 %v3865
  %v3867 = vpop.f32.mrf.mxu0
  %v3868 = vadd.f32 %v3842, %v3867
  %3869 = vdwg.mxu0
  %3870 = vmatpush.msra.mxu0 0.0
  %3871 = vmatpush.msra.mxu0 0.0
  %3872 = vmatpush.msra.mxu0 0.0
  %3873 = vmatpush.msra.mxu0 0.0
  %3874 = vmatpush.msra.mxu0 0.0
  %3875 = vmatpush.msra.mxu0 0.0
  %3876 = vmatpush.msra.mxu0 0.0
  %3877 = vmatpush.msra.mxu0 0.0
  %3878 = vmatpush.msra.mxu0 0.0
  %3879 = vmatpush.msra.mxu0 0.0
  %3880 = vmatpush.msra.mxu0 0.0
  %3881 = vmatpush.msra.mxu0 0.0
  %3882 = vmatpush.msra.mxu0 0.0
  %v3883 = vand.u32 %v3746, 4294901760
  %v3884 = vsub.f32 %v3746, %v3883
  %v3885 = vand.u32 %v3884, 4294901760
  %3886 = vmatpush.msra.mxu0 %v3885
  %v3887 = vand.u32 %v3740, 4294901760
  %v3888 = vsub.f32 %v3740, %v3887
  %v3889 = vand.u32 %v3888, 4294901760
  %3890 = vmatpush.msra.mxu0 %v3889
  %v3891 = vand.u32 %v3743, 4294901760
  %v3892 = vsub.f32 %v3743, %v3891
  %v3893 = vand.u32 %v3892, 4294901760
  %3894 = vmatpush.msra.mxu0 %v3893
  %v3895 = vand.u32 %v3750, 4294901760
  %3896 = vmatmul.f32.gmra.mxu0 %v3895
  %v3897 = vpop.f32.mrf.mxu0
  %v3898 = vadd.f32 %v3868, %v3897
  %3899 = vdwg.mxu0
  %3900 = vmatpush.msra.mxu0 0.0
  %3901 = vmatpush.msra.mxu0 0.0
  %3902 = vmatpush.msra.mxu0 0.0
  %3903 = vmatpush.msra.mxu0 0.0
  %3904 = vmatpush.msra.mxu0 0.0
  %3905 = vmatpush.msra.mxu0 0.0
  %3906 = vmatpush.msra.mxu0 0.0
  %3907 = vmatpush.msra.mxu0 0.0
  %3908 = vmatpush.msra.mxu0 0.0
  %3909 = vmatpush.msra.mxu0 0.0
  %3910 = vmatpush.msra.mxu0 0.0
  %3911 = vmatpush.msra.mxu0 0.0
  %3912 = vmatpush.msra.mxu0 0.0
  %v3913 = vand.u32 %v3746, 4294901760
  %3914 = vmatpush.msra.mxu0 %v3913
  %v3915 = vand.u32 %v3740, 4294901760
  %3916 = vmatpush.msra.mxu0 %v3915
  %v3917 = vand.u32 %v3743, 4294901760
  %3918 = vmatpush.msra.mxu0 %v3917
  %v3919 = vand.u32 %v3750, 4294901760
  %3920 = vmatmul.f32.gmra.mxu0 %v3919
  %v3921 = vpop.f32.mrf.mxu0
  %v3922 = vadd.f32 %v3898, %v3921
  %3923 = vdwg.mxu0
  %v3924 = vand.u32 %v60, 4294901760
  %3925 = vmatpush.msra.mxu0 %v3924
  %v3926 = vand.u32 %v59, 4294901760
  %3927 = vmatpush.msra.mxu0 %v3926
  %v3928 = vand.u32 %v58, 4294901760
  %3929 = vmatpush.msra.mxu0 %v3928
  %v3930 = vand.u32 %v57, 4294901760
  %3931 = vmatpush.msra.mxu0 %v3930
  %v3932 = vand.u32 %v56, 4294901760
  %3933 = vmatpush.msra.mxu0 %v3932
  %v3934 = vand.u32 %v55, 4294901760
  %3935 = vmatpush.msra.mxu0 %v3934
  %v3936 = vand.u32 %v54, 4294901760
  %3937 = vmatpush.msra.mxu0 %v3936
  %v3938 = vand.u32 %v53, 4294901760
  %3939 = vmatpush.msra.mxu0 %v3938
  %v3940 = vand.u32 %v52, 4294901760
  %3941 = vmatpush.msra.mxu0 %v3940
  %v3942 = vand.u32 %v51, 4294901760
  %3943 = vmatpush.msra.mxu0 %v3942
  %v3944 = vand.u32 %v50, 4294901760
  %3945 = vmatpush.msra.mxu0 %v3944
  %v3946 = vand.u32 %v49, 4294901760
  %3947 = vmatpush.msra.mxu0 %v3946
  %v3948 = vand.u32 %v48, 4294901760
  %3949 = vmatpush.msra.mxu0 %v3948
  %v3950 = vand.u32 %v47, 4294901760
  %3951 = vmatpush.msra.mxu0 %v3950
  %v3952 = vand.u32 %v46, 4294901760
  %3953 = vmatpush.msra.mxu0 %v3952
  %v3954 = vand.u32 %v45, 4294901760
  %3955 = vmatpush.msra.mxu0 %v3954
  %v3956 = vand.u32 %v3922, 4294901760
  %v3957 = vsub.f32 %v3922, %v3956
  %v3958 = vand.u32 %v3957, 4294901760
  %v3959 = vsub.f32 %v3957, %v3958
  %v3960 = vand.u32 %v3959, 4294901760
  %3961 = vmatmul.f32.gmra.mxu0 %v3960
  %v3962 = vpop.f32.mrf.mxu0
  %v3963 = vadd.f32 0.0, %v3962
  %3964 = vdwg.mxu0
  %v3965 = vand.u32 %v60, 4294901760
  %v3966 = vsub.f32 %v60, %v3965
  %v3967 = vand.u32 %v3966, 4294901760
  %v3968 = vsub.f32 %v3966, %v3967
  %v3969 = vand.u32 %v3968, 4294901760
  %3970 = vmatpush.msra.mxu0 %v3969
  %v3971 = vand.u32 %v59, 4294901760
  %v3972 = vsub.f32 %v59, %v3971
  %v3973 = vand.u32 %v3972, 4294901760
  %v3974 = vsub.f32 %v3972, %v3973
  %v3975 = vand.u32 %v3974, 4294901760
  %3976 = vmatpush.msra.mxu0 %v3975
  %v3977 = vand.u32 %v58, 4294901760
  %v3978 = vsub.f32 %v58, %v3977
  %v3979 = vand.u32 %v3978, 4294901760
  %v3980 = vsub.f32 %v3978, %v3979
  %v3981 = vand.u32 %v3980, 4294901760
  %3982 = vmatpush.msra.mxu0 %v3981
  %v3983 = vand.u32 %v57, 4294901760
  %v3984 = vsub.f32 %v57, %v3983
  %v3985 = vand.u32 %v3984, 4294901760
  %v3986 = vsub.f32 %v3984, %v3985
  %v3987 = vand.u32 %v3986, 4294901760
  %3988 = vmatpush.msra.mxu0 %v3987
  %v3989 = vand.u32 %v56, 4294901760
  %v3990 = vsub.f32 %v56, %v3989
  %v3991 = vand.u32 %v3990, 4294901760
  %v3992 = vsub.f32 %v3990, %v3991
  %v3993 = vand.u32 %v3992, 4294901760
  %3994 = vmatpush.msra.mxu0 %v3993
  %v3995 = vand.u32 %v55, 4294901760
  %v3996 = vsub.f32 %v55, %v3995
  %v3997 = vand.u32 %v3996, 4294901760
  %v3998 = vsub.f32 %v3996, %v3997
  %v3999 = vand.u32 %v3998, 4294901760
  %4000 = vmatpush.msra.mxu0 %v3999
  %v4001 = vand.u32 %v54, 4294901760
  %v4002 = vsub.f32 %v54, %v4001
  %v4003 = vand.u32 %v4002, 4294901760
  %v4004 = vsub.f32 %v4002, %v4003
  %v4005 = vand.u32 %v4004, 4294901760
  %4006 = vmatpush.msra.mxu0 %v4005
  %v4007 = vand.u32 %v53, 4294901760
  %v4008 = vsub.f32 %v53, %v4007
  %v4009 = vand.u32 %v4008, 4294901760
  %v4010 = vsub.f32 %v4008, %v4009
  %v4011 = vand.u32 %v4010, 4294901760
  %4012 = vmatpush.msra.mxu0 %v4011
  %v4013 = vand.u32 %v52, 4294901760
  %v4014 = vsub.f32 %v52, %v4013
  %v4015 = vand.u32 %v4014, 4294901760
  %v4016 = vsub.f32 %v4014, %v4015
  %v4017 = vand.u32 %v4016, 4294901760
  %4018 = vmatpush.msra.mxu0 %v4017
  %v4019 = vand.u32 %v51, 4294901760
  %v4020 = vsub.f32 %v51, %v4019
  %v4021 = vand.u32 %v4020, 4294901760
  %v4022 = vsub.f32 %v4020, %v4021
  %v4023 = vand.u32 %v4022, 4294901760
  %4024 = vmatpush.msra.mxu0 %v4023
  %v4025 = vand.u32 %v50, 4294901760
  %v4026 = vsub.f32 %v50, %v4025
  %v4027 = vand.u32 %v4026, 4294901760
  %v4028 = vsub.f32 %v4026, %v4027
  %v4029 = vand.u32 %v4028, 4294901760
  %4030 = vmatpush.msra.mxu0 %v4029
  %v4031 = vand.u32 %v49, 4294901760
  %v4032 = vsub.f32 %v49, %v4031
  %v4033 = vand.u32 %v4032, 4294901760
  %v4034 = vsub.f32 %v4032, %v4033
  %v4035 = vand.u32 %v4034, 4294901760
  %4036 = vmatpush.msra.mxu0 %v4035
  %v4037 = vand.u32 %v48, 4294901760
  %v4038 = vsub.f32 %v48, %v4037
  %v4039 = vand.u32 %v4038, 4294901760
  %v4040 = vsub.f32 %v4038, %v4039
  %v4041 = vand.u32 %v4040, 4294901760
  %4042 = vmatpush.msra.mxu0 %v4041
  %v4043 = vand.u32 %v47, 4294901760
  %v4044 = vsub.f32 %v47, %v4043
  %v4045 = vand.u32 %v4044, 4294901760
  %v4046 = vsub.f32 %v4044, %v4045
  %v4047 = vand.u32 %v4046, 4294901760
  %4048 = vmatpush.msra.mxu0 %v4047
  %v4049 = vand.u32 %v46, 4294901760
  %v4050 = vsub.f32 %v46, %v4049
  %v4051 = vand.u32 %v4050, 4294901760
  %v4052 = vsub.f32 %v4050, %v4051
  %v4053 = vand.u32 %v4052, 4294901760
  %4054 = vmatpush.msra.mxu0 %v4053
  %v4055 = vand.u32 %v45, 4294901760
  %v4056 = vsub.f32 %v45, %v4055
  %v4057 = vand.u32 %v4056, 4294901760
  %v4058 = vsub.f32 %v4056, %v4057
  %v4059 = vand.u32 %v4058, 4294901760
  %4060 = vmatpush.msra.mxu0 %v4059
  %v4061 = vand.u32 %v3922, 4294901760
  %4062 = vmatmul.f32.gmra.mxu0 %v4061
  %v4063 = vpop.f32.mrf.mxu0
  %v4064 = vadd.f32 %v3963, %v4063
  %4065 = vdwg.mxu0
  %v4066 = vand.u32 %v60, 4294901760
  %v4067 = vsub.f32 %v60, %v4066
  %4068 = vmatpush.msra.mxu0 %v4067
  %v4069 = vand.u32 %v59, 4294901760
  %v4070 = vsub.f32 %v59, %v4069
  %4071 = vmatpush.msra.mxu0 %v4070
  %v4072 = vand.u32 %v58, 4294901760
  %v4073 = vsub.f32 %v58, %v4072
  %4074 = vmatpush.msra.mxu0 %v4073
  %v4075 = vand.u32 %v57, 4294901760
  %v4076 = vsub.f32 %v57, %v4075
  %4077 = vmatpush.msra.mxu0 %v4076
  %v4078 = vand.u32 %v56, 4294901760
  %v4079 = vsub.f32 %v56, %v4078
  %4080 = vmatpush.msra.mxu0 %v4079
  %v4081 = vand.u32 %v55, 4294901760
  %v4082 = vsub.f32 %v55, %v4081
  %4083 = vmatpush.msra.mxu0 %v4082
  %v4084 = vand.u32 %v54, 4294901760
  %v4085 = vsub.f32 %v54, %v4084
  %4086 = vmatpush.msra.mxu0 %v4085
  %v4087 = vand.u32 %v53, 4294901760
  %v4088 = vsub.f32 %v53, %v4087
  %4089 = vmatpush.msra.mxu0 %v4088
  %v4090 = vand.u32 %v52, 4294901760
  %v4091 = vsub.f32 %v52, %v4090
  %4092 = vmatpush.msra.mxu0 %v4091
  %v4093 = vand.u32 %v51, 4294901760
  %v4094 = vsub.f32 %v51, %v4093
  %4095 = vmatpush.msra.mxu0 %v4094
  %v4096 = vand.u32 %v50, 4294901760
  %v4097 = vsub.f32 %v50, %v4096
  %4098 = vmatpush.msra.mxu0 %v4097
  %v4099 = vand.u32 %v49, 4294901760
  %v4100 = vsub.f32 %v49, %v4099
  %4101 = vmatpush.msra.mxu0 %v4100
  %v4102 = vand.u32 %v48, 4294901760
  %v4103 = vsub.f32 %v48, %v4102
  %4104 = vmatpush.msra.mxu0 %v4103
  %v4105 = vand.u32 %v47, 4294901760
  %v4106 = vsub.f32 %v47, %v4105
  %4107 = vmatpush.msra.mxu0 %v4106
  %v4108 = vand.u32 %v46, 4294901760
  %v4109 = vsub.f32 %v46, %v4108
  %4110 = vmatpush.msra.mxu0 %v4109
  %v4111 = vand.u32 %v45, 4294901760
  %v4112 = vsub.f32 %v45, %v4111
  %4113 = vmatpush.msra.mxu0 %v4112
  %v4114 = vand.u32 %v3922, 4294901760
  %v4115 = vsub.f32 %v3922, %v4114
  %4116 = vmatmul.f32.gmra.mxu0 %v4115
  %v4117 = vpop.f32.mrf.mxu0
  %v4118 = vadd.f32 %v4064, %v4117
  %4119 = vdwg.mxu0
  %v4120 = vand.u32 %v60, 4294901760
  %4121 = vmatpush.msra.mxu0 %v4120
  %v4122 = vand.u32 %v59, 4294901760
  %4123 = vmatpush.msra.mxu0 %v4122
  %v4124 = vand.u32 %v58, 4294901760
  %4125 = vmatpush.msra.mxu0 %v4124
  %v4126 = vand.u32 %v57, 4294901760
  %4127 = vmatpush.msra.mxu0 %v4126
  %v4128 = vand.u32 %v56, 4294901760
  %4129 = vmatpush.msra.mxu0 %v4128
  %v4130 = vand.u32 %v55, 4294901760
  %4131 = vmatpush.msra.mxu0 %v4130
  %v4132 = vand.u32 %v54, 4294901760
  %4133 = vmatpush.msra.mxu0 %v4132
  %v4134 = vand.u32 %v53, 4294901760
  %4135 = vmatpush.msra.mxu0 %v4134
  %v4136 = vand.u32 %v52, 4294901760
  %4137 = vmatpush.msra.mxu0 %v4136
  %v4138 = vand.u32 %v51, 4294901760
  %4139 = vmatpush.msra.mxu0 %v4138
  %v4140 = vand.u32 %v50, 4294901760
  %4141 = vmatpush.msra.mxu0 %v4140
  %v4142 = vand.u32 %v49, 4294901760
  %4143 = vmatpush.msra.mxu0 %v4142
  %v4144 = vand.u32 %v48, 4294901760
  %4145 = vmatpush.msra.mxu0 %v4144
  %v4146 = vand.u32 %v47, 4294901760
  %4147 = vmatpush.msra.mxu0 %v4146
  %v4148 = vand.u32 %v46, 4294901760
  %4149 = vmatpush.msra.mxu0 %v4148
  %v4150 = vand.u32 %v45, 4294901760
  %4151 = vmatpush.msra.mxu0 %v4150
  %v4152 = vand.u32 %v3922, 4294901760
  %v4153 = vsub.f32 %v3922, %v4152
  %v4154 = vand.u32 %v4153, 4294901760
  %4155 = vmatmul.f32.gmra.mxu0 %v4154
  %v4156 = vpop.f32.mrf.mxu0
  %v4157 = vadd.f32 %v4118, %v4156
  %4158 = vdwg.mxu0
  %v4159 = vand.u32 %v60, 4294901760
  %v4160 = vsub.f32 %v60, %v4159
  %v4161 = vand.u32 %v4160, 4294901760
  %4162 = vmatpush.msra.mxu0 %v4161
  %v4163 = vand.u32 %v59, 4294901760
  %v4164 = vsub.f32 %v59, %v4163
  %v4165 = vand.u32 %v4164, 4294901760
  %4166 = vmatpush.msra.mxu0 %v4165
  %v4167 = vand.u32 %v58, 4294901760
  %v4168 = vsub.f32 %v58, %v4167
  %v4169 = vand.u32 %v4168, 4294901760
  %4170 = vmatpush.msra.mxu0 %v4169
  %v4171 = vand.u32 %v57, 4294901760
  %v4172 = vsub.f32 %v57, %v4171
  %v4173 = vand.u32 %v4172, 4294901760
  %4174 = vmatpush.msra.mxu0 %v4173
  %v4175 = vand.u32 %v56, 4294901760
  %v4176 = vsub.f32 %v56, %v4175
  %v4177 = vand.u32 %v4176, 4294901760
  %4178 = vmatpush.msra.mxu0 %v4177
  %v4179 = vand.u32 %v55, 4294901760
  %v4180 = vsub.f32 %v55, %v4179
  %v4181 = vand.u32 %v4180, 4294901760
  %4182 = vmatpush.msra.mxu0 %v4181
  %v4183 = vand.u32 %v54, 4294901760
  %v4184 = vsub.f32 %v54, %v4183
  %v4185 = vand.u32 %v4184, 4294901760
  %4186 = vmatpush.msra.mxu0 %v4185
  %v4187 = vand.u32 %v53, 4294901760
  %v4188 = vsub.f32 %v53, %v4187
  %v4189 = vand.u32 %v4188, 4294901760
  %4190 = vmatpush.msra.mxu0 %v4189
  %v4191 = vand.u32 %v52, 4294901760
  %v4192 = vsub.f32 %v52, %v4191
  %v4193 = vand.u32 %v4192, 4294901760
  %4194 = vmatpush.msra.mxu0 %v4193
  %v4195 = vand.u32 %v51, 4294901760
  %v4196 = vsub.f32 %v51, %v4195
  %v4197 = vand.u32 %v4196, 4294901760
  %4198 = vmatpush.msra.mxu0 %v4197
  %v4199 = vand.u32 %v50, 4294901760
  %v4200 = vsub.f32 %v50, %v4199
  %v4201 = vand.u32 %v4200, 4294901760
  %4202 = vmatpush.msra.mxu0 %v4201
  %v4203 = vand.u32 %v49, 4294901760
  %v4204 = vsub.f32 %v49, %v4203
  %v4205 = vand.u32 %v4204, 4294901760
  %4206 = vmatpush.msra.mxu0 %v4205
  %v4207 = vand.u32 %v48, 4294901760
  %v4208 = vsub.f32 %v48, %v4207
  %v4209 = vand.u32 %v4208, 4294901760
  %4210 = vmatpush.msra.mxu0 %v4209
  %v4211 = vand.u32 %v47, 4294901760
  %v4212 = vsub.f32 %v47, %v4211
  %v4213 = vand.u32 %v4212, 4294901760
  %4214 = vmatpush.msra.mxu0 %v4213
  %v4215 = vand.u32 %v46, 4294901760
  %v4216 = vsub.f32 %v46, %v4215
  %v4217 = vand.u32 %v4216, 4294901760
  %4218 = vmatpush.msra.mxu0 %v4217
  %v4219 = vand.u32 %v45, 4294901760
  %v4220 = vsub.f32 %v45, %v4219
  %v4221 = vand.u32 %v4220, 4294901760
  %4222 = vmatpush.msra.mxu0 %v4221
  %v4223 = vand.u32 %v3922, 4294901760
  %4224 = vmatmul.f32.gmra.mxu0 %v4223
  %v4225 = vpop.f32.mrf.mxu0
  %v4226 = vadd.f32 %v4157, %v4225
  %4227 = vdwg.mxu0
  %v4228 = vand.u32 %v60, 4294901760
  %4229 = vmatpush.msra.mxu0 %v4228
  %v4230 = vand.u32 %v59, 4294901760
  %4231 = vmatpush.msra.mxu0 %v4230
  %v4232 = vand.u32 %v58, 4294901760
  %4233 = vmatpush.msra.mxu0 %v4232
  %v4234 = vand.u32 %v57, 4294901760
  %4235 = vmatpush.msra.mxu0 %v4234
  %v4236 = vand.u32 %v56, 4294901760
  %4237 = vmatpush.msra.mxu0 %v4236
  %v4238 = vand.u32 %v55, 4294901760
  %4239 = vmatpush.msra.mxu0 %v4238
  %v4240 = vand.u32 %v54, 4294901760
  %4241 = vmatpush.msra.mxu0 %v4240
  %v4242 = vand.u32 %v53, 4294901760
  %4243 = vmatpush.msra.mxu0 %v4242
  %v4244 = vand.u32 %v52, 4294901760
  %4245 = vmatpush.msra.mxu0 %v4244
  %v4246 = vand.u32 %v51, 4294901760
  %4247 = vmatpush.msra.mxu0 %v4246
  %v4248 = vand.u32 %v50, 4294901760
  %4249 = vmatpush.msra.mxu0 %v4248
  %v4250 = vand.u32 %v49, 4294901760
  %4251 = vmatpush.msra.mxu0 %v4250
  %v4252 = vand.u32 %v48, 4294901760
  %4253 = vmatpush.msra.mxu0 %v4252
  %v4254 = vand.u32 %v47, 4294901760
  %4255 = vmatpush.msra.mxu0 %v4254
  %v4256 = vand.u32 %v46, 4294901760
  %4257 = vmatpush.msra.mxu0 %v4256
  %v4258 = vand.u32 %v45, 4294901760
  %4259 = vmatpush.msra.mxu0 %v4258
  %v4260 = vand.u32 %v3922, 4294901760
  %4261 = vmatmul.f32.gmra.mxu0 %v4260
  %v4262 = vpop.f32.mrf.mxu0
  %v4263 = vadd.f32 %v4226, %v4262
  %4264 = vdwg.mxu0
  %v4265 = vmul.f32 %v3922, %v3922
  %v4266 = vand.u32 %v60, 4294901760
  %4267 = vmatpush.msra.mxu0 %v4266
  %v4268 = vand.u32 %v59, 4294901760
  %4269 = vmatpush.msra.mxu0 %v4268
  %v4270 = vand.u32 %v58, 4294901760
  %4271 = vmatpush.msra.mxu0 %v4270
  %v4272 = vand.u32 %v57, 4294901760
  %4273 = vmatpush.msra.mxu0 %v4272
  %v4274 = vand.u32 %v56, 4294901760
  %4275 = vmatpush.msra.mxu0 %v4274
  %v4276 = vand.u32 %v55, 4294901760
  %4277 = vmatpush.msra.mxu0 %v4276
  %v4278 = vand.u32 %v54, 4294901760
  %4279 = vmatpush.msra.mxu0 %v4278
  %v4280 = vand.u32 %v53, 4294901760
  %4281 = vmatpush.msra.mxu0 %v4280
  %v4282 = vand.u32 %v52, 4294901760
  %4283 = vmatpush.msra.mxu0 %v4282
  %v4284 = vand.u32 %v51, 4294901760
  %4285 = vmatpush.msra.mxu0 %v4284
  %v4286 = vand.u32 %v50, 4294901760
  %4287 = vmatpush.msra.mxu0 %v4286
  %v4288 = vand.u32 %v49, 4294901760
  %4289 = vmatpush.msra.mxu0 %v4288
  %v4290 = vand.u32 %v48, 4294901760
  %4291 = vmatpush.msra.mxu0 %v4290
  %v4292 = vand.u32 %v47, 4294901760
  %4293 = vmatpush.msra.mxu0 %v4292
  %v4294 = vand.u32 %v46, 4294901760
  %4295 = vmatpush.msra.mxu0 %v4294
  %v4296 = vand.u32 %v45, 4294901760
  %4297 = vmatpush.msra.mxu0 %v4296
  %v4298 = vand.u32 %v4265, 4294901760
  %v4299 = vsub.f32 %v4265, %v4298
  %v4300 = vand.u32 %v4299, 4294901760
  %v4301 = vsub.f32 %v4299, %v4300
  %v4302 = vand.u32 %v4301, 4294901760
  %4303 = vmatmul.f32.gmra.mxu0 %v4302
  %v4304 = vpop.f32.mrf.mxu0
  %v4305 = vadd.f32 0.0, %v4304
  %4306 = vdwg.mxu0
  %v4307 = vand.u32 %v60, 4294901760
  %v4308 = vsub.f32 %v60, %v4307
  %v4309 = vand.u32 %v4308, 4294901760
  %v4310 = vsub.f32 %v4308, %v4309
  %v4311 = vand.u32 %v4310, 4294901760
  %4312 = vmatpush.msra.mxu0 %v4311
  %v4313 = vand.u32 %v59, 4294901760
  %v4314 = vsub.f32 %v59, %v4313
  %v4315 = vand.u32 %v4314, 4294901760
  %v4316 = vsub.f32 %v4314, %v4315
  %v4317 = vand.u32 %v4316, 4294901760
  %4318 = vmatpush.msra.mxu0 %v4317
  %v4319 = vand.u32 %v58, 4294901760
  %v4320 = vsub.f32 %v58, %v4319
  %v4321 = vand.u32 %v4320, 4294901760
  %v4322 = vsub.f32 %v4320, %v4321
  %v4323 = vand.u32 %v4322, 4294901760
  %4324 = vmatpush.msra.mxu0 %v4323
  %v4325 = vand.u32 %v57, 4294901760
  %v4326 = vsub.f32 %v57, %v4325
  %v4327 = vand.u32 %v4326, 4294901760
  %v4328 = vsub.f32 %v4326, %v4327
  %v4329 = vand.u32 %v4328, 4294901760
  %4330 = vmatpush.msra.mxu0 %v4329
  %v4331 = vand.u32 %v56, 4294901760
  %v4332 = vsub.f32 %v56, %v4331
  %v4333 = vand.u32 %v4332, 4294901760
  %v4334 = vsub.f32 %v4332, %v4333
  %v4335 = vand.u32 %v4334, 4294901760
  %4336 = vmatpush.msra.mxu0 %v4335
  %v4337 = vand.u32 %v55, 4294901760
  %v4338 = vsub.f32 %v55, %v4337
  %v4339 = vand.u32 %v4338, 4294901760
  %v4340 = vsub.f32 %v4338, %v4339
  %v4341 = vand.u32 %v4340, 4294901760
  %4342 = vmatpush.msra.mxu0 %v4341
  %v4343 = vand.u32 %v54, 4294901760
  %v4344 = vsub.f32 %v54, %v4343
  %v4345 = vand.u32 %v4344, 4294901760
  %v4346 = vsub.f32 %v4344, %v4345
  %v4347 = vand.u32 %v4346, 4294901760
  %4348 = vmatpush.msra.mxu0 %v4347
  %v4349 = vand.u32 %v53, 4294901760
  %v4350 = vsub.f32 %v53, %v4349
  %v4351 = vand.u32 %v4350, 4294901760
  %v4352 = vsub.f32 %v4350, %v4351
  %v4353 = vand.u32 %v4352, 4294901760
  %4354 = vmatpush.msra.mxu0 %v4353
  %v4355 = vand.u32 %v52, 4294901760
  %v4356 = vsub.f32 %v52, %v4355
  %v4357 = vand.u32 %v4356, 4294901760
  %v4358 = vsub.f32 %v4356, %v4357
  %v4359 = vand.u32 %v4358, 4294901760
  %4360 = vmatpush.msra.mxu0 %v4359
  %v4361 = vand.u32 %v51, 4294901760
  %v4362 = vsub.f32 %v51, %v4361
  %v4363 = vand.u32 %v4362, 4294901760
  %v4364 = vsub.f32 %v4362, %v4363
  %v4365 = vand.u32 %v4364, 4294901760
  %4366 = vmatpush.msra.mxu0 %v4365
  %v4367 = vand.u32 %v50, 4294901760
  %v4368 = vsub.f32 %v50, %v4367
  %v4369 = vand.u32 %v4368, 4294901760
  %v4370 = vsub.f32 %v4368, %v4369
  %v4371 = vand.u32 %v4370, 4294901760
  %4372 = vmatpush.msra.mxu0 %v4371
  %v4373 = vand.u32 %v49, 4294901760
  %v4374 = vsub.f32 %v49, %v4373
  %v4375 = vand.u32 %v4374, 4294901760
  %v4376 = vsub.f32 %v4374, %v4375
  %v4377 = vand.u32 %v4376, 4294901760
  %4378 = vmatpush.msra.mxu0 %v4377
  %v4379 = vand.u32 %v48, 4294901760
  %v4380 = vsub.f32 %v48, %v4379
  %v4381 = vand.u32 %v4380, 4294901760
  %v4382 = vsub.f32 %v4380, %v4381
  %v4383 = vand.u32 %v4382, 4294901760
  %4384 = vmatpush.msra.mxu0 %v4383
  %v4385 = vand.u32 %v47, 4294901760
  %v4386 = vsub.f32 %v47, %v4385
  %v4387 = vand.u32 %v4386, 4294901760
  %v4388 = vsub.f32 %v4386, %v4387
  %v4389 = vand.u32 %v4388, 4294901760
  %4390 = vmatpush.msra.mxu0 %v4389
  %v4391 = vand.u32 %v46, 4294901760
  %v4392 = vsub.f32 %v46, %v4391
  %v4393 = vand.u32 %v4392, 4294901760
  %v4394 = vsub.f32 %v4392, %v4393
  %v4395 = vand.u32 %v4394, 4294901760
  %4396 = vmatpush.msra.mxu0 %v4395
  %v4397 = vand.u32 %v45, 4294901760
  %v4398 = vsub.f32 %v45, %v4397
  %v4399 = vand.u32 %v4398, 4294901760
  %v4400 = vsub.f32 %v4398, %v4399
  %v4401 = vand.u32 %v4400, 4294901760
  %4402 = vmatpush.msra.mxu0 %v4401
  %v4403 = vand.u32 %v4265, 4294901760
  %4404 = vmatmul.f32.gmra.mxu0 %v4403
  %v4405 = vpop.f32.mrf.mxu0
  %v4406 = vadd.f32 %v4305, %v4405
  %4407 = vdwg.mxu0
  %v4408 = vand.u32 %v60, 4294901760
  %v4409 = vsub.f32 %v60, %v4408
  %4410 = vmatpush.msra.mxu0 %v4409
  %v4411 = vand.u32 %v59, 4294901760
  %v4412 = vsub.f32 %v59, %v4411
  %4413 = vmatpush.msra.mxu0 %v4412
  %v4414 = vand.u32 %v58, 4294901760
  %v4415 = vsub.f32 %v58, %v4414
  %4416 = vmatpush.msra.mxu0 %v4415
  %v4417 = vand.u32 %v57, 4294901760
  %v4418 = vsub.f32 %v57, %v4417
  %4419 = vmatpush.msra.mxu0 %v4418
  %v4420 = vand.u32 %v56, 4294901760
  %v4421 = vsub.f32 %v56, %v4420
  %4422 = vmatpush.msra.mxu0 %v4421
  %v4423 = vand.u32 %v55, 4294901760
  %v4424 = vsub.f32 %v55, %v4423
  %4425 = vmatpush.msra.mxu0 %v4424
  %v4426 = vand.u32 %v54, 4294901760
  %v4427 = vsub.f32 %v54, %v4426
  %4428 = vmatpush.msra.mxu0 %v4427
  %v4429 = vand.u32 %v53, 4294901760
  %v4430 = vsub.f32 %v53, %v4429
  %4431 = vmatpush.msra.mxu0 %v4430
  %v4432 = vand.u32 %v52, 4294901760
  %v4433 = vsub.f32 %v52, %v4432
  %4434 = vmatpush.msra.mxu0 %v4433
  %v4435 = vand.u32 %v51, 4294901760
  %v4436 = vsub.f32 %v51, %v4435
  %4437 = vmatpush.msra.mxu0 %v4436
  %v4438 = vand.u32 %v50, 4294901760
  %v4439 = vsub.f32 %v50, %v4438
  %4440 = vmatpush.msra.mxu0 %v4439
  %v4441 = vand.u32 %v49, 4294901760
  %v4442 = vsub.f32 %v49, %v4441
  %4443 = vmatpush.msra.mxu0 %v4442
  %v4444 = vand.u32 %v48, 4294901760
  %v4445 = vsub.f32 %v48, %v4444
  %4446 = vmatpush.msra.mxu0 %v4445
  %v4447 = vand.u32 %v47, 4294901760
  %v4448 = vsub.f32 %v47, %v4447
  %4449 = vmatpush.msra.mxu0 %v4448
  %v4450 = vand.u32 %v46, 4294901760
  %v4451 = vsub.f32 %v46, %v4450
  %4452 = vmatpush.msra.mxu0 %v4451
  %v4453 = vand.u32 %v45, 4294901760
  %v4454 = vsub.f32 %v45, %v4453
  %4455 = vmatpush.msra.mxu0 %v4454
  %v4456 = vand.u32 %v4265, 4294901760
  %v4457 = vsub.f32 %v4265, %v4456
  %4458 = vmatmul.f32.gmra.mxu0 %v4457
  %v4459 = vpop.f32.mrf.mxu0
  %v4460 = vadd.f32 %v4406, %v4459
  %4461 = vdwg.mxu0
  %v4462 = vand.u32 %v60, 4294901760
  %4463 = vmatpush.msra.mxu0 %v4462
  %v4464 = vand.u32 %v59, 4294901760
  %4465 = vmatpush.msra.mxu0 %v4464
  %v4466 = vand.u32 %v58, 4294901760
  %4467 = vmatpush.msra.mxu0 %v4466
  %v4468 = vand.u32 %v57, 4294901760
  %4469 = vmatpush.msra.mxu0 %v4468
  %v4470 = vand.u32 %v56, 4294901760
  %4471 = vmatpush.msra.mxu0 %v4470
  %v4472 = vand.u32 %v55, 4294901760
  %4473 = vmatpush.msra.mxu0 %v4472
  %v4474 = vand.u32 %v54, 4294901760
  %4475 = vmatpush.msra.mxu0 %v4474
  %v4476 = vand.u32 %v53, 4294901760
  %4477 = vmatpush.msra.mxu0 %v4476
  %v4478 = vand.u32 %v52, 4294901760
  %4479 = vmatpush.msra.mxu0 %v4478
  %v4480 = vand.u32 %v51, 4294901760
  %4481 = vmatpush.msra.mxu0 %v4480
  %v4482 = vand.u32 %v50, 4294901760
  %4483 = vmatpush.msra.mxu0 %v4482
  %v4484 = vand.u32 %v49, 4294901760
  %4485 = vmatpush.msra.mxu0 %v4484
  %v4486 = vand.u32 %v48, 4294901760
  %4487 = vmatpush.msra.mxu0 %v4486
  %v4488 = vand.u32 %v47, 4294901760
  %4489 = vmatpush.msra.mxu0 %v4488
  %v4490 = vand.u32 %v46, 4294901760
  %4491 = vmatpush.msra.mxu0 %v4490
  %v4492 = vand.u32 %v45, 4294901760
  %4493 = vmatpush.msra.mxu0 %v4492
  %v4494 = vand.u32 %v4265, 4294901760
  %v4495 = vsub.f32 %v4265, %v4494
  %v4496 = vand.u32 %v4495, 4294901760
  %4497 = vmatmul.f32.gmra.mxu0 %v4496
  %v4498 = vpop.f32.mrf.mxu0
  %v4499 = vadd.f32 %v4460, %v4498
  %4500 = vdwg.mxu0
  %v4501 = vand.u32 %v60, 4294901760
  %v4502 = vsub.f32 %v60, %v4501
  %v4503 = vand.u32 %v4502, 4294901760
  %4504 = vmatpush.msra.mxu0 %v4503
  %v4505 = vand.u32 %v59, 4294901760
  %v4506 = vsub.f32 %v59, %v4505
  %v4507 = vand.u32 %v4506, 4294901760
  %4508 = vmatpush.msra.mxu0 %v4507
  %v4509 = vand.u32 %v58, 4294901760
  %v4510 = vsub.f32 %v58, %v4509
  %v4511 = vand.u32 %v4510, 4294901760
  %4512 = vmatpush.msra.mxu0 %v4511
  %v4513 = vand.u32 %v57, 4294901760
  %v4514 = vsub.f32 %v57, %v4513
  %v4515 = vand.u32 %v4514, 4294901760
  %4516 = vmatpush.msra.mxu0 %v4515
  %v4517 = vand.u32 %v56, 4294901760
  %v4518 = vsub.f32 %v56, %v4517
  %v4519 = vand.u32 %v4518, 4294901760
  %4520 = vmatpush.msra.mxu0 %v4519
  %v4521 = vand.u32 %v55, 4294901760
  %v4522 = vsub.f32 %v55, %v4521
  %v4523 = vand.u32 %v4522, 4294901760
  %4524 = vmatpush.msra.mxu0 %v4523
  %v4525 = vand.u32 %v54, 4294901760
  %v4526 = vsub.f32 %v54, %v4525
  %v4527 = vand.u32 %v4526, 4294901760
  %4528 = vmatpush.msra.mxu0 %v4527
  %v4529 = vand.u32 %v53, 4294901760
  %v4530 = vsub.f32 %v53, %v4529
  %v4531 = vand.u32 %v4530, 4294901760
  %4532 = vmatpush.msra.mxu0 %v4531
  %v4533 = vand.u32 %v52, 4294901760
  %v4534 = vsub.f32 %v52, %v4533
  %v4535 = vand.u32 %v4534, 4294901760
  %4536 = vmatpush.msra.mxu0 %v4535
  %v4537 = vand.u32 %v51, 4294901760
  %v4538 = vsub.f32 %v51, %v4537
  %v4539 = vand.u32 %v4538, 4294901760
  %4540 = vmatpush.msra.mxu0 %v4539
  %v4541 = vand.u32 %v50, 4294901760
  %v4542 = vsub.f32 %v50, %v4541
  %v4543 = vand.u32 %v4542, 4294901760
  %4544 = vmatpush.msra.mxu0 %v4543
  %v4545 = vand.u32 %v49, 4294901760
  %v4546 = vsub.f32 %v49, %v4545
  %v4547 = vand.u32 %v4546, 4294901760
  %4548 = vmatpush.msra.mxu0 %v4547
  %v4549 = vand.u32 %v48, 4294901760
  %v4550 = vsub.f32 %v48, %v4549
  %v4551 = vand.u32 %v4550, 4294901760
  %4552 = vmatpush.msra.mxu0 %v4551
  %v4553 = vand.u32 %v47, 4294901760
  %v4554 = vsub.f32 %v47, %v4553
  %v4555 = vand.u32 %v4554, 4294901760
  %4556 = vmatpush.msra.mxu0 %v4555
  %v4557 = vand.u32 %v46, 4294901760
  %v4558 = vsub.f32 %v46, %v4557
  %v4559 = vand.u32 %v4558, 4294901760
  %4560 = vmatpush.msra.mxu0 %v4559
  %v4561 = vand.u32 %v45, 4294901760
  %v4562 = vsub.f32 %v45, %v4561
  %v4563 = vand.u32 %v4562, 4294901760
  %4564 = vmatpush.msra.mxu0 %v4563
  %v4565 = vand.u32 %v4265, 4294901760
  %4566 = vmatmul.f32.gmra.mxu0 %v4565
  %v4567 = vpop.f32.mrf.mxu0
  %v4568 = vadd.f32 %v4499, %v4567
  %4569 = vdwg.mxu0
  %v4570 = vand.u32 %v60, 4294901760
  %4571 = vmatpush.msra.mxu0 %v4570
  %v4572 = vand.u32 %v59, 4294901760
  %4573 = vmatpush.msra.mxu0 %v4572
  %v4574 = vand.u32 %v58, 4294901760
  %4575 = vmatpush.msra.mxu0 %v4574
  %v4576 = vand.u32 %v57, 4294901760
  %4577 = vmatpush.msra.mxu0 %v4576
  %v4578 = vand.u32 %v56, 4294901760
  %4579 = vmatpush.msra.mxu0 %v4578
  %v4580 = vand.u32 %v55, 4294901760
  %4581 = vmatpush.msra.mxu0 %v4580
  %v4582 = vand.u32 %v54, 4294901760
  %4583 = vmatpush.msra.mxu0 %v4582
  %v4584 = vand.u32 %v53, 4294901760
  %4585 = vmatpush.msra.mxu0 %v4584
  %v4586 = vand.u32 %v52, 4294901760
  %4587 = vmatpush.msra.mxu0 %v4586
  %v4588 = vand.u32 %v51, 4294901760
  %4589 = vmatpush.msra.mxu0 %v4588
  %v4590 = vand.u32 %v50, 4294901760
  %4591 = vmatpush.msra.mxu0 %v4590
  %v4592 = vand.u32 %v49, 4294901760
  %4593 = vmatpush.msra.mxu0 %v4592
  %v4594 = vand.u32 %v48, 4294901760
  %4595 = vmatpush.msra.mxu0 %v4594
  %v4596 = vand.u32 %v47, 4294901760
  %4597 = vmatpush.msra.mxu0 %v4596
  %v4598 = vand.u32 %v46, 4294901760
  %4599 = vmatpush.msra.mxu0 %v4598
  %v4600 = vand.u32 %v45, 4294901760
  %4601 = vmatpush.msra.mxu0 %v4600
  %v4602 = vand.u32 %v4265, 4294901760
  %4603 = vmatmul.f32.gmra.mxu0 %v4602
  %v4604 = vpop.f32.mrf.mxu0
  %v4605 = vadd.f32 %v4568, %v4604
  %4606 = vdwg.mxu0
  %v4607 = vsel %vm938, %v4263, 0.0
  %v4608 = vrot.slane %v4607, 4
  %v4609 = vadd.f32 %v4607, %v4608
  %v4610 = vrot.slane %v4609, 2
  %v4611 = vadd.f32 %v4609, %v4610
  %v4612 = vrot.slane %v4611, 1
  %v4613 = vadd.f32 %v4611, %v4612
  %v4614 = vmul.f32 %v4613, 0.0078125
  %v4615 = vsel %vm938, %v4605, 0.0
  %v4616 = vrot.slane %v4615, 4
  %v4617 = vadd.f32 %v4615, %v4616
  %v4618 = vrot.slane %v4617, 2
  %v4619 = vadd.f32 %v4617, %v4618
  %v4620 = vrot.slane %v4619, 1
  %v4621 = vadd.f32 %v4619, %v4620
  %v4622 = vmul.f32 %v4621, 0.0078125
  %v4623 = vmul.f32 %v4614, %v4614
  %v4624 = vsub.f32 %v4622, %v4623
  %v4625 = vmax.f32 %v4624, 0.0
  %v4626 = vadd.f32 %v4625, 1e-05
  %v4627 = vrsqrt.pop %v4626
  %v4628 = vmul.f32 %v4627, %v4626
  %v4629 = vmul.f32 %v4628, %v4627
  %v4630 = vmul.f32 0.5, %v4629
  %v4631 = vsub.f32 1.5, %v4630
  %v4632 = vmul.f32 %v4627, %v4631
  %vm4633 = vweird.f32 %v4626
  %vm4634 = vweird.f32 %v4627
  %vm4635 = vmor %vm4633, %vm4634
  %v4636 = vsel %vm4635, %v4627, %v4632
  %v4638 = vsel %vm938, %v4614, 0
  %4640 = vmatpush.msra.mxu0 0.0
  %4641 = vmatpush.msra.mxu0 0.0
  %4642 = vmatpush.msra.mxu0 0.0
  %4643 = vmatpush.msra.mxu0 0.0
  %4644 = vmatpush.msra.mxu0 0.0
  %4645 = vmatpush.msra.mxu0 0.0
  %4646 = vmatpush.msra.mxu0 0.0
  %4647 = vmatpush.msra.mxu0 0.0
  %4648 = vmatpush.msra.mxu0 0.0
  %4649 = vmatpush.msra.mxu0 0.0
  %4650 = vmatpush.msra.mxu0 0.0
  %4651 = vmatpush.msra.mxu0 0.0
  %4652 = vmatpush.msra.mxu0 0.0
  %4653 = vmatpush.msra.mxu0 0.0
  %4654 = vmatpush.msra.mxu0 0.0
  %v4655 = vand.u32 %v61, 4294901760
  %4656 = vmatpush.msra.mxu0 %v4655
  %v4657 = vand.u32 %v4638, 4294901760
  %v4658 = vsub.f32 %v4638, %v4657
  %v4659 = vand.u32 %v4658, 4294901760
  %v4660 = vsub.f32 %v4658, %v4659
  %v4661 = vand.u32 %v4660, 4294901760
  %4662 = vmatmul.f32.gmra.mxu0 %v4661
  %v4663 = vpop.f32.mrf.mxu0
  %v4664 = vadd.f32 0.0, %v4663
  %4665 = vdwg.mxu0
  %4666 = vmatpush.msra.mxu0 0.0
  %4667 = vmatpush.msra.mxu0 0.0
  %4668 = vmatpush.msra.mxu0 0.0
  %4669 = vmatpush.msra.mxu0 0.0
  %4670 = vmatpush.msra.mxu0 0.0
  %4671 = vmatpush.msra.mxu0 0.0
  %4672 = vmatpush.msra.mxu0 0.0
  %4673 = vmatpush.msra.mxu0 0.0
  %4674 = vmatpush.msra.mxu0 0.0
  %4675 = vmatpush.msra.mxu0 0.0
  %4676 = vmatpush.msra.mxu0 0.0
  %4677 = vmatpush.msra.mxu0 0.0
  %4678 = vmatpush.msra.mxu0 0.0
  %4679 = vmatpush.msra.mxu0 0.0
  %4680 = vmatpush.msra.mxu0 0.0
  %v4681 = vand.u32 %v61, 4294901760
  %v4682 = vsub.f32 %v61, %v4681
  %v4683 = vand.u32 %v4682, 4294901760
  %v4684 = vsub.f32 %v4682, %v4683
  %v4685 = vand.u32 %v4684, 4294901760
  %4686 = vmatpush.msra.mxu0 %v4685
  %v4687 = vand.u32 %v4638, 4294901760
  %4688 = vmatmul.f32.gmra.mxu0 %v4687
  %v4689 = vpop.f32.mrf.mxu0
  %v4690 = vadd.f32 %v4664, %v4689
  %4691 = vdwg.mxu0
  %4692 = vmatpush.msra.mxu0 0.0
  %4693 = vmatpush.msra.mxu0 0.0
  %4694 = vmatpush.msra.mxu0 0.0
  %4695 = vmatpush.msra.mxu0 0.0
  %4696 = vmatpush.msra.mxu0 0.0
  %4697 = vmatpush.msra.mxu0 0.0
  %4698 = vmatpush.msra.mxu0 0.0
  %4699 = vmatpush.msra.mxu0 0.0
  %4700 = vmatpush.msra.mxu0 0.0
  %4701 = vmatpush.msra.mxu0 0.0
  %4702 = vmatpush.msra.mxu0 0.0
  %4703 = vmatpush.msra.mxu0 0.0
  %4704 = vmatpush.msra.mxu0 0.0
  %4705 = vmatpush.msra.mxu0 0.0
  %4706 = vmatpush.msra.mxu0 0.0
  %v4707 = vand.u32 %v61, 4294901760
  %v4708 = vsub.f32 %v61, %v4707
  %4709 = vmatpush.msra.mxu0 %v4708
  %v4710 = vand.u32 %v4638, 4294901760
  %v4711 = vsub.f32 %v4638, %v4710
  %4712 = vmatmul.f32.gmra.mxu0 %v4711
  %v4713 = vpop.f32.mrf.mxu0
  %v4714 = vadd.f32 %v4690, %v4713
  %4715 = vdwg.mxu0
  %4716 = vmatpush.msra.mxu0 0.0
  %4717 = vmatpush.msra.mxu0 0.0
  %4718 = vmatpush.msra.mxu0 0.0
  %4719 = vmatpush.msra.mxu0 0.0
  %4720 = vmatpush.msra.mxu0 0.0
  %4721 = vmatpush.msra.mxu0 0.0
  %4722 = vmatpush.msra.mxu0 0.0
  %4723 = vmatpush.msra.mxu0 0.0
  %4724 = vmatpush.msra.mxu0 0.0
  %4725 = vmatpush.msra.mxu0 0.0
  %4726 = vmatpush.msra.mxu0 0.0
  %4727 = vmatpush.msra.mxu0 0.0
  %4728 = vmatpush.msra.mxu0 0.0
  %4729 = vmatpush.msra.mxu0 0.0
  %4730 = vmatpush.msra.mxu0 0.0
  %v4731 = vand.u32 %v61, 4294901760
  %4732 = vmatpush.msra.mxu0 %v4731
  %v4733 = vand.u32 %v4638, 4294901760
  %v4734 = vsub.f32 %v4638, %v4733
  %v4735 = vand.u32 %v4734, 4294901760
  %4736 = vmatmul.f32.gmra.mxu0 %v4735
  %v4737 = vpop.f32.mrf.mxu0
  %v4738 = vadd.f32 %v4714, %v4737
  %4739 = vdwg.mxu0
  %4740 = vmatpush.msra.mxu0 0.0
  %4741 = vmatpush.msra.mxu0 0.0
  %4742 = vmatpush.msra.mxu0 0.0
  %4743 = vmatpush.msra.mxu0 0.0
  %4744 = vmatpush.msra.mxu0 0.0
  %4745 = vmatpush.msra.mxu0 0.0
  %4746 = vmatpush.msra.mxu0 0.0
  %4747 = vmatpush.msra.mxu0 0.0
  %4748 = vmatpush.msra.mxu0 0.0
  %4749 = vmatpush.msra.mxu0 0.0
  %4750 = vmatpush.msra.mxu0 0.0
  %4751 = vmatpush.msra.mxu0 0.0
  %4752 = vmatpush.msra.mxu0 0.0
  %4753 = vmatpush.msra.mxu0 0.0
  %4754 = vmatpush.msra.mxu0 0.0
  %v4755 = vand.u32 %v61, 4294901760
  %v4756 = vsub.f32 %v61, %v4755
  %v4757 = vand.u32 %v4756, 4294901760
  %4758 = vmatpush.msra.mxu0 %v4757
  %v4759 = vand.u32 %v4638, 4294901760
  %4760 = vmatmul.f32.gmra.mxu0 %v4759
  %v4761 = vpop.f32.mrf.mxu0
  %v4762 = vadd.f32 %v4738, %v4761
  %4763 = vdwg.mxu0
  %4764 = vmatpush.msra.mxu0 0.0
  %4765 = vmatpush.msra.mxu0 0.0
  %4766 = vmatpush.msra.mxu0 0.0
  %4767 = vmatpush.msra.mxu0 0.0
  %4768 = vmatpush.msra.mxu0 0.0
  %4769 = vmatpush.msra.mxu0 0.0
  %4770 = vmatpush.msra.mxu0 0.0
  %4771 = vmatpush.msra.mxu0 0.0
  %4772 = vmatpush.msra.mxu0 0.0
  %4773 = vmatpush.msra.mxu0 0.0
  %4774 = vmatpush.msra.mxu0 0.0
  %4775 = vmatpush.msra.mxu0 0.0
  %4776 = vmatpush.msra.mxu0 0.0
  %4777 = vmatpush.msra.mxu0 0.0
  %4778 = vmatpush.msra.mxu0 0.0
  %v4779 = vand.u32 %v61, 4294901760
  %4780 = vmatpush.msra.mxu0 %v4779
  %v4781 = vand.u32 %v4638, 4294901760
  %4782 = vmatmul.f32.gmra.mxu0 %v4781
  %v4783 = vpop.f32.mrf.mxu0
  %v4784 = vadd.f32 %v4762, %v4783
  %4785 = vdwg.mxu0
  %v4787 = vsel %vm938, %v4636, 0
  %4789 = vmatpush.msra.mxu0 0.0
  %4790 = vmatpush.msra.mxu0 0.0
  %4791 = vmatpush.msra.mxu0 0.0
  %4792 = vmatpush.msra.mxu0 0.0
  %4793 = vmatpush.msra.mxu0 0.0
  %4794 = vmatpush.msra.mxu0 0.0
  %4795 = vmatpush.msra.mxu0 0.0
  %4796 = vmatpush.msra.mxu0 0.0
  %4797 = vmatpush.msra.mxu0 0.0
  %4798 = vmatpush.msra.mxu0 0.0
  %4799 = vmatpush.msra.mxu0 0.0
  %4800 = vmatpush.msra.mxu0 0.0
  %4801 = vmatpush.msra.mxu0 0.0
  %4802 = vmatpush.msra.mxu0 0.0
  %4803 = vmatpush.msra.mxu0 0.0
  %v4804 = vand.u32 %v61, 4294901760
  %4805 = vmatpush.msra.mxu0 %v4804
  %v4806 = vand.u32 %v4787, 4294901760
  %v4807 = vsub.f32 %v4787, %v4806
  %v4808 = vand.u32 %v4807, 4294901760
  %v4809 = vsub.f32 %v4807, %v4808
  %v4810 = vand.u32 %v4809, 4294901760
  %4811 = vmatmul.f32.gmra.mxu0 %v4810
  %v4812 = vpop.f32.mrf.mxu0
  %v4813 = vadd.f32 0.0, %v4812
  %4814 = vdwg.mxu0
  %4815 = vmatpush.msra.mxu0 0.0
  %4816 = vmatpush.msra.mxu0 0.0
  %4817 = vmatpush.msra.mxu0 0.0
  %4818 = vmatpush.msra.mxu0 0.0
  %4819 = vmatpush.msra.mxu0 0.0
  %4820 = vmatpush.msra.mxu0 0.0
  %4821 = vmatpush.msra.mxu0 0.0
  %4822 = vmatpush.msra.mxu0 0.0
  %4823 = vmatpush.msra.mxu0 0.0
  %4824 = vmatpush.msra.mxu0 0.0
  %4825 = vmatpush.msra.mxu0 0.0
  %4826 = vmatpush.msra.mxu0 0.0
  %4827 = vmatpush.msra.mxu0 0.0
  %4828 = vmatpush.msra.mxu0 0.0
  %4829 = vmatpush.msra.mxu0 0.0
  %v4830 = vand.u32 %v61, 4294901760
  %v4831 = vsub.f32 %v61, %v4830
  %v4832 = vand.u32 %v4831, 4294901760
  %v4833 = vsub.f32 %v4831, %v4832
  %v4834 = vand.u32 %v4833, 4294901760
  %4835 = vmatpush.msra.mxu0 %v4834
  %v4836 = vand.u32 %v4787, 4294901760
  %4837 = vmatmul.f32.gmra.mxu0 %v4836
  %v4838 = vpop.f32.mrf.mxu0
  %v4839 = vadd.f32 %v4813, %v4838
  %4840 = vdwg.mxu0
  %4841 = vmatpush.msra.mxu0 0.0
  %4842 = vmatpush.msra.mxu0 0.0
  %4843 = vmatpush.msra.mxu0 0.0
  %4844 = vmatpush.msra.mxu0 0.0
  %4845 = vmatpush.msra.mxu0 0.0
  %4846 = vmatpush.msra.mxu0 0.0
  %4847 = vmatpush.msra.mxu0 0.0
  %4848 = vmatpush.msra.mxu0 0.0
  %4849 = vmatpush.msra.mxu0 0.0
  %4850 = vmatpush.msra.mxu0 0.0
  %4851 = vmatpush.msra.mxu0 0.0
  %4852 = vmatpush.msra.mxu0 0.0
  %4853 = vmatpush.msra.mxu0 0.0
  %4854 = vmatpush.msra.mxu0 0.0
  %4855 = vmatpush.msra.mxu0 0.0
  %v4856 = vand.u32 %v61, 4294901760
  %v4857 = vsub.f32 %v61, %v4856
  %4858 = vmatpush.msra.mxu0 %v4857
  %v4859 = vand.u32 %v4787, 4294901760
  %v4860 = vsub.f32 %v4787, %v4859
  %4861 = vmatmul.f32.gmra.mxu0 %v4860
  %v4862 = vpop.f32.mrf.mxu0
  %v4863 = vadd.f32 %v4839, %v4862
  %4864 = vdwg.mxu0
  %4865 = vmatpush.msra.mxu0 0.0
  %4866 = vmatpush.msra.mxu0 0.0
  %4867 = vmatpush.msra.mxu0 0.0
  %4868 = vmatpush.msra.mxu0 0.0
  %4869 = vmatpush.msra.mxu0 0.0
  %4870 = vmatpush.msra.mxu0 0.0
  %4871 = vmatpush.msra.mxu0 0.0
  %4872 = vmatpush.msra.mxu0 0.0
  %4873 = vmatpush.msra.mxu0 0.0
  %4874 = vmatpush.msra.mxu0 0.0
  %4875 = vmatpush.msra.mxu0 0.0
  %4876 = vmatpush.msra.mxu0 0.0
  %4877 = vmatpush.msra.mxu0 0.0
  %4878 = vmatpush.msra.mxu0 0.0
  %4879 = vmatpush.msra.mxu0 0.0
  %v4880 = vand.u32 %v61, 4294901760
  %4881 = vmatpush.msra.mxu0 %v4880
  %v4882 = vand.u32 %v4787, 4294901760
  %v4883 = vsub.f32 %v4787, %v4882
  %v4884 = vand.u32 %v4883, 4294901760
  %4885 = vmatmul.f32.gmra.mxu0 %v4884
  %v4886 = vpop.f32.mrf.mxu0
  %v4887 = vadd.f32 %v4863, %v4886
  %4888 = vdwg.mxu0
  %4889 = vmatpush.msra.mxu0 0.0
  %4890 = vmatpush.msra.mxu0 0.0
  %4891 = vmatpush.msra.mxu0 0.0
  %4892 = vmatpush.msra.mxu0 0.0
  %4893 = vmatpush.msra.mxu0 0.0
  %4894 = vmatpush.msra.mxu0 0.0
  %4895 = vmatpush.msra.mxu0 0.0
  %4896 = vmatpush.msra.mxu0 0.0
  %4897 = vmatpush.msra.mxu0 0.0
  %4898 = vmatpush.msra.mxu0 0.0
  %4899 = vmatpush.msra.mxu0 0.0
  %4900 = vmatpush.msra.mxu0 0.0
  %4901 = vmatpush.msra.mxu0 0.0
  %4902 = vmatpush.msra.mxu0 0.0
  %4903 = vmatpush.msra.mxu0 0.0
  %v4904 = vand.u32 %v61, 4294901760
  %v4905 = vsub.f32 %v61, %v4904
  %v4906 = vand.u32 %v4905, 4294901760
  %4907 = vmatpush.msra.mxu0 %v4906
  %v4908 = vand.u32 %v4787, 4294901760
  %4909 = vmatmul.f32.gmra.mxu0 %v4908
  %v4910 = vpop.f32.mrf.mxu0
  %v4911 = vadd.f32 %v4887, %v4910
  %4912 = vdwg.mxu0
  %4913 = vmatpush.msra.mxu0 0.0
  %4914 = vmatpush.msra.mxu0 0.0
  %4915 = vmatpush.msra.mxu0 0.0
  %4916 = vmatpush.msra.mxu0 0.0
  %4917 = vmatpush.msra.mxu0 0.0
  %4918 = vmatpush.msra.mxu0 0.0
  %4919 = vmatpush.msra.mxu0 0.0
  %4920 = vmatpush.msra.mxu0 0.0
  %4921 = vmatpush.msra.mxu0 0.0
  %4922 = vmatpush.msra.mxu0 0.0
  %4923 = vmatpush.msra.mxu0 0.0
  %4924 = vmatpush.msra.mxu0 0.0
  %4925 = vmatpush.msra.mxu0 0.0
  %4926 = vmatpush.msra.mxu0 0.0
  %4927 = vmatpush.msra.mxu0 0.0
  %v4928 = vand.u32 %v61, 4294901760
  %4929 = vmatpush.msra.mxu0 %v4928
  %v4930 = vand.u32 %v4787, 4294901760
  %4931 = vmatmul.f32.gmra.mxu0 %v4930
  %v4932 = vpop.f32.mrf.mxu0
  %v4933 = vadd.f32 %v4911, %v4932
  %4934 = vdwg.mxu0
  %s4935 = scalar_lea.vmem %s7, 24
  %v4936 = vld [vmem:[%s4935] sm:$0xff]
  %v4937 = vperm.slane %v4784, 0
  %v4938 = vsub.f32 %v3922, %v4937
  %v4939 = vperm.slane %v4933, 0
  %v4940 = vmul.f32 %v4938, %v4939
  %4942 = vset.pattern.permute.xlu0 0
  %4943 = vperm.xlu0 %4942, %v4936
  %v4944 = vpop.permute.xlu0 %4943
  %v4946 = vmul.f32 %v4944, %v4940
  %s4947 = scalar_lea.vmem %s8, 24
  %v4948 = vld [vmem:[%s4947] sm:$0xff]
  %4950 = vset.pattern.permute.xlu0 0
  %4951 = vperm.xlu0 %4950, %v4948
  %v4952 = vpop.permute.xlu0 %4951
  %v4954 = vadd.f32 %v4946, %v4952
  %v4955 = vld [vmem:[%s9] sm:$0xff]
  %v4956 = vld [vmem:[%s9 + $0x8] sm:$0xff]
  %v4957 = vxor.u32 %v4955, 2147483648
  %v4958 = vxor.u32 %v4956, 2147483648
  %v4959 = vmul.f32 %v4957, 1.442695
  %v4960 = vpow.pop %v4959
  %v4961 = vmul.f32 %v4958, 1.442695
  %v4962 = vpow.pop %v4961
  %v4963 = vadd.f32 %v4960, 1.0
  %v4964 = vadd.f32 %v4962, 1.0
  %v4965 = vrcp.pop %v4963
  %v4966 = vmul.f32 %v4963, %v4965
  %v4967 = vsub.f32 1.0, %v4966
  %v4968 = vmul.f32 %v4965, %v4967
  %v4969 = vadd.f32 %v4965, %v4968
  %vm4970 = vweird.f32 %v4963
  %vm4971 = vweird.f32 %v4965
  %vm4972 = vmor %vm4970, %vm4971
  %v4973 = vsel %vm4972, %v4965, %v4969
  %v4974 = vand.u32 2147483647, %v4963
  %vm4975 = vcmp.eq.f32.partialorder %v4974, 8.507059e+37
  %v4976 = vand.u32 %v4963, 2147483648
  %v4977 = vor.u32 1.1754944e-38, %v4976
  %v4978 = vsel %vm4975, %v4977, %v4973
  %v4979 = vmul.f32 1.0, %v4978
  %v4980 = vrcp.pop %v4964
  %v4981 = vmul.f32 %v4964, %v4980
  %v4982 = vsub.f32 1.0, %v4981
  %v4983 = vmul.f32 %v4980, %v4982
  %v4984 = vadd.f32 %v4980, %v4983
  %vm4985 = vweird.f32 %v4964
  %vm4986 = vweird.f32 %v4980
  %vm4987 = vmor %vm4985, %vm4986
  %v4988 = vsel %vm4987, %v4980, %v4984
  %v4989 = vand.u32 2147483647, %v4964
  %vm4990 = vcmp.eq.f32.partialorder %v4989, 8.507059e+37
  %v4991 = vand.u32 %v4964, 2147483648
  %v4992 = vor.u32 1.1754944e-38, %v4991
  %v4993 = vsel %vm4990, %v4992, %v4988
  %v4994 = vmul.f32 1.0, %v4993
  %v4995 = vmul.f32 %v4955, %v4979
  %v4996 = vmul.f32 %v4956, %v4994
  %v4997 = vld [vmem:[%s10] sm:$0xff]
  %v4998 = vld [vmem:[%s10 + $0x8] sm:$0xff]
  %v4999 = vld [vmem:[%s11] sm:$0xff]
  %5001 = vset.pattern.permute.xlu0 0
  %5002 = vperm.xlu0 %5001, %v4999
  %v5003 = vpop.permute.xlu0 %5002
  %5005 = vmatpush.xpose.msra.mxu0 0.0
  %5006 = vmatpush.xpose.msra.mxu0 0.0
  %5007 = vmatpush.xpose.msra.mxu0 0.0
  %5008 = vmatpush.xpose.msra.mxu0 0.0
  %5009 = vmatpush.xpose.msra.mxu0 0.0
  %5010 = vmatpush.xpose.msra.mxu0 0.0
  %5011 = vmatpush.xpose.msra.mxu0 0.0
  %5012 = vmatpush.xpose.msra.mxu0 0.0
  %5013 = vmatpush.xpose.msra.mxu0 0.0
  %5014 = vmatpush.xpose.msra.mxu0 0.0
  %5015 = vmatpush.xpose.msra.mxu0 0.0
  %5016 = vmatpush.xpose.msra.mxu0 0.0
  %5017 = vmatpush.xpose.msra.mxu0 0.0
  %5018 = vmatpush.xpose.msra.mxu0 0.0
  %5019 = vmatpush.xpose.msra.mxu0 0.0
  %v5020 = vand.u32 %v4995, 4294901760
  %5021 = vmatpush.xpose.msra.mxu0 %v5020
  %v5022 = vand.u32 %v4997, 4294901760
  %v5023 = vsub.f32 %v4997, %v5022
  %v5024 = vand.u32 %v5023, 4294901760
  %v5025 = vsub.f32 %v5023, %v5024
  %v5026 = vand.u32 %v5025, 4294901760
  %5027 = vmatmul.f32.gmra.mxu0 %v5026
  %v5028 = vpop.f32.mrf.mxu0
  %v5029 = vadd.f32 %v5003, %v5028
  %5030 = vdwg.mxu0
  %5031 = vmatpush.xpose.msra.mxu0 0.0
  %5032 = vmatpush.xpose.msra.mxu0 0.0
  %5033 = vmatpush.xpose.msra.mxu0 0.0
  %5034 = vmatpush.xpose.msra.mxu0 0.0
  %5035 = vmatpush.xpose.msra.mxu0 0.0
  %5036 = vmatpush.xpose.msra.mxu0 0.0
  %5037 = vmatpush.xpose.msra.mxu0 0.0
  %5038 = vmatpush.xpose.msra.mxu0 0.0
  %5039 = vmatpush.xpose.msra.mxu0 0.0
  %5040 = vmatpush.xpose.msra.mxu0 0.0
  %5041 = vmatpush.xpose.msra.mxu0 0.0
  %5042 = vmatpush.xpose.msra.mxu0 0.0
  %5043 = vmatpush.xpose.msra.mxu0 0.0
  %5044 = vmatpush.xpose.msra.mxu0 0.0
  %5045 = vmatpush.xpose.msra.mxu0 0.0
  %v5046 = vand.u32 %v4995, 4294901760
  %v5047 = vsub.f32 %v4995, %v5046
  %v5048 = vand.u32 %v5047, 4294901760
  %v5049 = vsub.f32 %v5047, %v5048
  %v5050 = vand.u32 %v5049, 4294901760
  %5051 = vmatpush.xpose.msra.mxu0 %v5050
  %v5052 = vand.u32 %v4997, 4294901760
  %5053 = vmatmul.f32.gmra.mxu0 %v5052
  %v5054 = vpop.f32.mrf.mxu0
  %v5055 = vadd.f32 %v5029, %v5054
  %5056 = vdwg.mxu0
  %5057 = vmatpush.xpose.msra.mxu0 0.0
  %5058 = vmatpush.xpose.msra.mxu0 0.0
  %5059 = vmatpush.xpose.msra.mxu0 0.0
  %5060 = vmatpush.xpose.msra.mxu0 0.0
  %5061 = vmatpush.xpose.msra.mxu0 0.0
  %5062 = vmatpush.xpose.msra.mxu0 0.0
  %5063 = vmatpush.xpose.msra.mxu0 0.0
  %5064 = vmatpush.xpose.msra.mxu0 0.0
  %5065 = vmatpush.xpose.msra.mxu0 0.0
  %5066 = vmatpush.xpose.msra.mxu0 0.0
  %5067 = vmatpush.xpose.msra.mxu0 0.0
  %5068 = vmatpush.xpose.msra.mxu0 0.0
  %5069 = vmatpush.xpose.msra.mxu0 0.0
  %5070 = vmatpush.xpose.msra.mxu0 0.0
  %5071 = vmatpush.xpose.msra.mxu0 0.0
  %v5072 = vand.u32 %v4995, 4294901760
  %v5073 = vsub.f32 %v4995, %v5072
  %5074 = vmatpush.xpose.msra.mxu0 %v5073
  %v5075 = vand.u32 %v4997, 4294901760
  %v5076 = vsub.f32 %v4997, %v5075
  %5077 = vmatmul.f32.gmra.mxu0 %v5076
  %v5078 = vpop.f32.mrf.mxu0
  %v5079 = vadd.f32 %v5055, %v5078
  %5080 = vdwg.mxu0
  %5081 = vmatpush.xpose.msra.mxu0 0.0
  %5082 = vmatpush.xpose.msra.mxu0 0.0
  %5083 = vmatpush.xpose.msra.mxu0 0.0
  %5084 = vmatpush.xpose.msra.mxu0 0.0
  %5085 = vmatpush.xpose.msra.mxu0 0.0
  %5086 = vmatpush.xpose.msra.mxu0 0.0
  %5087 = vmatpush.xpose.msra.mxu0 0.0
  %5088 = vmatpush.xpose.msra.mxu0 0.0
  %5089 = vmatpush.xpose.msra.mxu0 0.0
  %5090 = vmatpush.xpose.msra.mxu0 0.0
  %5091 = vmatpush.xpose.msra.mxu0 0.0
  %5092 = vmatpush.xpose.msra.mxu0 0.0
  %5093 = vmatpush.xpose.msra.mxu0 0.0
  %5094 = vmatpush.xpose.msra.mxu0 0.0
  %5095 = vmatpush.xpose.msra.mxu0 0.0
  %v5096 = vand.u32 %v4995, 4294901760
  %5097 = vmatpush.xpose.msra.mxu0 %v5096
  %v5098 = vand.u32 %v4997, 4294901760
  %v5099 = vsub.f32 %v4997, %v5098
  %v5100 = vand.u32 %v5099, 4294901760
  %5101 = vmatmul.f32.gmra.mxu0 %v5100
  %v5102 = vpop.f32.mrf.mxu0
  %v5103 = vadd.f32 %v5079, %v5102
  %5104 = vdwg.mxu0
  %5105 = vmatpush.xpose.msra.mxu0 0.0
  %5106 = vmatpush.xpose.msra.mxu0 0.0
  %5107 = vmatpush.xpose.msra.mxu0 0.0
  %5108 = vmatpush.xpose.msra.mxu0 0.0
  %5109 = vmatpush.xpose.msra.mxu0 0.0
  %5110 = vmatpush.xpose.msra.mxu0 0.0
  %5111 = vmatpush.xpose.msra.mxu0 0.0
  %5112 = vmatpush.xpose.msra.mxu0 0.0
  %5113 = vmatpush.xpose.msra.mxu0 0.0
  %5114 = vmatpush.xpose.msra.mxu0 0.0
  %5115 = vmatpush.xpose.msra.mxu0 0.0
  %5116 = vmatpush.xpose.msra.mxu0 0.0
  %5117 = vmatpush.xpose.msra.mxu0 0.0
  %5118 = vmatpush.xpose.msra.mxu0 0.0
  %5119 = vmatpush.xpose.msra.mxu0 0.0
  %v5120 = vand.u32 %v4995, 4294901760
  %v5121 = vsub.f32 %v4995, %v5120
  %v5122 = vand.u32 %v5121, 4294901760
  %5123 = vmatpush.xpose.msra.mxu0 %v5122
  %v5124 = vand.u32 %v4997, 4294901760
  %5125 = vmatmul.f32.gmra.mxu0 %v5124
  %v5126 = vpop.f32.mrf.mxu0
  %v5127 = vadd.f32 %v5103, %v5126
  %5128 = vdwg.mxu0
  %5129 = vmatpush.xpose.msra.mxu0 0.0
  %5130 = vmatpush.xpose.msra.mxu0 0.0
  %5131 = vmatpush.xpose.msra.mxu0 0.0
  %5132 = vmatpush.xpose.msra.mxu0 0.0
  %5133 = vmatpush.xpose.msra.mxu0 0.0
  %5134 = vmatpush.xpose.msra.mxu0 0.0
  %5135 = vmatpush.xpose.msra.mxu0 0.0
  %5136 = vmatpush.xpose.msra.mxu0 0.0
  %5137 = vmatpush.xpose.msra.mxu0 0.0
  %5138 = vmatpush.xpose.msra.mxu0 0.0
  %5139 = vmatpush.xpose.msra.mxu0 0.0
  %5140 = vmatpush.xpose.msra.mxu0 0.0
  %5141 = vmatpush.xpose.msra.mxu0 0.0
  %5142 = vmatpush.xpose.msra.mxu0 0.0
  %5143 = vmatpush.xpose.msra.mxu0 0.0
  %v5144 = vand.u32 %v4995, 4294901760
  %5145 = vmatpush.xpose.msra.mxu0 %v5144
  %v5146 = vand.u32 %v4997, 4294901760
  %5147 = vmatmul.f32.gmra.mxu0 %v5146
  %v5148 = vpop.f32.mrf.mxu0
  %v5149 = vadd.f32 %v5127, %v5148
  %5150 = vdwg.mxu0
  %5151 = vmatpush.xpose.msra.mxu0 0.0
  %5152 = vmatpush.xpose.msra.mxu0 0.0
  %5153 = vmatpush.xpose.msra.mxu0 0.0
  %5154 = vmatpush.xpose.msra.mxu0 0.0
  %5155 = vmatpush.xpose.msra.mxu0 0.0
  %5156 = vmatpush.xpose.msra.mxu0 0.0
  %5157 = vmatpush.xpose.msra.mxu0 0.0
  %5158 = vmatpush.xpose.msra.mxu0 0.0
  %5159 = vmatpush.xpose.msra.mxu0 0.0
  %5160 = vmatpush.xpose.msra.mxu0 0.0
  %5161 = vmatpush.xpose.msra.mxu0 0.0
  %5162 = vmatpush.xpose.msra.mxu0 0.0
  %5163 = vmatpush.xpose.msra.mxu0 0.0
  %5164 = vmatpush.xpose.msra.mxu0 0.0
  %5165 = vmatpush.xpose.msra.mxu0 0.0
  %v5166 = vand.u32 %v4996, 4294901760
  %5167 = vmatpush.xpose.msra.mxu0 %v5166
  %v5168 = vand.u32 %v4998, 4294901760
  %v5169 = vsub.f32 %v4998, %v5168
  %v5170 = vand.u32 %v5169, 4294901760
  %v5171 = vsub.f32 %v5169, %v5170
  %v5172 = vand.u32 %v5171, 4294901760
  %5173 = vmatmul.f32.gmra.mxu0 %v5172
  %v5174 = vpop.f32.mrf.mxu0
  %v5175 = vadd.f32 %v5149, %v5174
  %5176 = vdwg.mxu0
  %5177 = vmatpush.xpose.msra.mxu0 0.0
  %5178 = vmatpush.xpose.msra.mxu0 0.0
  %5179 = vmatpush.xpose.msra.mxu0 0.0
  %5180 = vmatpush.xpose.msra.mxu0 0.0
  %5181 = vmatpush.xpose.msra.mxu0 0.0
  %5182 = vmatpush.xpose.msra.mxu0 0.0
  %5183 = vmatpush.xpose.msra.mxu0 0.0
  %5184 = vmatpush.xpose.msra.mxu0 0.0
  %5185 = vmatpush.xpose.msra.mxu0 0.0
  %5186 = vmatpush.xpose.msra.mxu0 0.0
  %5187 = vmatpush.xpose.msra.mxu0 0.0
  %5188 = vmatpush.xpose.msra.mxu0 0.0
  %5189 = vmatpush.xpose.msra.mxu0 0.0
  %5190 = vmatpush.xpose.msra.mxu0 0.0
  %5191 = vmatpush.xpose.msra.mxu0 0.0
  %v5192 = vand.u32 %v4996, 4294901760
  %v5193 = vsub.f32 %v4996, %v5192
  %v5194 = vand.u32 %v5193, 4294901760
  %v5195 = vsub.f32 %v5193, %v5194
  %v5196 = vand.u32 %v5195, 4294901760
  %5197 = vmatpush.xpose.msra.mxu0 %v5196
  %v5198 = vand.u32 %v4998, 4294901760
  %5199 = vmatmul.f32.gmra.mxu0 %v5198
  %v5200 = vpop.f32.mrf.mxu0
  %v5201 = vadd.f32 %v5175, %v5200
  %5202 = vdwg.mxu0
  %5203 = vmatpush.xpose.msra.mxu0 0.0
  %5204 = vmatpush.xpose.msra.mxu0 0.0
  %5205 = vmatpush.xpose.msra.mxu0 0.0
  %5206 = vmatpush.xpose.msra.mxu0 0.0
  %5207 = vmatpush.xpose.msra.mxu0 0.0
  %5208 = vmatpush.xpose.msra.mxu0 0.0
  %5209 = vmatpush.xpose.msra.mxu0 0.0
  %5210 = vmatpush.xpose.msra.mxu0 0.0
  %5211 = vmatpush.xpose.msra.mxu0 0.0
  %5212 = vmatpush.xpose.msra.mxu0 0.0
  %5213 = vmatpush.xpose.msra.mxu0 0.0
  %5214 = vmatpush.xpose.msra.mxu0 0.0
  %5215 = vmatpush.xpose.msra.mxu0 0.0
  %5216 = vmatpush.xpose.msra.mxu0 0.0
  %5217 = vmatpush.xpose.msra.mxu0 0.0
  %v5218 = vand.u32 %v4996, 4294901760
  %v5219 = vsub.f32 %v4996, %v5218
  %5220 = vmatpush.xpose.msra.mxu0 %v5219
  %v5221 = vand.u32 %v4998, 4294901760
  %v5222 = vsub.f32 %v4998, %v5221
  %5223 = vmatmul.f32.gmra.mxu0 %v5222
  %v5224 = vpop.f32.mrf.mxu0
  %v5225 = vadd.f32 %v5201, %v5224
  %5226 = vdwg.mxu0
  %5227 = vmatpush.xpose.msra.mxu0 0.0
  %5228 = vmatpush.xpose.msra.mxu0 0.0
  %5229 = vmatpush.xpose.msra.mxu0 0.0
  %5230 = vmatpush.xpose.msra.mxu0 0.0
  %5231 = vmatpush.xpose.msra.mxu0 0.0
  %5232 = vmatpush.xpose.msra.mxu0 0.0
  %5233 = vmatpush.xpose.msra.mxu0 0.0
  %5234 = vmatpush.xpose.msra.mxu0 0.0
  %5235 = vmatpush.xpose.msra.mxu0 0.0
  %5236 = vmatpush.xpose.msra.mxu0 0.0
  %5237 = vmatpush.xpose.msra.mxu0 0.0
  %5238 = vmatpush.xpose.msra.mxu0 0.0
  %5239 = vmatpush.xpose.msra.mxu0 0.0
  %5240 = vmatpush.xpose.msra.mxu0 0.0
  %5241 = vmatpush.xpose.msra.mxu0 0.0
  %v5242 = vand.u32 %v4996, 4294901760
  %5243 = vmatpush.xpose.msra.mxu0 %v5242
  %v5244 = vand.u32 %v4998, 4294901760
  %v5245 = vsub.f32 %v4998, %v5244
  %v5246 = vand.u32 %v5245, 4294901760
  %5247 = vmatmul.f32.gmra.mxu0 %v5246
  %v5248 = vpop.f32.mrf.mxu0
  %v5249 = vadd.f32 %v5225, %v5248
  %5250 = vdwg.mxu0
  %5251 = vmatpush.xpose.msra.mxu0 0.0
  %5252 = vmatpush.xpose.msra.mxu0 0.0
  %5253 = vmatpush.xpose.msra.mxu0 0.0
  %5254 = vmatpush.xpose.msra.mxu0 0.0
  %5255 = vmatpush.xpose.msra.mxu0 0.0
  %5256 = vmatpush.xpose.msra.mxu0 0.0
  %5257 = vmatpush.xpose.msra.mxu0 0.0
  %5258 = vmatpush.xpose.msra.mxu0 0.0
  %5259 = vmatpush.xpose.msra.mxu0 0.0
  %5260 = vmatpush.xpose.msra.mxu0 0.0
  %5261 = vmatpush.xpose.msra.mxu0 0.0
  %5262 = vmatpush.xpose.msra.mxu0 0.0
  %5263 = vmatpush.xpose.msra.mxu0 0.0
  %5264 = vmatpush.xpose.msra.mxu0 0.0
  %5265 = vmatpush.xpose.msra.mxu0 0.0
  %v5266 = vand.u32 %v4996, 4294901760
  %v5267 = vsub.f32 %v4996, %v5266
  %v5268 = vand.u32 %v5267, 4294901760
  %5269 = vmatpush.xpose.msra.mxu0 %v5268
  %v5270 = vand.u32 %v4998, 4294901760
  %5271 = vmatmul.f32.gmra.mxu0 %v5270
  %v5272 = vpop.f32.mrf.mxu0
  %v5273 = vadd.f32 %v5249, %v5272
  %5274 = vdwg.mxu0
  %5275 = vmatpush.xpose.msra.mxu0 0.0
  %5276 = vmatpush.xpose.msra.mxu0 0.0
  %5277 = vmatpush.xpose.msra.mxu0 0.0
  %5278 = vmatpush.xpose.msra.mxu0 0.0
  %5279 = vmatpush.xpose.msra.mxu0 0.0
  %5280 = vmatpush.xpose.msra.mxu0 0.0
  %5281 = vmatpush.xpose.msra.mxu0 0.0
  %5282 = vmatpush.xpose.msra.mxu0 0.0
  %5283 = vmatpush.xpose.msra.mxu0 0.0
  %5284 = vmatpush.xpose.msra.mxu0 0.0
  %5285 = vmatpush.xpose.msra.mxu0 0.0
  %5286 = vmatpush.xpose.msra.mxu0 0.0
  %5287 = vmatpush.xpose.msra.mxu0 0.0
  %5288 = vmatpush.xpose.msra.mxu0 0.0
  %5289 = vmatpush.xpose.msra.mxu0 0.0
  %v5290 = vand.u32 %v4996, 4294901760
  %5291 = vmatpush.xpose.msra.mxu0 %v5290
  %v5292 = vand.u32 %v4998, 4294901760
  %5293 = vmatmul.f32.gmra.mxu0 %v5292
  %v5294 = vpop.f32.mrf.mxu0
  %v5295 = vadd.f32 %v5273, %v5294
  %5296 = vdwg.mxu0
  %v5298 = vsel %vm938, %v5295, 0
  %5300 = vmatpush.msra.mxu0 0.0
  %5301 = vmatpush.msra.mxu0 0.0
  %5302 = vmatpush.msra.mxu0 0.0
  %5303 = vmatpush.msra.mxu0 0.0
  %5304 = vmatpush.msra.mxu0 0.0
  %5305 = vmatpush.msra.mxu0 0.0
  %5306 = vmatpush.msra.mxu0 0.0
  %5307 = vmatpush.msra.mxu0 0.0
  %5308 = vmatpush.msra.mxu0 0.0
  %5309 = vmatpush.msra.mxu0 0.0
  %5310 = vmatpush.msra.mxu0 0.0
  %5311 = vmatpush.msra.mxu0 0.0
  %5312 = vmatpush.msra.mxu0 0.0
  %5313 = vmatpush.msra.mxu0 0.0
  %5314 = vmatpush.msra.mxu0 0.0
  %v5315 = vand.u32 %v61, 4294901760
  %5316 = vmatpush.msra.mxu0 %v5315
  %v5317 = vand.u32 %v5298, 4294901760
  %v5318 = vsub.f32 %v5298, %v5317
  %v5319 = vand.u32 %v5318, 4294901760
  %v5320 = vsub.f32 %v5318, %v5319
  %v5321 = vand.u32 %v5320, 4294901760
  %5322 = vmatmul.f32.gmra.mxu0 %v5321
  %v5323 = vpop.f32.mrf.mxu0
  %v5324 = vadd.f32 0.0, %v5323
  %5325 = vdwg.mxu0
  %5326 = vmatpush.msra.mxu0 0.0
  %5327 = vmatpush.msra.mxu0 0.0
  %5328 = vmatpush.msra.mxu0 0.0
  %5329 = vmatpush.msra.mxu0 0.0
  %5330 = vmatpush.msra.mxu0 0.0
  %5331 = vmatpush.msra.mxu0 0.0
  %5332 = vmatpush.msra.mxu0 0.0
  %5333 = vmatpush.msra.mxu0 0.0
  %5334 = vmatpush.msra.mxu0 0.0
  %5335 = vmatpush.msra.mxu0 0.0
  %5336 = vmatpush.msra.mxu0 0.0
  %5337 = vmatpush.msra.mxu0 0.0
  %5338 = vmatpush.msra.mxu0 0.0
  %5339 = vmatpush.msra.mxu0 0.0
  %5340 = vmatpush.msra.mxu0 0.0
  %v5341 = vand.u32 %v61, 4294901760
  %v5342 = vsub.f32 %v61, %v5341
  %v5343 = vand.u32 %v5342, 4294901760
  %v5344 = vsub.f32 %v5342, %v5343
  %v5345 = vand.u32 %v5344, 4294901760
  %5346 = vmatpush.msra.mxu0 %v5345
  %v5347 = vand.u32 %v5298, 4294901760
  %5348 = vmatmul.f32.gmra.mxu0 %v5347
  %v5349 = vpop.f32.mrf.mxu0
  %v5350 = vadd.f32 %v5324, %v5349
  %5351 = vdwg.mxu0
  %5352 = vmatpush.msra.mxu0 0.0
  %5353 = vmatpush.msra.mxu0 0.0
  %5354 = vmatpush.msra.mxu0 0.0
  %5355 = vmatpush.msra.mxu0 0.0
  %5356 = vmatpush.msra.mxu0 0.0
  %5357 = vmatpush.msra.mxu0 0.0
  %5358 = vmatpush.msra.mxu0 0.0
  %5359 = vmatpush.msra.mxu0 0.0
  %5360 = vmatpush.msra.mxu0 0.0
  %5361 = vmatpush.msra.mxu0 0.0
  %5362 = vmatpush.msra.mxu0 0.0
  %5363 = vmatpush.msra.mxu0 0.0
  %5364 = vmatpush.msra.mxu0 0.0
  %5365 = vmatpush.msra.mxu0 0.0
  %5366 = vmatpush.msra.mxu0 0.0
  %v5367 = vand.u32 %v61, 4294901760
  %v5368 = vsub.f32 %v61, %v5367
  %5369 = vmatpush.msra.mxu0 %v5368
  %v5370 = vand.u32 %v5298, 4294901760
  %v5371 = vsub.f32 %v5298, %v5370
  %5372 = vmatmul.f32.gmra.mxu0 %v5371
  %v5373 = vpop.f32.mrf.mxu0
  %v5374 = vadd.f32 %v5350, %v5373
  %5375 = vdwg.mxu0
  %5376 = vmatpush.msra.mxu0 0.0
  %5377 = vmatpush.msra.mxu0 0.0
  %5378 = vmatpush.msra.mxu0 0.0
  %5379 = vmatpush.msra.mxu0 0.0
  %5380 = vmatpush.msra.mxu0 0.0
  %5381 = vmatpush.msra.mxu0 0.0
  %5382 = vmatpush.msra.mxu0 0.0
  %5383 = vmatpush.msra.mxu0 0.0
  %5384 = vmatpush.msra.mxu0 0.0
  %5385 = vmatpush.msra.mxu0 0.0
  %5386 = vmatpush.msra.mxu0 0.0
  %5387 = vmatpush.msra.mxu0 0.0
  %5388 = vmatpush.msra.mxu0 0.0
  %5389 = vmatpush.msra.mxu0 0.0
  %5390 = vmatpush.msra.mxu0 0.0
  %v5391 = vand.u32 %v61, 4294901760
  %5392 = vmatpush.msra.mxu0 %v5391
  %v5393 = vand.u32 %v5298, 4294901760
  %v5394 = vsub.f32 %v5298, %v5393
  %v5395 = vand.u32 %v5394, 4294901760
  %5396 = vmatmul.f32.gmra.mxu0 %v5395
  %v5397 = vpop.f32.mrf.mxu0
  %v5398 = vadd.f32 %v5374, %v5397
  %5399 = vdwg.mxu0
  %5400 = vmatpush.msra.mxu0 0.0
  %5401 = vmatpush.msra.mxu0 0.0
  %5402 = vmatpush.msra.mxu0 0.0
  %5403 = vmatpush.msra.mxu0 0.0
  %5404 = vmatpush.msra.mxu0 0.0
  %5405 = vmatpush.msra.mxu0 0.0
  %5406 = vmatpush.msra.mxu0 0.0
  %5407 = vmatpush.msra.mxu0 0.0
  %5408 = vmatpush.msra.mxu0 0.0
  %5409 = vmatpush.msra.mxu0 0.0
  %5410 = vmatpush.msra.mxu0 0.0
  %5411 = vmatpush.msra.mxu0 0.0
  %5412 = vmatpush.msra.mxu0 0.0
  %5413 = vmatpush.msra.mxu0 0.0
  %5414 = vmatpush.msra.mxu0 0.0
  %v5415 = vand.u32 %v61, 4294901760
  %v5416 = vsub.f32 %v61, %v5415
  %v5417 = vand.u32 %v5416, 4294901760
  %5418 = vmatpush.msra.mxu0 %v5417
  %v5419 = vand.u32 %v5298, 4294901760
  %5420 = vmatmul.f32.gmra.mxu0 %v5419
  %v5421 = vpop.f32.mrf.mxu0
  %v5422 = vadd.f32 %v5398, %v5421
  %5423 = vdwg.mxu0
  %5424 = vmatpush.msra.mxu0 0.0
  %5425 = vmatpush.msra.mxu0 0.0
  %5426 = vmatpush.msra.mxu0 0.0
  %5427 = vmatpush.msra.mxu0 0.0
  %5428 = vmatpush.msra.mxu0 0.0
  %5429 = vmatpush.msra.mxu0 0.0
  %5430 = vmatpush.msra.mxu0 0.0
  %5431 = vmatpush.msra.mxu0 0.0
  %5432 = vmatpush.msra.mxu0 0.0
  %5433 = vmatpush.msra.mxu0 0.0
  %5434 = vmatpush.msra.mxu0 0.0
  %5435 = vmatpush.msra.mxu0 0.0
  %5436 = vmatpush.msra.mxu0 0.0
  %5437 = vmatpush.msra.mxu0 0.0
  %5438 = vmatpush.msra.mxu0 0.0
  %v5439 = vand.u32 %v61, 4294901760
  %5440 = vmatpush.msra.mxu0 %v5439
  %v5441 = vand.u32 %v5298, 4294901760
  %5442 = vmatmul.f32.gmra.mxu0 %v5441
  %v5443 = vpop.f32.mrf.mxu0
  %v5444 = vadd.f32 %v5422, %v5443
  %5445 = vdwg.mxu0
  %v5446 = vadd.f32 %v4954, %v5444
  %v5447 = vperm.slane %v44, 0
  %v5448 = vmul.f32 %v5446, %v5447
  %5449 = vst [vmem:[%s12] sm:$0xff] %v5448
  // Predicated region
  $region50: #{graph_up_forward.1} parent=0 // pred_check
    _
  $region51: #{graph_up_forward.1} parent=0 // pred_check_branch
    %5451 = sbr.rel (0) target = $region53
  $region52: #{graph_up_forward.1} parent=0 // pred_region
    _
  $region53: #{graph_up_forward.1} parent=0 // pred_fallthru
    _
  // Predicated region
  $region54: #{graph_up_forward.1} parent=0 // pred_check
    _
  $region55: #{graph_up_forward.1} parent=0 // pred_check_branch
    %5453 = sbr.rel (0) target = $region57
  $region56: #{graph_up_forward.1} parent=0 // pred_region
    _
  $region57: #{graph_up_forward.1} parent=0 // pred_fallthru
    _

</llo_original>
